<compile_context>
chip_gen: v7x
topology: tpu7x:2x2x1
jax: 0.10.0
libtpu: 0.0.40
codegen_flags: <defaults>
</compile_context>

<pallas_src>
import jax
import jax.numpy as jnp
from jax import lax
from jax.experimental import pallas as pl
from jax.experimental.pallas import tpu as pltpu


# Pool hyper-parameters are fixed by the module definition:
#   MaxPool2d(kernel_size=(4, 3), stride=(1, 3))  after conv1
#   MaxPool2d(kernel_size=(1, 3), stride=(1, 3))  after conv2
_P1_KH, _P1_KW, _P1_SH, _P1_SW = 4, 3, 1, 3
_P2_KH, _P2_KW, _P2_SH, _P2_SW = 1, 3, 1, 3

# bf16 operands + f32 accumulation (set to jnp.float32 for bit-exact matmuls).
COMPUTE_DTYPE = jnp.bfloat16


def _full_spec(shape):
    """Whole-array block resident in VMEM, same block for every grid step."""
    n = len(shape)
    return pl.BlockSpec(shape, lambda *_: (0,) * n)


@jax.jit
def esc50_cnn_forward(x, params):
    """Fused ESC50_CNN_Ver1 forward.  x: (B, Cin, H, W) -> (B, num_classes)."""
    f32 = jnp.float32
    compute_dtype = COMPUTE_DTYPE
    B, Cin, H, W = x.shape

    w1 = params["w1"]
    C1, Cin_w, KH1, KW1 = w1.shape
    w2 = params["w2"]
    C2, C1_w, KH2, KW2 = w2.shape
    assert Cin_w == Cin and C1_w == C1
    assert KH2 == 1, "module fixes conv2 kernel height to 1"

    # ---- static shape trace (mirrors the dummy forward in __init__) --------
    OH1, OW1 = H - KH1 + 1, W - KW1 + 1                       # conv1
    OHp1 = (OH1 - _P1_KH) // _P1_SH + 1                       # pool1 (floor)
    OWp1 = (OW1 - _P1_KW) // _P1_SW + 1
    OH2, OW2 = OHp1, OWp1 - KW2 + 1                           # conv2 (1, KW2)
    OHp2 = (OH2 - _P2_KH) // _P2_SH + 1                       # pool2 (floor)
    OWp2 = (OW2 - _P2_KW) // _P2_SW + 1
    FC1 = params["fc1_w"].shape[1]
    FC2 = params["fc2_w"].shape[1]
    NC = params["fc3_w"].shape[1]
    flat_dim = C2 * OHp2 * OWp2
    assert params["fc1_w"].shape[0] == flat_dim

    # ---- host-side one-time repacking (layout only, no hot compute) --------
    # input: (B, Cin, H, W) -> (B, W, Cin*H): width on sublanes, Cin*H on lanes
    xT = jnp.transpose(x, (0, 3, 1, 2)).reshape(B, W, Cin * H).astype(f32)
    # conv1 weight: (C1, Cin, KH1, KW1) -> (Cin*KW1, KH1, C1)
    w1m = jnp.transpose(w1, (1, 3, 2, 0)).reshape(Cin * KW1, KH1, C1)
    w1m = w1m.astype(compute_dtype)
    # conv2 weight: (C2, C1, 1, KW2) -> (KW2, C1, C2)
    w2m = jnp.transpose(w2[:, :, 0, :], (2, 1, 0)).astype(compute_dtype)
    # fc1 weight rows are NCHW-flat (c, oh, ow); permute to channels-last
    # (oh, ow, c) so the kernel consumes its own layout directly.
    wfc1 = params["fc1_w"].reshape(C2, OHp2, OWp2, FC1)
    wfc1 = jnp.transpose(wfc1, (1, 2, 0, 3)).reshape(OHp2 * OWp2, C2, FC1)
    wfc1 = wfc1.astype(compute_dtype)
    wfc2 = params["fc2_w"].astype(compute_dtype)
    wfc3 = params["fc3_w"].astype(compute_dtype)
    b1 = params["b1"].reshape(1, C1).astype(f32)
    b2 = params["b2"].reshape(1, C2).astype(f32)
    bfc1 = params["fc1_b"].reshape(1, FC1).astype(f32)
    bfc2 = params["fc2_b"].reshape(1, FC2).astype(f32)
    bfc3 = params["fc3_b"].reshape(1, NC).astype(f32)

    # ---- fused per-sample kernel (one grid step == one batch element) ------
    def kernel(x_ref, w1_ref, b1_ref, w2_ref, b2_ref,
               wfc1_ref, bfc1_ref, wfc2_ref, bfc2_ref, wfc3_ref, bfc3_ref,
               o_ref, pool1_ref):
        # conv1 (valid, stride 1) + bias + ReLU; channels-last (OW1, C1) slabs
        y1 = []
        for oh in range(OH1):
            acc = jnp.zeros((OW1, C1), f32)
            for ci in range(Cin):
                col0 = ci * H + oh
                for kj in range(KW1):
                    xs = x_ref[0, kj:kj + OW1, col0:col0 + KH1]    # (OW1, KH1)
                    acc = acc + jnp.dot(xs.astype(compute_dtype),
                                        w1_ref[ci * KW1 + kj],     # (KH1, C1)
                                        preferred_element_type=f32)
            y1.append(jnp.maximum(acc + b1_ref[...], 0.0))

        # pool1: MaxPool2d((4,3), stride (1,3)); rows stored to VMEM scratch
        for ohp in range(OHp1):
            m = y1[ohp * _P1_SH]
            for di in range(1, _P1_KH):
                m = jnp.maximum(m, y1[ohp * _P1_SH + di])
            for owp in range(OWp1):
                w0 = owp * _P1_SW
                r = m[w0:w0 + 1, :]
                for dj in range(1, _P1_KW):
                    r = jnp.maximum(r, m[w0 + dj:w0 + dj + 1, :])
                pool1_ref[ohp, owp:owp + 1, :] = r

        # conv2 (1, KW2) + bias + ReLU; channels-last (OW2, C2) slabs
        y2 = []
        for oh in range(OH2):
            acc = jnp.zeros((OW2, C2), f32)
            for kj in range(KW2):
                xs = pool1_ref[oh, kj:kj + OW2, :]                 # (OW2, C1)
                acc = acc + jnp.dot(xs.astype(compute_dtype),
                                    w2_ref[kj],                    # (C1, C2)
                                    preferred_element_type=f32)
            y2.append(jnp.maximum(acc + b2_ref[...], 0.0))

        # pool2: MaxPool2d((1,3), stride (1,3)) -> (oh, ow)-ordered (1,C2) rows
        pooled2 = []
        for ohp in range(OHp2):
            m = y2[ohp * _P2_SH]
            for owp in range(OWp2):
                w0 = owp * _P2_SW
                r = m[w0:w0 + 1, :]
                for dj in range(1, _P2_KW):
                    r = jnp.maximum(r, m[w0 + dj:w0 + dj + 1, :])
                pooled2.append(r)

        # classifier (Dropout == identity at inference)
        acc = jnp.zeros((1, FC1), f32)
        for p, r in enumerate(pooled2):   # p == oh*OWp2 + ow, matches wfc1 rows
            acc = acc + jnp.dot(r.astype(compute_dtype), wfc1_ref[p],
                                preferred_element_type=f32)
        h1 = jnp.maximum(acc + bfc1_ref[...], 0.0)
        h2 = jnp.dot(h1.astype(compute_dtype), wfc2_ref[...],
                     preferred_element_type=f32) + bfc2_ref[...]
        h2 = jnp.maximum(h2, 0.0)
        out = jnp.dot(h2.astype(compute_dtype), wfc3_ref[...],
                      preferred_element_type=f32) + bfc3_ref[...]
        o_ref[0] = out.astype(o_ref.dtype)

    flops_per_sample = 2 * (OH1 * OW1 * C1 * Cin * KH1 * KW1
                            + OH2 * OW2 * C2 * C1 * KW2
                            + flat_dim * FC1 + FC1 * FC2 + FC2 * NC)
    weight_bytes = sum(int(a.size) * a.dtype.itemsize
                       for a in (w1m, w2m, wfc1, wfc2, wfc3,
                                 b1, b2, bfc1, bfc2, bfc3))
    cost = pl.CostEstimate(
        flops=int(B) * int(flops_per_sample),
        transcendentals=0,
        bytes_accessed=int(xT.size) * 4 + weight_bytes + int(B) * int(NC) * 4)

    out = pl.pallas_call(
        kernel,
        out_shape=jax.ShapeDtypeStruct((B, 1, NC), f32),
        grid=(B,),
        in_specs=[
            pl.BlockSpec((1, W, Cin * H), lambda b: (b, 0, 0)),
            _full_spec(w1m.shape), _full_spec(b1.shape),
            _full_spec(w2m.shape), _full_spec(b2.shape),
            _full_spec(wfc1.shape), _full_spec(bfc1.shape),
            _full_spec(wfc2.shape), _full_spec(bfc2.shape),
            _full_spec(wfc3.shape), _full_spec(bfc3.shape),
        ],
        out_specs=pl.BlockSpec((1, 1, NC), lambda b: (b, 0, 0)),
        scratch_shapes=[pltpu.VMEM((OHp1, OWp1, C1), f32)],
        compiler_params=pltpu.CompilerParams(
            dimension_semantics=("parallel",),
            vmem_limit_bytes=32 * 1024 * 1024),
        cost_estimate=cost,
    )(xT, w1m, b1, w2m, b2, wfc1, bfc1, wfc2, bfc2, wfc3, bfc3)
    return out.reshape(B, NC)


# ----------------------------------------------------------------------------
# Pure-JAX (XLA) reference for self-validation
# ----------------------------------------------------------------------------
def esc50_cnn_reference(x, params):
    dn = ("NCHW", "OIHW", "NCHW")
    y = lax.conv_general_dilated(x, params["w1"], (1, 1), "VALID",
                                 dimension_numbers=dn)
    y = jnp.maximum(y + params["b1"][None, :, None, None], 0.0)
    y = lax.reduce_window(y, -jnp.inf, lax.max,
                          (1, 1, _P1_KH, _P1_KW), (1, 1, _P1_SH, _P1_SW),
                          "VALID")
    y = lax.conv_general_dilated(y, params["w2"], (1, 1), "VALID",
                                 dimension_numbers=dn)
    y = jnp.maximum(y + params["b2"][None, :, None, None], 0.0)
    y = lax.reduce_window(y, -jnp.inf, lax.max,
                          (1, 1, _P2_KH, _P2_KW), (1, 1, _P2_SH, _P2_SW),
                          "VALID")
    y = y.reshape(y.shape[0], -1)                       # NCHW flatten
    y = jnp.maximum(y @ params["fc1_w"] + params["fc1_b"], 0.0)
    y = jnp.maximum(y @ params["fc2_w"] + params["fc2_b"], 0.0)
    return y @ params["fc3_w"] + params["fc3_b"]


def init_params(key, input_channels, conv1_ch, conv2_ch, flat_dim,
                fc1_size, fc2_size, num_classes):
    ks = jax.random.split(key, 10)
    s = 0.05
    return {
        "w1": jax.random.normal(ks[0], (conv1_ch, input_channels, 57, 6), jnp.float32) * s,
        "b1": jax.random.normal(ks[1], (conv1_ch,), jnp.float32) * s,
        "w2": jax.random.normal(ks[2], (conv2_ch, conv1_ch, 1, 3), jnp.float32) * s,
        "b2": jax.random.normal(ks[3], (conv2_ch,), jnp.float32) * s,
        "fc1_w": jax.random.normal(ks[4], (flat_dim, fc1_size), jnp.float32) * s,
        "fc1_b": jax.random.normal(ks[5], (fc1_size,), jnp.float32) * s,
        "fc2_w": jax.random.normal(ks[6], (fc1_size, fc2_size), jnp.float32) * s,
        "fc2_b": jax.random.normal(ks[7], (fc2_size,), jnp.float32) * s,
        "fc3_w": jax.random.normal(ks[8], (fc2_size, num_classes), jnp.float32) * s,
        "fc3_b": jax.random.normal(ks[9], (num_classes,), jnp.float32) * s,
    }


if __name__ == "__main__":
    # ESC-50-style input: 1 channel, 60 mel bands x 41 frames (conv kernel is
    # (57, 6), so H >= 57, W >= 6 required).
    B, Cin, H, W = 2, 1, 60, 41
    conv1_ch, conv2_ch = 8, 8
    fc1_size, fc2_size, num_classes = 32, 16, 10

    # shape trace: conv1 (B,8,4,36) -> pool1 (B,8,1,12) -> conv2 (B,8,1,10)
    #              -> pool2 (B,8,1,3) -> flat_dim 24
    oh1, ow1 = H - 57 + 1, W - 6 + 1
    ohp1, owp1 = (oh1 - 4) // 1 + 1, (ow1 - 3) // 3 + 1
    oh2, ow2 = ohp1, owp1 - 3 + 1
    ohp2, owp2 = oh2, (ow2 - 3) // 3 + 1
    flat_dim = conv2_ch * ohp2 * owp2

    key = jax.random.PRNGKey(0)
    kx, kp = jax.random.split(key)
    x = jax.random.normal(kx, (B, Cin, H, W), jnp.float32)
    params = init_params(kp, Cin, conv1_ch, conv2_ch, flat_dim,
                         fc1_size, fc2_size, num_classes)

    out = jax.block_until_ready(esc50_cnn_forward(x, params))
    ref = jax.block_until_ready(esc50_cnn_reference(x, params))

    assert out.shape == (B, num_classes), out.shape
    assert bool(jnp.all(jnp.isfinite(out)))
    max_err = float(jnp.max(jnp.abs(out - ref)))
    assert max_err < 3e-2, f"mismatch vs reference: max |err| = {max_err}"
    print("KERNEL_OK")
</pallas_src>

<mosaic_0001>
module attributes {stable_mosaic.version = 11 : i64} {
  func.func @kernel(%arg0: i32, %arg1: memref<1x41x60xf32, #tpu.memory_space<vmem>>, %arg2: memref<6x57x8xbf16, #tpu.memory_space<vmem>>, %arg3: memref<1x8xf32, #tpu.memory_space<vmem>>, %arg4: memref<3x8x8xbf16, #tpu.memory_space<vmem>>, %arg5: memref<1x8xf32, #tpu.memory_space<vmem>>, %arg6: memref<3x8x32xbf16, #tpu.memory_space<vmem>>, %arg7: memref<1x32xf32, #tpu.memory_space<vmem>>, %arg8: memref<32x16xbf16, #tpu.memory_space<vmem>>, %arg9: memref<1x16xf32, #tpu.memory_space<vmem>>, %arg10: memref<16x10xbf16, #tpu.memory_space<vmem>>, %arg11: memref<1x10xf32, #tpu.memory_space<vmem>>, %arg12: memref<1x1x10xf32, #tpu.memory_space<vmem>>, %arg13: memref<1x12x8xf32, #tpu.memory_space<vmem>>) attributes {dimension_semantics = [#tpu.dimension_semantics<parallel>], iteration_bounds = array<i64: 2>, scalar_prefetch = 0 : i64, scratch_operands = 1 : i64, tpu.core_type = #tpu.core_type<tc>, window_params = [{transform_indices = @transform_0, window_bounds = array<i64: 1, 41, 60>}, {pipeline_mode = #tpu.pipeline_mode<synchronous>, transform_indices = @transform_1, window_bounds = array<i64: 6, 57, 8>}, {pipeline_mode = #tpu.pipeline_mode<synchronous>, transform_indices = @transform_2, window_bounds = array<i64: 1, 8>}, {pipeline_mode = #tpu.pipeline_mode<synchronous>, transform_indices = @transform_3, window_bounds = array<i64: 3, 8, 8>}, {pipeline_mode = #tpu.pipeline_mode<synchronous>, transform_indices = @transform_4, window_bounds = array<i64: 1, 8>}, {pipeline_mode = #tpu.pipeline_mode<synchronous>, transform_indices = @transform_5, window_bounds = array<i64: 3, 8, 32>}, {pipeline_mode = #tpu.pipeline_mode<synchronous>, transform_indices = @transform_6, window_bounds = array<i64: 1, 32>}, {pipeline_mode = #tpu.pipeline_mode<synchronous>, transform_indices = @transform_7, window_bounds = array<i64: 32, 16>}, {pipeline_mode = #tpu.pipeline_mode<synchronous>, transform_indices = @transform_8, window_bounds = array<i64: 1, 16>}, {pipeline_mode = #tpu.pipeline_mode<synchronous>, transform_indices = @transform_9, window_bounds = array<i64: 16, 10>}, {pipeline_mode = #tpu.pipeline_mode<synchronous>, transform_indices = @transform_10, window_bounds = array<i64: 1, 10>}, {transform_indices = @transform_11, window_bounds = array<i64: 1, 1, 10>}]} {
    %cst = arith.constant 0.000000e+00 : f32
    %0 = vector.broadcast %cst : f32 to vector<36x8xf32>
    %c0 = arith.constant 0 : index
    %c0_0 = arith.constant 0 : index
    %c0_1 = arith.constant 0 : index
    %1 = vector.load %arg1[%c0, %c0_0, %c0_1] : memref<1x41x60xf32, #tpu.memory_space<vmem>>, vector<1x36x57xf32>
    %2 = vector.shape_cast %1 : vector<1x36x57xf32> to vector<36x57xf32>
    %3 = arith.truncf %2 : vector<36x57xf32> to vector<36x57xbf16>
    %c0_2 = arith.constant 0 : index
    %c0_3 = arith.constant 0 : index
    %c0_4 = arith.constant 0 : index
    %4 = vector.load %arg2[%c0_2, %c0_3, %c0_4] : memref<6x57x8xbf16, #tpu.memory_space<vmem>>, vector<1x57x8xbf16>
    %5 = vector.shape_cast %4 : vector<1x57x8xbf16> to vector<57x8xbf16>
    %cst_5 = arith.constant dense<0.000000e+00> : vector<36x8xf32>
    %6 = tpu.matmul %3, %5, %cst_5 {dimension_numbers = #tpu.dot_dimension_numbers<[1], [0], [0], [1], [0, 0, 1, 1], [], []>} : vector<36x57xbf16>, vector<57x8xbf16>, vector<36x8xf32> -> vector<36x8xf32>
    %7 = arith.addf %0, %6 : vector<36x8xf32>
    %c0_6 = arith.constant 0 : index
    %c1 = arith.constant 1 : index
    %c0_7 = arith.constant 0 : index
    %8 = vector.load %arg1[%c0_6, %c1, %c0_7] : memref<1x41x60xf32, #tpu.memory_space<vmem>>, vector<1x36x57xf32>
    %9 = vector.shape_cast %8 : vector<1x36x57xf32> to vector<36x57xf32>
    %10 = arith.truncf %9 : vector<36x57xf32> to vector<36x57xbf16>
    %c1_8 = arith.constant 1 : index
    %c0_9 = arith.constant 0 : index
    %c0_10 = arith.constant 0 : index
    %11 = vector.load %arg2[%c1_8, %c0_9, %c0_10] : memref<6x57x8xbf16, #tpu.memory_space<vmem>>, vector<1x57x8xbf16>
    %12 = vector.shape_cast %11 : vector<1x57x8xbf16> to vector<57x8xbf16>
    %cst_11 = arith.constant dense<0.000000e+00> : vector<36x8xf32>
    %13 = tpu.matmul %10, %12, %cst_11 {dimension_numbers = #tpu.dot_dimension_numbers<[1], [0], [0], [1], [0, 0, 1, 1], [], []>} : vector<36x57xbf16>, vector<57x8xbf16>, vector<36x8xf32> -> vector<36x8xf32>
    %14 = arith.addf %7, %13 : vector<36x8xf32>
    %c0_12 = arith.constant 0 : index
    %c2 = arith.constant 2 : index
    %c0_13 = arith.constant 0 : index
    %15 = vector.load %arg1[%c0_12, %c2, %c0_13] : memref<1x41x60xf32, #tpu.memory_space<vmem>>, vector<1x36x57xf32>
    %16 = vector.shape_cast %15 : vector<1x36x57xf32> to vector<36x57xf32>
    %17 = arith.truncf %16 : vector<36x57xf32> to vector<36x57xbf16>
    %c2_14 = arith.constant 2 : index
    %c0_15 = arith.constant 0 : index
    %c0_16 = arith.constant 0 : index
    %18 = vector.load %arg2[%c2_14, %c0_15, %c0_16] : memref<6x57x8xbf16, #tpu.memory_space<vmem>>, vector<1x57x8xbf16>
    %19 = vector.shape_cast %18 : vector<1x57x8xbf16> to vector<57x8xbf16>
    %cst_17 = arith.constant dense<0.000000e+00> : vector<36x8xf32>
    %20 = tpu.matmul %17, %19, %cst_17 {dimension_numbers = #tpu.dot_dimension_numbers<[1], [0], [0], [1], [0, 0, 1, 1], [], []>} : vector<36x57xbf16>, vector<57x8xbf16>, vector<36x8xf32> -> vector<36x8xf32>
    %21 = arith.addf %14, %20 : vector<36x8xf32>
    %c0_18 = arith.constant 0 : index
    %c3 = arith.constant 3 : index
    %c0_19 = arith.constant 0 : index
    %22 = vector.load %arg1[%c0_18, %c3, %c0_19] : memref<1x41x60xf32, #tpu.memory_space<vmem>>, vector<1x36x57xf32>
    %23 = vector.shape_cast %22 : vector<1x36x57xf32> to vector<36x57xf32>
    %24 = arith.truncf %23 : vector<36x57xf32> to vector<36x57xbf16>
    %c3_20 = arith.constant 3 : index
    %c0_21 = arith.constant 0 : index
    %c0_22 = arith.constant 0 : index
    %25 = vector.load %arg2[%c3_20, %c0_21, %c0_22] : memref<6x57x8xbf16, #tpu.memory_space<vmem>>, vector<1x57x8xbf16>
    %26 = vector.shape_cast %25 : vector<1x57x8xbf16> to vector<57x8xbf16>
    %cst_23 = arith.constant dense<0.000000e+00> : vector<36x8xf32>
    %27 = tpu.matmul %24, %26, %cst_23 {dimension_numbers = #tpu.dot_dimension_numbers<[1], [0], [0], [1], [0, 0, 1, 1], [], []>} : vector<36x57xbf16>, vector<57x8xbf16>, vector<36x8xf32> -> vector<36x8xf32>
    %28 = arith.addf %21, %27 : vector<36x8xf32>
    %c0_24 = arith.constant 0 : index
    %c4 = arith.constant 4 : index
    %c0_25 = arith.constant 0 : index
    %29 = vector.load %arg1[%c0_24, %c4, %c0_25] : memref<1x41x60xf32, #tpu.memory_space<vmem>>, vector<1x36x57xf32>
    %30 = vector.shape_cast %29 : vector<1x36x57xf32> to vector<36x57xf32>
    %31 = arith.truncf %30 : vector<36x57xf32> to vector<36x57xbf16>
    %c4_26 = arith.constant 4 : index
    %c0_27 = arith.constant 0 : index
    %c0_28 = arith.constant 0 : index
    %32 = vector.load %arg2[%c4_26, %c0_27, %c0_28] : memref<6x57x8xbf16, #tpu.memory_space<vmem>>, vector<1x57x8xbf16>
    %33 = vector.shape_cast %32 : vector<1x57x8xbf16> to vector<57x8xbf16>
    %cst_29 = arith.constant dense<0.000000e+00> : vector<36x8xf32>
    %34 = tpu.matmul %31, %33, %cst_29 {dimension_numbers = #tpu.dot_dimension_numbers<[1], [0], [0], [1], [0, 0, 1, 1], [], []>} : vector<36x57xbf16>, vector<57x8xbf16>, vector<36x8xf32> -> vector<36x8xf32>
    %35 = arith.addf %28, %34 : vector<36x8xf32>
    %c0_30 = arith.constant 0 : index
    %c5 = arith.constant 5 : index
    %c0_31 = arith.constant 0 : index
    %36 = vector.load %arg1[%c0_30, %c5, %c0_31] : memref<1x41x60xf32, #tpu.memory_space<vmem>>, vector<1x36x57xf32>
    %37 = vector.shape_cast %36 : vector<1x36x57xf32> to vector<36x57xf32>
    %38 = arith.truncf %37 : vector<36x57xf32> to vector<36x57xbf16>
    %c5_32 = arith.constant 5 : index
    %c0_33 = arith.constant 0 : index
    %c0_34 = arith.constant 0 : index
    %39 = vector.load %arg2[%c5_32, %c0_33, %c0_34] : memref<6x57x8xbf16, #tpu.memory_space<vmem>>, vector<1x57x8xbf16>
    %40 = vector.shape_cast %39 : vector<1x57x8xbf16> to vector<57x8xbf16>
    %cst_35 = arith.constant dense<0.000000e+00> : vector<36x8xf32>
    %41 = tpu.matmul %38, %40, %cst_35 {dimension_numbers = #tpu.dot_dimension_numbers<[1], [0], [0], [1], [0, 0, 1, 1], [], []>} : vector<36x57xbf16>, vector<57x8xbf16>, vector<36x8xf32> -> vector<36x8xf32>
    %42 = arith.addf %35, %41 : vector<36x8xf32>
    %c0_36 = arith.constant 0 : index
    %c0_37 = arith.constant 0 : index
    %43 = vector.load %arg3[%c0_36, %c0_37] : memref<1x8xf32, #tpu.memory_space<vmem>>, vector<1x8xf32>
    %44 = vector.broadcast %43 : vector<1x8xf32> to vector<36x8xf32>
    %45 = arith.addf %42, %44 : vector<36x8xf32>
    %cst_38 = arith.constant 0.000000e+00 : f32
    %46 = vector.broadcast %cst_38 : f32 to vector<36x8xf32>
    %47 = arith.maximumf %45, %46 : vector<36x8xf32>
    %cst_39 = arith.constant 0.000000e+00 : f32
    %48 = vector.broadcast %cst_39 : f32 to vector<36x8xf32>
    %c0_40 = arith.constant 0 : index
    %c0_41 = arith.constant 0 : index
    %c1_42 = arith.constant 1 : index
    %49 = vector.load %arg1[%c0_40, %c0_41, %c1_42] : memref<1x41x60xf32, #tpu.memory_space<vmem>>, vector<1x36x57xf32>
    %50 = vector.shape_cast %49 : vector<1x36x57xf32> to vector<36x57xf32>
    %51 = arith.truncf %50 : vector<36x57xf32> to vector<36x57xbf16>
    %c0_43 = arith.constant 0 : index
    %c0_44 = arith.constant 0 : index
    %c0_45 = arith.constant 0 : index
    %52 = vector.load %arg2[%c0_43, %c0_44, %c0_45] : memref<6x57x8xbf16, #tpu.memory_space<vmem>>, vector<1x57x8xbf16>
    %53 = vector.shape_cast %52 : vector<1x57x8xbf16> to vector<57x8xbf16>
    %cst_46 = arith.constant dense<0.000000e+00> : vector<36x8xf32>
    %54 = tpu.matmul %51, %53, %cst_46 {dimension_numbers = #tpu.dot_dimension_numbers<[1], [0], [0], [1], [0, 0, 1, 1], [], []>} : vector<36x57xbf16>, vector<57x8xbf16>, vector<36x8xf32> -> vector<36x8xf32>
    %55 = arith.addf %48, %54 : vector<36x8xf32>
    %c0_47 = arith.constant 0 : index
    %c1_48 = arith.constant 1 : index
    %c1_49 = arith.constant 1 : index
    %56 = vector.load %arg1[%c0_47, %c1_48, %c1_49] : memref<1x41x60xf32, #tpu.memory_space<vmem>>, vector<1x36x57xf32>
    %57 = vector.shape_cast %56 : vector<1x36x57xf32> to vector<36x57xf32>
    %58 = arith.truncf %57 : vector<36x57xf32> to vector<36x57xbf16>
    %c1_50 = arith.constant 1 : index
    %c0_51 = arith.constant 0 : index
    %c0_52 = arith.constant 0 : index
    %59 = vector.load %arg2[%c1_50, %c0_51, %c0_52] : memref<6x57x8xbf16, #tpu.memory_space<vmem>>, vector<1x57x8xbf16>
    %60 = vector.shape_cast %59 : vector<1x57x8xbf16> to vector<57x8xbf16>
    %cst_53 = arith.constant dense<0.000000e+00> : vector<36x8xf32>
    %61 = tpu.matmul %58, %60, %cst_53 {dimension_numbers = #tpu.dot_dimension_numbers<[1], [0], [0], [1], [0, 0, 1, 1], [], []>} : vector<36x57xbf16>, vector<57x8xbf16>, vector<36x8xf32> -> vector<36x8xf32>
    %62 = arith.addf %55, %61 : vector<36x8xf32>
    %c0_54 = arith.constant 0 : index
    %c2_55 = arith.constant 2 : index
    %c1_56 = arith.constant 1 : index
    %63 = vector.load %arg1[%c0_54, %c2_55, %c1_56] : memref<1x41x60xf32, #tpu.memory_space<vmem>>, vector<1x36x57xf32>
    %64 = vector.shape_cast %63 : vector<1x36x57xf32> to vector<36x57xf32>
    %65 = arith.truncf %64 : vector<36x57xf32> to vector<36x57xbf16>
    %c2_57 = arith.constant 2 : index
    %c0_58 = arith.constant 0 : index
    %c0_59 = arith.constant 0 : index
    %66 = vector.load %arg2[%c2_57, %c0_58, %c0_59] : memref<6x57x8xbf16, #tpu.memory_space<vmem>>, vector<1x57x8xbf16>
    %67 = vector.shape_cast %66 : vector<1x57x8xbf16> to vector<57x8xbf16>
    %cst_60 = arith.constant dense<0.000000e+00> : vector<36x8xf32>
    %68 = tpu.matmul %65, %67, %cst_60 {dimension_numbers = #tpu.dot_dimension_numbers<[1], [0], [0], [1], [0, 0, 1, 1], [], []>} : vector<36x57xbf16>, vector<57x8xbf16>, vector<36x8xf32> -> vector<36x8xf32>
    %69 = arith.addf %62, %68 : vector<36x8xf32>
    %c0_61 = arith.constant 0 : index
    %c3_62 = arith.constant 3 : index
    %c1_63 = arith.constant 1 : index
    %70 = vector.load %arg1[%c0_61, %c3_62, %c1_63] : memref<1x41x60xf32, #tpu.memory_space<vmem>>, vector<1x36x57xf32>
    %71 = vector.shape_cast %70 : vector<1x36x57xf32> to vector<36x57xf32>
    %72 = arith.truncf %71 : vector<36x57xf32> to vector<36x57xbf16>
    %c3_64 = arith.constant 3 : index
    %c0_65 = arith.constant 0 : index
    %c0_66 = arith.constant 0 : index
    %73 = vector.load %arg2[%c3_64, %c0_65, %c0_66] : memref<6x57x8xbf16, #tpu.memory_space<vmem>>, vector<1x57x8xbf16>
    %74 = vector.shape_cast %73 : vector<1x57x8xbf16> to vector<57x8xbf16>
    %cst_67 = arith.constant dense<0.000000e+00> : vector<36x8xf32>
    %75 = tpu.matmul %72, %74, %cst_67 {dimension_numbers = #tpu.dot_dimension_numbers<[1], [0], [0], [1], [0, 0, 1, 1], [], []>} : vector<36x57xbf16>, vector<57x8xbf16>, vector<36x8xf32> -> vector<36x8xf32>
    %76 = arith.addf %69, %75 : vector<36x8xf32>
    %c0_68 = arith.constant 0 : index
    %c4_69 = arith.constant 4 : index
    %c1_70 = arith.constant 1 : index
    %77 = vector.load %arg1[%c0_68, %c4_69, %c1_70] : memref<1x41x60xf32, #tpu.memory_space<vmem>>, vector<1x36x57xf32>
    %78 = vector.shape_cast %77 : vector<1x36x57xf32> to vector<36x57xf32>
    %79 = arith.truncf %78 : vector<36x57xf32> to vector<36x57xbf16>
    %c4_71 = arith.constant 4 : index
    %c0_72 = arith.constant 0 : index
    %c0_73 = arith.constant 0 : index
    %80 = vector.load %arg2[%c4_71, %c0_72, %c0_73] : memref<6x57x8xbf16, #tpu.memory_space<vmem>>, vector<1x57x8xbf16>
    %81 = vector.shape_cast %80 : vector<1x57x8xbf16> to vector<57x8xbf16>
    %cst_74 = arith.constant dense<0.000000e+00> : vector<36x8xf32>
    %82 = tpu.matmul %79, %81, %cst_74 {dimension_numbers = #tpu.dot_dimension_numbers<[1], [0], [0], [1], [0, 0, 1, 1], [], []>} : vector<36x57xbf16>, vector<57x8xbf16>, vector<36x8xf32> -> vector<36x8xf32>
    %83 = arith.addf %76, %82 : vector<36x8xf32>
    %c0_75 = arith.constant 0 : index
    %c5_76 = arith.constant 5 : index
    %c1_77 = arith.constant 1 : index
    %84 = vector.load %arg1[%c0_75, %c5_76, %c1_77] : memref<1x41x60xf32, #tpu.memory_space<vmem>>, vector<1x36x57xf32>
    %85 = vector.shape_cast %84 : vector<1x36x57xf32> to vector<36x57xf32>
    %86 = arith.truncf %85 : vector<36x57xf32> to vector<36x57xbf16>
    %c5_78 = arith.constant 5 : index
    %c0_79 = arith.constant 0 : index
    %c0_80 = arith.constant 0 : index
    %87 = vector.load %arg2[%c5_78, %c0_79, %c0_80] : memref<6x57x8xbf16, #tpu.memory_space<vmem>>, vector<1x57x8xbf16>
    %88 = vector.shape_cast %87 : vector<1x57x8xbf16> to vector<57x8xbf16>
    %cst_81 = arith.constant dense<0.000000e+00> : vector<36x8xf32>
    %89 = tpu.matmul %86, %88, %cst_81 {dimension_numbers = #tpu.dot_dimension_numbers<[1], [0], [0], [1], [0, 0, 1, 1], [], []>} : vector<36x57xbf16>, vector<57x8xbf16>, vector<36x8xf32> -> vector<36x8xf32>
    %90 = arith.addf %83, %89 : vector<36x8xf32>
    %c0_82 = arith.constant 0 : index
    %c0_83 = arith.constant 0 : index
    %91 = vector.load %arg3[%c0_82, %c0_83] : memref<1x8xf32, #tpu.memory_space<vmem>>, vector<1x8xf32>
    %92 = vector.broadcast %91 : vector<1x8xf32> to vector<36x8xf32>
    %93 = arith.addf %90, %92 : vector<36x8xf32>
    %cst_84 = arith.constant 0.000000e+00 : f32
    %94 = vector.broadcast %cst_84 : f32 to vector<36x8xf32>
    %95 = arith.maximumf %93, %94 : vector<36x8xf32>
    %cst_85 = arith.constant 0.000000e+00 : f32
    %96 = vector.broadcast %cst_85 : f32 to vector<36x8xf32>
    %c0_86 = arith.constant 0 : index
    %c0_87 = arith.constant 0 : index
    %c2_88 = arith.constant 2 : index
    %97 = vector.load %arg1[%c0_86, %c0_87, %c2_88] : memref<1x41x60xf32, #tpu.memory_space<vmem>>, vector<1x36x57xf32>
    %98 = vector.shape_cast %97 : vector<1x36x57xf32> to vector<36x57xf32>
    %99 = arith.truncf %98 : vector<36x57xf32> to vector<36x57xbf16>
    %c0_89 = arith.constant 0 : index
    %c0_90 = arith.constant 0 : index
    %c0_91 = arith.constant 0 : index
    %100 = vector.load %arg2[%c0_89, %c0_90, %c0_91] : memref<6x57x8xbf16, #tpu.memory_space<vmem>>, vector<1x57x8xbf16>
    %101 = vector.shape_cast %100 : vector<1x57x8xbf16> to vector<57x8xbf16>
    %cst_92 = arith.constant dense<0.000000e+00> : vector<36x8xf32>
    %102 = tpu.matmul %99, %101, %cst_92 {dimension_numbers = #tpu.dot_dimension_numbers<[1], [0], [0], [1], [0, 0, 1, 1], [], []>} : vector<36x57xbf16>, vector<57x8xbf16>, vector<36x8xf32> -> vector<36x8xf32>
    %103 = arith.addf %96, %102 : vector<36x8xf32>
    %c0_93 = arith.constant 0 : index
    %c1_94 = arith.constant 1 : index
    %c2_95 = arith.constant 2 : index
    %104 = vector.load %arg1[%c0_93, %c1_94, %c2_95] : memref<1x41x60xf32, #tpu.memory_space<vmem>>, vector<1x36x57xf32>
    %105 = vector.shape_cast %104 : vector<1x36x57xf32> to vector<36x57xf32>
    %106 = arith.truncf %105 : vector<36x57xf32> to vector<36x57xbf16>
    %c1_96 = arith.constant 1 : index
    %c0_97 = arith.constant 0 : index
    %c0_98 = arith.constant 0 : index
    %107 = vector.load %arg2[%c1_96, %c0_97, %c0_98] : memref<6x57x8xbf16, #tpu.memory_space<vmem>>, vector<1x57x8xbf16>
    %108 = vector.shape_cast %107 : vector<1x57x8xbf16> to vector<57x8xbf16>
    %cst_99 = arith.constant dense<0.000000e+00> : vector<36x8xf32>
    %109 = tpu.matmul %106, %108, %cst_99 {dimension_numbers = #tpu.dot_dimension_numbers<[1], [0], [0], [1], [0, 0, 1, 1], [], []>} : vector<36x57xbf16>, vector<57x8xbf16>, vector<36x8xf32> -> vector<36x8xf32>
    %110 = arith.addf %103, %109 : vector<36x8xf32>
    %c0_100 = arith.constant 0 : index
    %c2_101 = arith.constant 2 : index
    %c2_102 = arith.constant 2 : index
    %111 = vector.load %arg1[%c0_100, %c2_101, %c2_102] : memref<1x41x60xf32, #tpu.memory_space<vmem>>, vector<1x36x57xf32>
    %112 = vector.shape_cast %111 : vector<1x36x57xf32> to vector<36x57xf32>
    %113 = arith.truncf %112 : vector<36x57xf32> to vector<36x57xbf16>
    %c2_103 = arith.constant 2 : index
    %c0_104 = arith.constant 0 : index
    %c0_105 = arith.constant 0 : index
    %114 = vector.load %arg2[%c2_103, %c0_104, %c0_105] : memref<6x57x8xbf16, #tpu.memory_space<vmem>>, vector<1x57x8xbf16>
    %115 = vector.shape_cast %114 : vector<1x57x8xbf16> to vector<57x8xbf16>
    %cst_106 = arith.constant dense<0.000000e+00> : vector<36x8xf32>
    %116 = tpu.matmul %113, %115, %cst_106 {dimension_numbers = #tpu.dot_dimension_numbers<[1], [0], [0], [1], [0, 0, 1, 1], [], []>} : vector<36x57xbf16>, vector<57x8xbf16>, vector<36x8xf32> -> vector<36x8xf32>
    %117 = arith.addf %110, %116 : vector<36x8xf32>
    %c0_107 = arith.constant 0 : index
    %c3_108 = arith.constant 3 : index
    %c2_109 = arith.constant 2 : index
    %118 = vector.load %arg1[%c0_107, %c3_108, %c2_109] : memref<1x41x60xf32, #tpu.memory_space<vmem>>, vector<1x36x57xf32>
    %119 = vector.shape_cast %118 : vector<1x36x57xf32> to vector<36x57xf32>
    %120 = arith.truncf %119 : vector<36x57xf32> to vector<36x57xbf16>
    %c3_110 = arith.constant 3 : index
    %c0_111 = arith.constant 0 : index
    %c0_112 = arith.constant 0 : index
    %121 = vector.load %arg2[%c3_110, %c0_111, %c0_112] : memref<6x57x8xbf16, #tpu.memory_space<vmem>>, vector<1x57x8xbf16>
    %122 = vector.shape_cast %121 : vector<1x57x8xbf16> to vector<57x8xbf16>
    %cst_113 = arith.constant dense<0.000000e+00> : vector<36x8xf32>
    %123 = tpu.matmul %120, %122, %cst_113 {dimension_numbers = #tpu.dot_dimension_numbers<[1], [0], [0], [1], [0, 0, 1, 1], [], []>} : vector<36x57xbf16>, vector<57x8xbf16>, vector<36x8xf32> -> vector<36x8xf32>
    %124 = arith.addf %117, %123 : vector<36x8xf32>
    %c0_114 = arith.constant 0 : index
    %c4_115 = arith.constant 4 : index
    %c2_116 = arith.constant 2 : index
    %125 = vector.load %arg1[%c0_114, %c4_115, %c2_116] : memref<1x41x60xf32, #tpu.memory_space<vmem>>, vector<1x36x57xf32>
    %126 = vector.shape_cast %125 : vector<1x36x57xf32> to vector<36x57xf32>
    %127 = arith.truncf %126 : vector<36x57xf32> to vector<36x57xbf16>
    %c4_117 = arith.constant 4 : index
    %c0_118 = arith.constant 0 : index
    %c0_119 = arith.constant 0 : index
    %128 = vector.load %arg2[%c4_117, %c0_118, %c0_119] : memref<6x57x8xbf16, #tpu.memory_space<vmem>>, vector<1x57x8xbf16>
    %129 = vector.shape_cast %128 : vector<1x57x8xbf16> to vector<57x8xbf16>
    %cst_120 = arith.constant dense<0.000000e+00> : vector<36x8xf32>
    %130 = tpu.matmul %127, %129, %cst_120 {dimension_numbers = #tpu.dot_dimension_numbers<[1], [0], [0], [1], [0, 0, 1, 1], [], []>} : vector<36x57xbf16>, vector<57x8xbf16>, vector<36x8xf32> -> vector<36x8xf32>
    %131 = arith.addf %124, %130 : vector<36x8xf32>
    %c0_121 = arith.constant 0 : index
    %c5_122 = arith.constant 5 : index
    %c2_123 = arith.constant 2 : index
    %132 = vector.load %arg1[%c0_121, %c5_122, %c2_123] : memref<1x41x60xf32, #tpu.memory_space<vmem>>, vector<1x36x57xf32>
    %133 = vector.shape_cast %132 : vector<1x36x57xf32> to vector<36x57xf32>
    %134 = arith.truncf %133 : vector<36x57xf32> to vector<36x57xbf16>
    %c5_124 = arith.constant 5 : index
    %c0_125 = arith.constant 0 : index
    %c0_126 = arith.constant 0 : index
    %135 = vector.load %arg2[%c5_124, %c0_125, %c0_126] : memref<6x57x8xbf16, #tpu.memory_space<vmem>>, vector<1x57x8xbf16>
    %136 = vector.shape_cast %135 : vector<1x57x8xbf16> to vector<57x8xbf16>
    %cst_127 = arith.constant dense<0.000000e+00> : vector<36x8xf32>
    %137 = tpu.matmul %134, %136, %cst_127 {dimension_numbers = #tpu.dot_dimension_numbers<[1], [0], [0], [1], [0, 0, 1, 1], [], []>} : vector<36x57xbf16>, vector<57x8xbf16>, vector<36x8xf32> -> vector<36x8xf32>
    %138 = arith.addf %131, %137 : vector<36x8xf32>
    %c0_128 = arith.constant 0 : index
    %c0_129 = arith.constant 0 : index
    %139 = vector.load %arg3[%c0_128, %c0_129] : memref<1x8xf32, #tpu.memory_space<vmem>>, vector<1x8xf32>
    %140 = vector.broadcast %139 : vector<1x8xf32> to vector<36x8xf32>
    %141 = arith.addf %138, %140 : vector<36x8xf32>
    %cst_130 = arith.constant 0.000000e+00 : f32
    %142 = vector.broadcast %cst_130 : f32 to vector<36x8xf32>
    %143 = arith.maximumf %141, %142 : vector<36x8xf32>
    %cst_131 = arith.constant 0.000000e+00 : f32
    %144 = vector.broadcast %cst_131 : f32 to vector<36x8xf32>
    %c0_132 = arith.constant 0 : index
    %c0_133 = arith.constant 0 : index
    %c3_134 = arith.constant 3 : index
    %145 = vector.load %arg1[%c0_132, %c0_133, %c3_134] : memref<1x41x60xf32, #tpu.memory_space<vmem>>, vector<1x36x57xf32>
    %146 = vector.shape_cast %145 : vector<1x36x57xf32> to vector<36x57xf32>
    %147 = arith.truncf %146 : vector<36x57xf32> to vector<36x57xbf16>
    %c0_135 = arith.constant 0 : index
    %c0_136 = arith.constant 0 : index
    %c0_137 = arith.constant 0 : index
    %148 = vector.load %arg2[%c0_135, %c0_136, %c0_137] : memref<6x57x8xbf16, #tpu.memory_space<vmem>>, vector<1x57x8xbf16>
    %149 = vector.shape_cast %148 : vector<1x57x8xbf16> to vector<57x8xbf16>
    %cst_138 = arith.constant dense<0.000000e+00> : vector<36x8xf32>
    %150 = tpu.matmul %147, %149, %cst_138 {dimension_numbers = #tpu.dot_dimension_numbers<[1], [0], [0], [1], [0, 0, 1, 1], [], []>} : vector<36x57xbf16>, vector<57x8xbf16>, vector<36x8xf32> -> vector<36x8xf32>
    %151 = arith.addf %144, %150 : vector<36x8xf32>
    %c0_139 = arith.constant 0 : index
    %c1_140 = arith.constant 1 : index
    %c3_141 = arith.constant 3 : index
    %152 = vector.load %arg1[%c0_139, %c1_140, %c3_141] : memref<1x41x60xf32, #tpu.memory_space<vmem>>, vector<1x36x57xf32>
    %153 = vector.shape_cast %152 : vector<1x36x57xf32> to vector<36x57xf32>
    %154 = arith.truncf %153 : vector<36x57xf32> to vector<36x57xbf16>
    %c1_142 = arith.constant 1 : index
    %c0_143 = arith.constant 0 : index
    %c0_144 = arith.constant 0 : index
    %155 = vector.load %arg2[%c1_142, %c0_143, %c0_144] : memref<6x57x8xbf16, #tpu.memory_space<vmem>>, vector<1x57x8xbf16>
    %156 = vector.shape_cast %155 : vector<1x57x8xbf16> to vector<57x8xbf16>
    %cst_145 = arith.constant dense<0.000000e+00> : vector<36x8xf32>
    %157 = tpu.matmul %154, %156, %cst_145 {dimension_numbers = #tpu.dot_dimension_numbers<[1], [0], [0], [1], [0, 0, 1, 1], [], []>} : vector<36x57xbf16>, vector<57x8xbf16>, vector<36x8xf32> -> vector<36x8xf32>
    %158 = arith.addf %151, %157 : vector<36x8xf32>
    %c0_146 = arith.constant 0 : index
    %c2_147 = arith.constant 2 : index
    %c3_148 = arith.constant 3 : index
    %159 = vector.load %arg1[%c0_146, %c2_147, %c3_148] : memref<1x41x60xf32, #tpu.memory_space<vmem>>, vector<1x36x57xf32>
    %160 = vector.shape_cast %159 : vector<1x36x57xf32> to vector<36x57xf32>
    %161 = arith.truncf %160 : vector<36x57xf32> to vector<36x57xbf16>
    %c2_149 = arith.constant 2 : index
    %c0_150 = arith.constant 0 : index
    %c0_151 = arith.constant 0 : index
    %162 = vector.load %arg2[%c2_149, %c0_150, %c0_151] : memref<6x57x8xbf16, #tpu.memory_space<vmem>>, vector<1x57x8xbf16>
    %163 = vector.shape_cast %162 : vector<1x57x8xbf16> to vector<57x8xbf16>
    %cst_152 = arith.constant dense<0.000000e+00> : vector<36x8xf32>
    %164 = tpu.matmul %161, %163, %cst_152 {dimension_numbers = #tpu.dot_dimension_numbers<[1], [0], [0], [1], [0, 0, 1, 1], [], []>} : vector<36x57xbf16>, vector<57x8xbf16>, vector<36x8xf32> -> vector<36x8xf32>
    %165 = arith.addf %158, %164 : vector<36x8xf32>
    %c0_153 = arith.constant 0 : index
    %c3_154 = arith.constant 3 : index
    %c3_155 = arith.constant 3 : index
    %166 = vector.load %arg1[%c0_153, %c3_154, %c3_155] : memref<1x41x60xf32, #tpu.memory_space<vmem>>, vector<1x36x57xf32>
    %167 = vector.shape_cast %166 : vector<1x36x57xf32> to vector<36x57xf32>
    %168 = arith.truncf %167 : vector<36x57xf32> to vector<36x57xbf16>
    %c3_156 = arith.constant 3 : index
    %c0_157 = arith.constant 0 : index
    %c0_158 = arith.constant 0 : index
    %169 = vector.load %arg2[%c3_156, %c0_157, %c0_158] : memref<6x57x8xbf16, #tpu.memory_space<vmem>>, vector<1x57x8xbf16>
    %170 = vector.shape_cast %169 : vector<1x57x8xbf16> to vector<57x8xbf16>
    %cst_159 = arith.constant dense<0.000000e+00> : vector<36x8xf32>
    %171 = tpu.matmul %168, %170, %cst_159 {dimension_numbers = #tpu.dot_dimension_numbers<[1], [0], [0], [1], [0, 0, 1, 1], [], []>} : vector<36x57xbf16>, vector<57x8xbf16>, vector<36x8xf32> -> vector<36x8xf32>
    %172 = arith.addf %165, %171 : vector<36x8xf32>
    %c0_160 = arith.constant 0 : index
    %c4_161 = arith.constant 4 : index
    %c3_162 = arith.constant 3 : index
    %173 = vector.load %arg1[%c0_160, %c4_161, %c3_162] : memref<1x41x60xf32, #tpu.memory_space<vmem>>, vector<1x36x57xf32>
    %174 = vector.shape_cast %173 : vector<1x36x57xf32> to vector<36x57xf32>
    %175 = arith.truncf %174 : vector<36x57xf32> to vector<36x57xbf16>
    %c4_163 = arith.constant 4 : index
    %c0_164 = arith.constant 0 : index
    %c0_165 = arith.constant 0 : index
    %176 = vector.load %arg2[%c4_163, %c0_164, %c0_165] : memref<6x57x8xbf16, #tpu.memory_space<vmem>>, vector<1x57x8xbf16>
    %177 = vector.shape_cast %176 : vector<1x57x8xbf16> to vector<57x8xbf16>
    %cst_166 = arith.constant dense<0.000000e+00> : vector<36x8xf32>
    %178 = tpu.matmul %175, %177, %cst_166 {dimension_numbers = #tpu.dot_dimension_numbers<[1], [0], [0], [1], [0, 0, 1, 1], [], []>} : vector<36x57xbf16>, vector<57x8xbf16>, vector<36x8xf32> -> vector<36x8xf32>
    %179 = arith.addf %172, %178 : vector<36x8xf32>
    %c0_167 = arith.constant 0 : index
    %c5_168 = arith.constant 5 : index
    %c3_169 = arith.constant 3 : index
    %180 = vector.load %arg1[%c0_167, %c5_168, %c3_169] : memref<1x41x60xf32, #tpu.memory_space<vmem>>, vector<1x36x57xf32>
    %181 = vector.shape_cast %180 : vector<1x36x57xf32> to vector<36x57xf32>
    %182 = arith.truncf %181 : vector<36x57xf32> to vector<36x57xbf16>
    %c5_170 = arith.constant 5 : index
    %c0_171 = arith.constant 0 : index
    %c0_172 = arith.constant 0 : index
    %183 = vector.load %arg2[%c5_170, %c0_171, %c0_172] : memref<6x57x8xbf16, #tpu.memory_space<vmem>>, vector<1x57x8xbf16>
    %184 = vector.shape_cast %183 : vector<1x57x8xbf16> to vector<57x8xbf16>
    %cst_173 = arith.constant dense<0.000000e+00> : vector<36x8xf32>
    %185 = tpu.matmul %182, %184, %cst_173 {dimension_numbers = #tpu.dot_dimension_numbers<[1], [0], [0], [1], [0, 0, 1, 1], [], []>} : vector<36x57xbf16>, vector<57x8xbf16>, vector<36x8xf32> -> vector<36x8xf32>
    %186 = arith.addf %179, %185 : vector<36x8xf32>
    %c0_174 = arith.constant 0 : index
    %c0_175 = arith.constant 0 : index
    %187 = vector.load %arg3[%c0_174, %c0_175] : memref<1x8xf32, #tpu.memory_space<vmem>>, vector<1x8xf32>
    %188 = vector.broadcast %187 : vector<1x8xf32> to vector<36x8xf32>
    %189 = arith.addf %186, %188 : vector<36x8xf32>
    %cst_176 = arith.constant 0.000000e+00 : f32
    %190 = vector.broadcast %cst_176 : f32 to vector<36x8xf32>
    %191 = arith.maximumf %189, %190 : vector<36x8xf32>
    %192 = arith.maximumf %47, %95 : vector<36x8xf32>
    %193 = arith.maximumf %192, %143 : vector<36x8xf32>
    %194 = arith.maximumf %193, %191 : vector<36x8xf32>
    %195 = vector.extract_strided_slice %194 {offsets = [0, 0], sizes = [1, 8], strides = [1, 1]} : vector<36x8xf32> to vector<1x8xf32>
    %196 = vector.extract_strided_slice %194 {offsets = [1, 0], sizes = [1, 8], strides = [1, 1]} : vector<36x8xf32> to vector<1x8xf32>
    %197 = arith.maximumf %195, %196 : vector<1x8xf32>
    %198 = vector.extract_strided_slice %194 {offsets = [2, 0], sizes = [1, 8], strides = [1, 1]} : vector<36x8xf32> to vector<1x8xf32>
    %199 = arith.maximumf %197, %198 : vector<1x8xf32>
    %c0_177 = arith.constant 0 : index
    %c0_178 = arith.constant 0 : index
    %c0_179 = arith.constant 0 : index
    %200 = vector.load %arg13[%c0_177, %c0_178, %c0_179] : memref<1x12x8xf32, #tpu.memory_space<vmem>>, vector<1x1x8xf32>
    %201 = vector.shape_cast %200 : vector<1x1x8xf32> to vector<1x8xf32>
    %202 = vector.shape_cast %199 : vector<1x8xf32> to vector<1x1x8xf32>
    tpu.vector_store %arg13[%c0_177, %c0_178, %c0_179], %202 {strides = array<i32>} : memref<1x12x8xf32, #tpu.memory_space<vmem>>, vector<1x1x8xf32>,
    %203 = vector.extract_strided_slice %194 {offsets = [3, 0], sizes = [1, 8], strides = [1, 1]} : vector<36x8xf32> to vector<1x8xf32>
    %204 = vector.extract_strided_slice %194 {offsets = [4, 0], sizes = [1, 8], strides = [1, 1]} : vector<36x8xf32> to vector<1x8xf32>
    %205 = arith.maximumf %203, %204 : vector<1x8xf32>
    %206 = vector.extract_strided_slice %194 {offsets = [5, 0], sizes = [1, 8], strides = [1, 1]} : vector<36x8xf32> to vector<1x8xf32>
    %207 = arith.maximumf %205, %206 : vector<1x8xf32>
    %c0_180 = arith.constant 0 : index
    %c1_181 = arith.constant 1 : index
    %c0_182 = arith.constant 0 : index
    %208 = vector.load %arg13[%c0_180, %c1_181, %c0_182] : memref<1x12x8xf32, #tpu.memory_space<vmem>>, vector<1x1x8xf32>
    %209 = vector.shape_cast %208 : vector<1x1x8xf32> to vector<1x8xf32>
    %210 = vector.shape_cast %207 : vector<1x8xf32> to vector<1x1x8xf32>
    tpu.vector_store %arg13[%c0_180, %c1_181, %c0_182], %210 {strides = array<i32>} : memref<1x12x8xf32, #tpu.memory_space<vmem>>, vector<1x1x8xf32>,
    %211 = vector.extract_strided_slice %194 {offsets = [6, 0], sizes = [1, 8], strides = [1, 1]} : vector<36x8xf32> to vector<1x8xf32>
    %212 = vector.extract_strided_slice %194 {offsets = [7, 0], sizes = [1, 8], strides = [1, 1]} : vector<36x8xf32> to vector<1x8xf32>
    %213 = arith.maximumf %211, %212 : vector<1x8xf32>
    %214 = vector.extract_strided_slice %194 {offsets = [8, 0], sizes = [1, 8], strides = [1, 1]} : vector<36x8xf32> to vector<1x8xf32>
    %215 = arith.maximumf %213, %214 : vector<1x8xf32>
    %c0_183 = arith.constant 0 : index
    %c2_184 = arith.constant 2 : index
    %c0_185 = arith.constant 0 : index
    %216 = vector.load %arg13[%c0_183, %c2_184, %c0_185] : memref<1x12x8xf32, #tpu.memory_space<vmem>>, vector<1x1x8xf32>
    %217 = vector.shape_cast %216 : vector<1x1x8xf32> to vector<1x8xf32>
    %218 = vector.shape_cast %215 : vector<1x8xf32> to vector<1x1x8xf32>
    tpu.vector_store %arg13[%c0_183, %c2_184, %c0_185], %218 {strides = array<i32>} : memref<1x12x8xf32, #tpu.memory_space<vmem>>, vector<1x1x8xf32>,
    %219 = vector.extract_strided_slice %194 {offsets = [9, 0], sizes = [1, 8], strides = [1, 1]} : vector<36x8xf32> to vector<1x8xf32>
    %220 = vector.extract_strided_slice %194 {offsets = [10, 0], sizes = [1, 8], strides = [1, 1]} : vector<36x8xf32> to vector<1x8xf32>
    %221 = arith.maximumf %219, %220 : vector<1x8xf32>
    %222 = vector.extract_strided_slice %194 {offsets = [11, 0], sizes = [1, 8], strides = [1, 1]} : vector<36x8xf32> to vector<1x8xf32>
    %223 = arith.maximumf %221, %222 : vector<1x8xf32>
    %c0_186 = arith.constant 0 : index
    %c3_187 = arith.constant 3 : index
    %c0_188 = arith.constant 0 : index
    %224 = vector.load %arg13[%c0_186, %c3_187, %c0_188] : memref<1x12x8xf32, #tpu.memory_space<vmem>>, vector<1x1x8xf32>
    %225 = vector.shape_cast %224 : vector<1x1x8xf32> to vector<1x8xf32>
    %226 = vector.shape_cast %223 : vector<1x8xf32> to vector<1x1x8xf32>
    tpu.vector_store %arg13[%c0_186, %c3_187, %c0_188], %226 {strides = array<i32>} : memref<1x12x8xf32, #tpu.memory_space<vmem>>, vector<1x1x8xf32>,
    %227 = vector.extract_strided_slice %194 {offsets = [12, 0], sizes = [1, 8], strides = [1, 1]} : vector<36x8xf32> to vector<1x8xf32>
    %228 = vector.extract_strided_slice %194 {offsets = [13, 0], sizes = [1, 8], strides = [1, 1]} : vector<36x8xf32> to vector<1x8xf32>
    %229 = arith.maximumf %227, %228 : vector<1x8xf32>
    %230 = vector.extract_strided_slice %194 {offsets = [14, 0], sizes = [1, 8], strides = [1, 1]} : vector<36x8xf32> to vector<1x8xf32>
    %231 = arith.maximumf %229, %230 : vector<1x8xf32>
    %c0_189 = arith.constant 0 : index
    %c4_190 = arith.constant 4 : index
    %c0_191 = arith.constant 0 : index
    %232 = vector.load %arg13[%c0_189, %c4_190, %c0_191] : memref<1x12x8xf32, #tpu.memory_space<vmem>>, vector<1x1x8xf32>
    %233 = vector.shape_cast %232 : vector<1x1x8xf32> to vector<1x8xf32>
    %234 = vector.shape_cast %231 : vector<1x8xf32> to vector<1x1x8xf32>
    tpu.vector_store %arg13[%c0_189, %c4_190, %c0_191], %234 {strides = array<i32>} : memref<1x12x8xf32, #tpu.memory_space<vmem>>, vector<1x1x8xf32>,
    %235 = vector.extract_strided_slice %194 {offsets = [15, 0], sizes = [1, 8], strides = [1, 1]} : vector<36x8xf32> to vector<1x8xf32>
    %236 = vector.extract_strided_slice %194 {offsets = [16, 0], sizes = [1, 8], strides = [1, 1]} : vector<36x8xf32> to vector<1x8xf32>
    %237 = arith.maximumf %235, %236 : vector<1x8xf32>
    %238 = vector.extract_strided_slice %194 {offsets = [17, 0], sizes = [1, 8], strides = [1, 1]} : vector<36x8xf32> to vector<1x8xf32>
    %239 = arith.maximumf %237, %238 : vector<1x8xf32>
    %c0_192 = arith.constant 0 : index
    %c5_193 = arith.constant 5 : index
    %c0_194 = arith.constant 0 : index
    %240 = vector.load %arg13[%c0_192, %c5_193, %c0_194] : memref<1x12x8xf32, #tpu.memory_space<vmem>>, vector<1x1x8xf32>
    %241 = vector.shape_cast %240 : vector<1x1x8xf32> to vector<1x8xf32>
    %242 = vector.shape_cast %239 : vector<1x8xf32> to vector<1x1x8xf32>
    tpu.vector_store %arg13[%c0_192, %c5_193, %c0_194], %242 {strides = array<i32>} : memref<1x12x8xf32, #tpu.memory_space<vmem>>, vector<1x1x8xf32>,
    %243 = vector.extract_strided_slice %194 {offsets = [18, 0], sizes = [1, 8], strides = [1, 1]} : vector<36x8xf32> to vector<1x8xf32>
    %244 = vector.extract_strided_slice %194 {offsets = [19, 0], sizes = [1, 8], strides = [1, 1]} : vector<36x8xf32> to vector<1x8xf32>
    %245 = arith.maximumf %243, %244 : vector<1x8xf32>
    %246 = vector.extract_strided_slice %194 {offsets = [20, 0], sizes = [1, 8], strides = [1, 1]} : vector<36x8xf32> to vector<1x8xf32>
    %247 = arith.maximumf %245, %246 : vector<1x8xf32>
    %c0_195 = arith.constant 0 : index
    %c6 = arith.constant 6 : index
    %c0_196 = arith.constant 0 : index
    %248 = vector.load %arg13[%c0_195, %c6, %c0_196] : memref<1x12x8xf32, #tpu.memory_space<vmem>>, vector<1x1x8xf32>
    %249 = vector.shape_cast %248 : vector<1x1x8xf32> to vector<1x8xf32>
    %250 = vector.shape_cast %247 : vector<1x8xf32> to vector<1x1x8xf32>
    tpu.vector_store %arg13[%c0_195, %c6, %c0_196], %250 {strides = array<i32>} : memref<1x12x8xf32, #tpu.memory_space<vmem>>, vector<1x1x8xf32>,
    %251 = vector.extract_strided_slice %194 {offsets = [21, 0], sizes = [1, 8], strides = [1, 1]} : vector<36x8xf32> to vector<1x8xf32>
    %252 = vector.extract_strided_slice %194 {offsets = [22, 0], sizes = [1, 8], strides = [1, 1]} : vector<36x8xf32> to vector<1x8xf32>
    %253 = arith.maximumf %251, %252 : vector<1x8xf32>
    %254 = vector.extract_strided_slice %194 {offsets = [23, 0], sizes = [1, 8], strides = [1, 1]} : vector<36x8xf32> to vector<1x8xf32>
    %255 = arith.maximumf %253, %254 : vector<1x8xf32>
    %c0_197 = arith.constant 0 : index
    %c7 = arith.constant 7 : index
    %c0_198 = arith.constant 0 : index
    %256 = vector.load %arg13[%c0_197, %c7, %c0_198] : memref<1x12x8xf32, #tpu.memory_space<vmem>>, vector<1x1x8xf32>
    %257 = vector.shape_cast %256 : vector<1x1x8xf32> to vector<1x8xf32>
    %258 = vector.shape_cast %255 : vector<1x8xf32> to vector<1x1x8xf32>
    tpu.vector_store %arg13[%c0_197, %c7, %c0_198], %258 {strides = array<i32>} : memref<1x12x8xf32, #tpu.memory_space<vmem>>, vector<1x1x8xf32>,
    %259 = vector.extract_strided_slice %194 {offsets = [24, 0], sizes = [1, 8], strides = [1, 1]} : vector<36x8xf32> to vector<1x8xf32>
    %260 = vector.extract_strided_slice %194 {offsets = [25, 0], sizes = [1, 8], strides = [1, 1]} : vector<36x8xf32> to vector<1x8xf32>
    %261 = arith.maximumf %259, %260 : vector<1x8xf32>
    %262 = vector.extract_strided_slice %194 {offsets = [26, 0], sizes = [1, 8], strides = [1, 1]} : vector<36x8xf32> to vector<1x8xf32>
    %263 = arith.maximumf %261, %262 : vector<1x8xf32>
    %c0_199 = arith.constant 0 : index
    %c8 = arith.constant 8 : index
    %c0_200 = arith.constant 0 : index
    %264 = vector.load %arg13[%c0_199, %c8, %c0_200] : memref<1x12x8xf32, #tpu.memory_space<vmem>>, vector<1x1x8xf32>
    %265 = vector.shape_cast %264 : vector<1x1x8xf32> to vector<1x8xf32>
    %266 = vector.shape_cast %263 : vector<1x8xf32> to vector<1x1x8xf32>
    tpu.vector_store %arg13[%c0_199, %c8, %c0_200], %266 {strides = array<i32>} : memref<1x12x8xf32, #tpu.memory_space<vmem>>, vector<1x1x8xf32>,
    %267 = vector.extract_strided_slice %194 {offsets = [27, 0], sizes = [1, 8], strides = [1, 1]} : vector<36x8xf32> to vector<1x8xf32>
    %268 = vector.extract_strided_slice %194 {offsets = [28, 0], sizes = [1, 8], strides = [1, 1]} : vector<36x8xf32> to vector<1x8xf32>
    %269 = arith.maximumf %267, %268 : vector<1x8xf32>
    %270 = vector.extract_strided_slice %194 {offsets = [29, 0], sizes = [1, 8], strides = [1, 1]} : vector<36x8xf32> to vector<1x8xf32>
    %271 = arith.maximumf %269, %270 : vector<1x8xf32>
    %c0_201 = arith.constant 0 : index
    %c9 = arith.constant 9 : index
    %c0_202 = arith.constant 0 : index
    %272 = vector.load %arg13[%c0_201, %c9, %c0_202] : memref<1x12x8xf32, #tpu.memory_space<vmem>>, vector<1x1x8xf32>
    %273 = vector.shape_cast %272 : vector<1x1x8xf32> to vector<1x8xf32>
    %274 = vector.shape_cast %271 : vector<1x8xf32> to vector<1x1x8xf32>
    tpu.vector_store %arg13[%c0_201, %c9, %c0_202], %274 {strides = array<i32>} : memref<1x12x8xf32, #tpu.memory_space<vmem>>, vector<1x1x8xf32>,
    %275 = vector.extract_strided_slice %194 {offsets = [30, 0], sizes = [1, 8], strides = [1, 1]} : vector<36x8xf32> to vector<1x8xf32>
    %276 = vector.extract_strided_slice %194 {offsets = [31, 0], sizes = [1, 8], strides = [1, 1]} : vector<36x8xf32> to vector<1x8xf32>
    %277 = arith.maximumf %275, %276 : vector<1x8xf32>
    %278 = vector.extract_strided_slice %194 {offsets = [32, 0], sizes = [1, 8], strides = [1, 1]} : vector<36x8xf32> to vector<1x8xf32>
    %279 = arith.maximumf %277, %278 : vector<1x8xf32>
    %c0_203 = arith.constant 0 : index
    %c10 = arith.constant 10 : index
    %c0_204 = arith.constant 0 : index
    %280 = vector.load %arg13[%c0_203, %c10, %c0_204] : memref<1x12x8xf32, #tpu.memory_space<vmem>>, vector<1x1x8xf32>
    %281 = vector.shape_cast %280 : vector<1x1x8xf32> to vector<1x8xf32>
    %282 = vector.shape_cast %279 : vector<1x8xf32> to vector<1x1x8xf32>
    tpu.vector_store %arg13[%c0_203, %c10, %c0_204], %282 {strides = array<i32>} : memref<1x12x8xf32, #tpu.memory_space<vmem>>, vector<1x1x8xf32>,
    %283 = vector.extract_strided_slice %194 {offsets = [33, 0], sizes = [1, 8], strides = [1, 1]} : vector<36x8xf32> to vector<1x8xf32>
    %284 = vector.extract_strided_slice %194 {offsets = [34, 0], sizes = [1, 8], strides = [1, 1]} : vector<36x8xf32> to vector<1x8xf32>
    %285 = arith.maximumf %283, %284 : vector<1x8xf32>
    %286 = vector.extract_strided_slice %194 {offsets = [35, 0], sizes = [1, 8], strides = [1, 1]} : vector<36x8xf32> to vector<1x8xf32>
    %287 = arith.maximumf %285, %286 : vector<1x8xf32>
    %c0_205 = arith.constant 0 : index
    %c11 = arith.constant 11 : index
    %c0_206 = arith.constant 0 : index
    %288 = vector.load %arg13[%c0_205, %c11, %c0_206] : memref<1x12x8xf32, #tpu.memory_space<vmem>>, vector<1x1x8xf32>
    %289 = vector.shape_cast %288 : vector<1x1x8xf32> to vector<1x8xf32>
    %290 = vector.shape_cast %287 : vector<1x8xf32> to vector<1x1x8xf32>
    tpu.vector_store %arg13[%c0_205, %c11, %c0_206], %290 {strides = array<i32>} : memref<1x12x8xf32, #tpu.memory_space<vmem>>, vector<1x1x8xf32>,
    %cst_207 = arith.constant 0.000000e+00 : f32
    %291 = vector.broadcast %cst_207 : f32 to vector<10x8xf32>
    %c0_208 = arith.constant 0 : index
    %c0_209 = arith.constant 0 : index
    %c0_210 = arith.constant 0 : index
    %292 = vector.load %arg13[%c0_208, %c0_209, %c0_210] : memref<1x12x8xf32, #tpu.memory_space<vmem>>, vector<1x10x8xf32>
    %293 = vector.shape_cast %292 : vector<1x10x8xf32> to vector<10x8xf32>
    %294 = arith.truncf %293 : vector<10x8xf32> to vector<10x8xbf16>
    %c0_211 = arith.constant 0 : index
    %c0_212 = arith.constant 0 : index
    %c0_213 = arith.constant 0 : index
    %295 = vector.load %arg4[%c0_211, %c0_212, %c0_213] : memref<3x8x8xbf16, #tpu.memory_space<vmem>>, vector<1x8x8xbf16>
    %296 = vector.shape_cast %295 : vector<1x8x8xbf16> to vector<8x8xbf16>
    %cst_214 = arith.constant dense<0.000000e+00> : vector<10x8xf32>
    %297 = tpu.matmul %294, %296, %cst_214 {dimension_numbers = #tpu.dot_dimension_numbers<[1], [0], [0], [1], [0, 0, 1, 1], [], []>} : vector<10x8xbf16>, vector<8x8xbf16>, vector<10x8xf32> -> vector<10x8xf32>
    %298 = arith.addf %291, %297 : vector<10x8xf32>
    %c0_215 = arith.constant 0 : index
    %c1_216 = arith.constant 1 : index
    %c0_217 = arith.constant 0 : index
    %299 = vector.load %arg13[%c0_215, %c1_216, %c0_217] : memref<1x12x8xf32, #tpu.memory_space<vmem>>, vector<1x10x8xf32>
    %300 = vector.shape_cast %299 : vector<1x10x8xf32> to vector<10x8xf32>
    %301 = arith.truncf %300 : vector<10x8xf32> to vector<10x8xbf16>
    %c1_218 = arith.constant 1 : index
    %c0_219 = arith.constant 0 : index
    %c0_220 = arith.constant 0 : index
    %302 = vector.load %arg4[%c1_218, %c0_219, %c0_220] : memref<3x8x8xbf16, #tpu.memory_space<vmem>>, vector<1x8x8xbf16>
    %303 = vector.shape_cast %302 : vector<1x8x8xbf16> to vector<8x8xbf16>
    %cst_221 = arith.constant dense<0.000000e+00> : vector<10x8xf32>
    %304 = tpu.matmul %301, %303, %cst_221 {dimension_numbers = #tpu.dot_dimension_numbers<[1], [0], [0], [1], [0, 0, 1, 1], [], []>} : vector<10x8xbf16>, vector<8x8xbf16>, vector<10x8xf32> -> vector<10x8xf32>
    %305 = arith.addf %298, %304 : vector<10x8xf32>
    %c0_222 = arith.constant 0 : index
    %c2_223 = arith.constant 2 : index
    %c0_224 = arith.constant 0 : index
    %306 = vector.load %arg13[%c0_222, %c2_223, %c0_224] : memref<1x12x8xf32, #tpu.memory_space<vmem>>, vector<1x10x8xf32>
    %307 = vector.shape_cast %306 : vector<1x10x8xf32> to vector<10x8xf32>
    %308 = arith.truncf %307 : vector<10x8xf32> to vector<10x8xbf16>
    %c2_225 = arith.constant 2 : index
    %c0_226 = arith.constant 0 : index
    %c0_227 = arith.constant 0 : index
    %309 = vector.load %arg4[%c2_225, %c0_226, %c0_227] : memref<3x8x8xbf16, #tpu.memory_space<vmem>>, vector<1x8x8xbf16>
    %310 = vector.shape_cast %309 : vector<1x8x8xbf16> to vector<8x8xbf16>
    %cst_228 = arith.constant dense<0.000000e+00> : vector<10x8xf32>
    %311 = tpu.matmul %308, %310, %cst_228 {dimension_numbers = #tpu.dot_dimension_numbers<[1], [0], [0], [1], [0, 0, 1, 1], [], []>} : vector<10x8xbf16>, vector<8x8xbf16>, vector<10x8xf32> -> vector<10x8xf32>
    %312 = arith.addf %305, %311 : vector<10x8xf32>
    %c0_229 = arith.constant 0 : index
    %c0_230 = arith.constant 0 : index
    %313 = vector.load %arg5[%c0_229, %c0_230] : memref<1x8xf32, #tpu.memory_space<vmem>>, vector<1x8xf32>
    %314 = vector.broadcast %313 : vector<1x8xf32> to vector<10x8xf32>
    %315 = arith.addf %312, %314 : vector<10x8xf32>
    %cst_231 = arith.constant 0.000000e+00 : f32
    %316 = vector.broadcast %cst_231 : f32 to vector<10x8xf32>
    %317 = arith.maximumf %315, %316 : vector<10x8xf32>
    %318 = vector.extract_strided_slice %317 {offsets = [0, 0], sizes = [1, 8], strides = [1, 1]} : vector<10x8xf32> to vector<1x8xf32>
    %319 = vector.extract_strided_slice %317 {offsets = [1, 0], sizes = [1, 8], strides = [1, 1]} : vector<10x8xf32> to vector<1x8xf32>
    %320 = arith.maximumf %318, %319 : vector<1x8xf32>
    %321 = vector.extract_strided_slice %317 {offsets = [2, 0], sizes = [1, 8], strides = [1, 1]} : vector<10x8xf32> to vector<1x8xf32>
    %322 = arith.maximumf %320, %321 : vector<1x8xf32>
    %323 = vector.extract_strided_slice %317 {offsets = [3, 0], sizes = [1, 8], strides = [1, 1]} : vector<10x8xf32> to vector<1x8xf32>
    %324 = vector.extract_strided_slice %317 {offsets = [4, 0], sizes = [1, 8], strides = [1, 1]} : vector<10x8xf32> to vector<1x8xf32>
    %325 = arith.maximumf %323, %324 : vector<1x8xf32>
    %326 = vector.extract_strided_slice %317 {offsets = [5, 0], sizes = [1, 8], strides = [1, 1]} : vector<10x8xf32> to vector<1x8xf32>
    %327 = arith.maximumf %325, %326 : vector<1x8xf32>
    %328 = vector.extract_strided_slice %317 {offsets = [6, 0], sizes = [1, 8], strides = [1, 1]} : vector<10x8xf32> to vector<1x8xf32>
    %329 = vector.extract_strided_slice %317 {offsets = [7, 0], sizes = [1, 8], strides = [1, 1]} : vector<10x8xf32> to vector<1x8xf32>
    %330 = arith.maximumf %328, %329 : vector<1x8xf32>
    %331 = vector.extract_strided_slice %317 {offsets = [8, 0], sizes = [1, 8], strides = [1, 1]} : vector<10x8xf32> to vector<1x8xf32>
    %332 = arith.maximumf %330, %331 : vector<1x8xf32>
    %cst_232 = arith.constant 0.000000e+00 : f32
    %333 = vector.broadcast %cst_232 : f32 to vector<1x32xf32>
    %334 = arith.truncf %322 : vector<1x8xf32> to vector<1x8xbf16>
    %c0_233 = arith.constant 0 : index
    %c0_234 = arith.constant 0 : index
    %c0_235 = arith.constant 0 : index
    %335 = vector.load %arg6[%c0_233, %c0_234, %c0_235] : memref<3x8x32xbf16, #tpu.memory_space<vmem>>, vector<1x8x32xbf16>
    %336 = vector.shape_cast %335 : vector<1x8x32xbf16> to vector<8x32xbf16>
    %cst_236 = arith.constant dense<0.000000e+00> : vector<1x32xf32>
    %337 = tpu.matmul %334, %336, %cst_236 {dimension_numbers = #tpu.dot_dimension_numbers<[1], [0], [0], [1], [0, 0, 1, 1], [], []>} : vector<1x8xbf16>, vector<8x32xbf16>, vector<1x32xf32> -> vector<1x32xf32>
    %338 = arith.addf %333, %337 : vector<1x32xf32>
    %339 = arith.truncf %327 : vector<1x8xf32> to vector<1x8xbf16>
    %c1_237 = arith.constant 1 : index
    %c0_238 = arith.constant 0 : index
    %c0_239 = arith.constant 0 : index
    %340 = vector.load %arg6[%c1_237, %c0_238, %c0_239] : memref<3x8x32xbf16, #tpu.memory_space<vmem>>, vector<1x8x32xbf16>
    %341 = vector.shape_cast %340 : vector<1x8x32xbf16> to vector<8x32xbf16>
    %cst_240 = arith.constant dense<0.000000e+00> : vector<1x32xf32>
    %342 = tpu.matmul %339, %341, %cst_240 {dimension_numbers = #tpu.dot_dimension_numbers<[1], [0], [0], [1], [0, 0, 1, 1], [], []>} : vector<1x8xbf16>, vector<8x32xbf16>, vector<1x32xf32> -> vector<1x32xf32>
    %343 = arith.addf %338, %342 : vector<1x32xf32>
    %344 = arith.truncf %332 : vector<1x8xf32> to vector<1x8xbf16>
    %c2_241 = arith.constant 2 : index
    %c0_242 = arith.constant 0 : index
    %c0_243 = arith.constant 0 : index
    %345 = vector.load %arg6[%c2_241, %c0_242, %c0_243] : memref<3x8x32xbf16, #tpu.memory_space<vmem>>, vector<1x8x32xbf16>
    %346 = vector.shape_cast %345 : vector<1x8x32xbf16> to vector<8x32xbf16>
    %cst_244 = arith.constant dense<0.000000e+00> : vector<1x32xf32>
    %347 = tpu.matmul %344, %346, %cst_244 {dimension_numbers = #tpu.dot_dimension_numbers<[1], [0], [0], [1], [0, 0, 1, 1], [], []>} : vector<1x8xbf16>, vector<8x32xbf16>, vector<1x32xf32> -> vector<1x32xf32>
    %348 = arith.addf %343, %347 : vector<1x32xf32>
    %c0_245 = arith.constant 0 : index
    %c0_246 = arith.constant 0 : index
    %349 = vector.load %arg7[%c0_245, %c0_246] : memref<1x32xf32, #tpu.memory_space<vmem>>, vector<1x32xf32>
    %350 = arith.addf %348, %349 : vector<1x32xf32>
    %cst_247 = arith.constant 0.000000e+00 : f32
    %351 = vector.broadcast %cst_247 : f32 to vector<1x32xf32>
    %352 = arith.maximumf %350, %351 : vector<1x32xf32>
    %353 = arith.truncf %352 : vector<1x32xf32> to vector<1x32xbf16>
    %c0_248 = arith.constant 0 : index
    %c0_249 = arith.constant 0 : index
    %354 = vector.load %arg8[%c0_248, %c0_249] : memref<32x16xbf16, #tpu.memory_space<vmem>>, vector<32x16xbf16>
    %cst_250 = arith.constant dense<0.000000e+00> : vector<1x16xf32>
    %355 = tpu.matmul %353, %354, %cst_250 {dimension_numbers = #tpu.dot_dimension_numbers<[1], [0], [0], [1], [0, 0, 1, 1], [], []>} : vector<1x32xbf16>, vector<32x16xbf16>, vector<1x16xf32> -> vector<1x16xf32>
    %c0_251 = arith.constant 0 : index
    %c0_252 = arith.constant 0 : index
    %356 = vector.load %arg9[%c0_251, %c0_252] : memref<1x16xf32, #tpu.memory_space<vmem>>, vector<1x16xf32>
    %357 = arith.addf %355, %356 : vector<1x16xf32>
    %cst_253 = arith.constant 0.000000e+00 : f32
    %358 = vector.broadcast %cst_253 : f32 to vector<1x16xf32>
    %359 = arith.maximumf %357, %358 : vector<1x16xf32>
    %360 = arith.truncf %359 : vector<1x16xf32> to vector<1x16xbf16>
    %c0_254 = arith.constant 0 : index
    %c0_255 = arith.constant 0 : index
    %361 = vector.load %arg10[%c0_254, %c0_255] : memref<16x10xbf16, #tpu.memory_space<vmem>>, vector<16x10xbf16>
    %cst_256 = arith.constant dense<0.000000e+00> : vector<1x10xf32>
    %362 = tpu.matmul %360, %361, %cst_256 {dimension_numbers = #tpu.dot_dimension_numbers<[1], [0], [0], [1], [0, 0, 1, 1], [], []>} : vector<1x16xbf16>, vector<16x10xbf16>, vector<1x10xf32> -> vector<1x10xf32>
    %c0_257 = arith.constant 0 : index
    %c0_258 = arith.constant 0 : index
    %363 = vector.load %arg11[%c0_257, %c0_258] : memref<1x10xf32, #tpu.memory_space<vmem>>, vector<1x10xf32>
    %364 = arith.addf %362, %363 : vector<1x10xf32>
    %c0_259 = arith.constant 0 : index
    %c0_260 = arith.constant 0 : index
    %c0_261 = arith.constant 0 : index
    %365 = vector.load %arg12[%c0_259, %c0_260, %c0_261] : memref<1x1x10xf32, #tpu.memory_space<vmem>>, vector<1x1x10xf32>
    %366 = vector.shape_cast %365 : vector<1x1x10xf32> to vector<1x10xf32>
    %367 = vector.shape_cast %364 : vector<1x10xf32> to vector<1x1x10xf32>
    tpu.vector_store %arg12[%c0_259, %c0_260, %c0_261], %367 {strides = array<i32>} : memref<1x1x10xf32, #tpu.memory_space<vmem>>, vector<1x1x10xf32>,
    return
  }
  func.func @transform_0(%arg0: i32) -> (i32, i32, i32) {
    %c0_i32 = arith.constant 0 : i32
    %c0_i32_0 = arith.constant 0 : i32
    %c0_i32_1 = arith.constant 0 : i32
    return %arg0, %c0_i32, %c0_i32_0 : i32, i32, i32
  }
  func.func @transform_1(%arg0: i32) -> (i32, i32, i32) {
    %c0_i32 = arith.constant 0 : i32
    %c0_i32_0 = arith.constant 0 : i32
    %c0_i32_1 = arith.constant 0 : i32
    %c0_i32_2 = arith.constant 0 : i32
    return %c0_i32, %c0_i32_0, %c0_i32_1 : i32, i32, i32
  }
  func.func @transform_2(%arg0: i32) -> (i32, i32) {
    %c0_i32 = arith.constant 0 : i32
    %c0_i32_0 = arith.constant 0 : i32
    %c0_i32_1 = arith.constant 0 : i32
    return %c0_i32, %c0_i32_0 : i32, i32
  }
  func.func @transform_3(%arg0: i32) -> (i32, i32, i32) {
    %c0_i32 = arith.constant 0 : i32
    %c0_i32_0 = arith.constant 0 : i32
    %c0_i32_1 = arith.constant 0 : i32
    %c0_i32_2 = arith.constant 0 : i32
    return %c0_i32, %c0_i32_0, %c0_i32_1 : i32, i32, i32
  }
  func.func @transform_4(%arg0: i32) -> (i32, i32) {
    %c0_i32 = arith.constant 0 : i32
    %c0_i32_0 = arith.constant 0 : i32
    %c0_i32_1 = arith.constant 0 : i32
    return %c0_i32, %c0_i32_0 : i32, i32
  }
  func.func @transform_5(%arg0: i32) -> (i32, i32, i32) {
    %c0_i32 = arith.constant 0 : i32
    %c0_i32_0 = arith.constant 0 : i32
    %c0_i32_1 = arith.constant 0 : i32
    %c0_i32_2 = arith.constant 0 : i32
    return %c0_i32, %c0_i32_0, %c0_i32_1 : i32, i32, i32
  }
  func.func @transform_6(%arg0: i32) -> (i32, i32) {
    %c0_i32 = arith.constant 0 : i32
    %c0_i32_0 = arith.constant 0 : i32
    %c0_i32_1 = arith.constant 0 : i32
    return %c0_i32, %c0_i32_0 : i32, i32
  }
  func.func @transform_7(%arg0: i32) -> (i32, i32) {
    %c0_i32 = arith.constant 0 : i32
    %c0_i32_0 = arith.constant 0 : i32
    %c0_i32_1 = arith.constant 0 : i32
    return %c0_i32, %c0_i32_0 : i32, i32
  }
  func.func @transform_8(%arg0: i32) -> (i32, i32) {
    %c0_i32 = arith.constant 0 : i32
    %c0_i32_0 = arith.constant 0 : i32
    %c0_i32_1 = arith.constant 0 : i32
    return %c0_i32, %c0_i32_0 : i32, i32
  }
  func.func @transform_9(%arg0: i32) -> (i32, i32) {
    %c0_i32 = arith.constant 0 : i32
    %c0_i32_0 = arith.constant 0 : i32
    %c0_i32_1 = arith.constant 0 : i32
    return %c0_i32, %c0_i32_0 : i32, i32
  }
  func.func @transform_10(%arg0: i32) -> (i32, i32) {
    %c0_i32 = arith.constant 0 : i32
    %c0_i32_0 = arith.constant 0 : i32
    %c0_i32_1 = arith.constant 0 : i32
    return %c0_i32, %c0_i32_0 : i32, i32
  }
  func.func @transform_11(%arg0: i32) -> (i32, i32, i32) {
    %c0_i32 = arith.constant 0 : i32
    %c0_i32_0 = arith.constant 0 : i32
    %c0_i32_1 = arith.constant 0 : i32
    return %arg0, %c0_i32, %c0_i32_0 : i32, i32, i32
  }
}

</mosaic_0001>

<llo_original>
// kernel: esc50_cnn_forward.1
$region0: #{esc50_cnn_forward.1}
  #allocation0 [shape = 'u32[]', space=smem, size = 0x4, offset = 0x4, fixed_abs, tag = 'smem constant byte address 0x4 - core index']
  #allocation1 [shape = 'u32[144,128]{1,0:T(1,128)}', space=vmem, size = 0x12000, scoped, tag = 'internal scratch']
  #allocation2 [shape = 'f32[1,12,8]{2,1,0:T(8,128)}', space=vmem, size = 0x2000, scoped, tag = 'scratch operand']
  %s0 = inlined_call_operand.vmem [shape: f32[2,41,60], index: 0, kind: input, shape index: {}]
  %s1 = inlined_call_operand.vmem [shape: bf16[6,57,8], index: 1, kind: input, shape index: {}]
  %s2 = inlined_call_operand.vmem [shape: f32[1,8], index: 2, kind: input, shape index: {}]
  %s3 = inlined_call_operand.vmem [shape: bf16[3,8,8], index: 3, kind: input, shape index: {}]
  %s4 = inlined_call_operand.vmem [shape: f32[1,8], index: 4, kind: input, shape index: {}]
  %s5 = inlined_call_operand.vmem [shape: bf16[3,8,32], index: 5, kind: input, shape index: {}]
  %s6 = inlined_call_operand.vmem [shape: f32[1,32], index: 6, kind: input, shape index: {}]
  %s7 = inlined_call_operand.vmem [shape: bf16[32,16], index: 7, kind: input, shape index: {}]
  %s8 = inlined_call_operand.vmem [shape: f32[1,16], index: 8, kind: input, shape index: {}]
  %s9 = inlined_call_operand.vmem [shape: bf16[16,10], index: 9, kind: input, shape index: {}]
  %s10 = inlined_call_operand.vmem [shape: f32[1,10], index: 10, kind: input, shape index: {}]
  %s11 = inlined_call_operand.hbm [shape: f32[2,1,10], index: 11, kind: output, shape index: {}]
  %s12 = sld [smem:[#allocation0]]
  $region77: #{esc50_cnn_forward.1} parent=0
    _
  %s14 = ssub.s32 1, %s12
  %s15 = scalar_select 0, %s14, %s12
  $region1: #{esc50_cnn_forward.1} parent=0
    #allocation3 [shape = 'u8[1024]{0}', space=vmem, size = 0x400, scoped, tag = 'output window, operand 0']
    #allocation4 [shape = 's32[2]{0}', space=sflag, size = 0x8, scoped, tag = 'scoped memory for esc50_cnn_forward.1']
    %16 = vsyncpa [#allocation4], 0
    %s17 = scalar_lea.sflag [#allocation4], 1
    %18 = vsyncpa %s17, 0
    loop: start=0, step=1, limit=4
    $region2: #{esc50_cnn_forward.1} parent=1 // loop_pre_header
      _
    $region3: #{esc50_cnn_forward.1} parent=1 // loop_header
      %s20 = sphi 0, %s24
      %p21 = scmp.ge.s32.totalorder %s20, 4
      %s30 = sphi 0, %s32
      %s33 = sphi 0, %s30
      %s34 = sphi 0, %s33
      %s50 = sphi 0, %s34
      %s54 = sphi 0, %s54
      %s56 = sphi 0, %s54
      %s57 = sphi 0, %s56
      %s71 = sphi 0, %s57
      %s75 = sphi 0, %s75
      %s77 = sphi 0, %s75
      %s78 = sphi 0, %s77
      %s92 = sphi 0, %s78
      %s96 = sphi 0, %s96
      %s98 = sphi 0, %s96
      %s99 = sphi 0, %s98
      %s113 = sphi 0, %s99
      %s117 = sphi 0, %s117
      %s119 = sphi 0, %s117
      %s120 = sphi 0, %s119
      %s134 = sphi 0, %s120
      %s138 = sphi 0, %s138
      %s140 = sphi 0, %s138
      %s141 = sphi 0, %s140
      %s155 = sphi 0, %s141
      %s159 = sphi 0, %s159
      %s161 = sphi 0, %s159
      %s162 = sphi 0, %s161
      %s176 = sphi 0, %s162
      %s180 = sphi 0, %s180
      %s182 = sphi 0, %s180
      %s183 = sphi 0, %s182
      %s197 = sphi 0, %s183
      %s201 = sphi 0, %s201
      %s203 = sphi 0, %s201
      %s204 = sphi 0, %s203
      %s218 = sphi 0, %s204
      %s222 = sphi 0, %s222
      %s224 = sphi 0, %s222
      %s225 = sphi 0, %s224
      %s239 = sphi 0, %s225
      %s243 = sphi 0, %s243
      %s245 = sphi 0, %s243
      %s246 = sphi 0, %s245
      %s260 = sphi 0, %s246
      %s266 = sphi 0, %s268
      %s269 = sphi 0, %s266
      %s270 = sphi 0, %s269
      %s286 = sphi 0, %s270
    $region4: #{esc50_cnn_forward.1} parent=1 // loop_header_branch
      %23 = sbr.rel (%p21) target = $region8
    $region5: #{esc50_cnn_forward.1} parent=1 // loop_body
      %s25 = ssub.s32 %s20, 1
      %s26 = ssub.s32 %s20, 2
      %s27 = sadd.s32 %s20, 1
      %s28 = ssub.s32 %s20, %s27
      %p29 = scmp.eq.s32.totalorder %s28, 0
      %s31 = sadd.s32 %s30, 1
      %s32 = scalar_select %p29, %s30, %s31
      %p35 = pneg %p29
      %p36 = scmp.eq.s32.totalorder %s20, 1
      %p37 = por %p35, %p36
      %p38 = scmp.ne.s32.totalorder %s30, %s33
      %p39 = scmp.eq.s32.totalorder %s20, 0
      %p40 = por %p38, %p39
      %p41 = scmp.ne.s32.totalorder %s30, %s33
      %p42 = scmp.eq.s32.totalorder %s25, 1
      %p43 = por %p41, %p42
      %p44 = scmp.ne.s32.totalorder %s33, %s34
      %p45 = scmp.eq.s32.totalorder %s25, 0
      %p46 = por %p44, %p45
      %p47 = scmp.ne.s32.totalorder %s33, %s34
      %p48 = scmp.eq.s32.totalorder %s26, 1
      %p49 = por %p47, %p48
      %p51 = scmp.ne.s32.totalorder %s34, %s50
      %p52 = scmp.eq.s32.totalorder %s26, 0
      %p53 = por %p51, %p52
      %s55 = sadd.s32 %s54, 1
      %p58 = scmp.eq.s32.totalorder %s20, 1
      %p59 = scmp.ne.s32.totalorder %s54, %s56
      %p60 = scmp.eq.s32.totalorder %s20, 0
      %p61 = por %p59, %p60
      %p62 = scmp.ne.s32.totalorder %s54, %s56
      %p63 = scmp.eq.s32.totalorder %s25, 1
      %p64 = por %p62, %p63
      %p65 = scmp.ne.s32.totalorder %s56, %s57
      %p66 = scmp.eq.s32.totalorder %s25, 0
      %p67 = por %p65, %p66
      %p68 = scmp.ne.s32.totalorder %s56, %s57
      %p69 = scmp.eq.s32.totalorder %s26, 1
      %p70 = por %p68, %p69
      %p72 = scmp.ne.s32.totalorder %s57, %s71
      %p73 = scmp.eq.s32.totalorder %s26, 0
      %p74 = por %p72, %p73
      %s76 = sadd.s32 %s75, 1
      %p79 = scmp.eq.s32.totalorder %s20, 1
      %p80 = scmp.ne.s32.totalorder %s75, %s77
      %p81 = scmp.eq.s32.totalorder %s20, 0
      %p82 = por %p80, %p81
      %p83 = scmp.ne.s32.totalorder %s75, %s77
      %p84 = scmp.eq.s32.totalorder %s25, 1
      %p85 = por %p83, %p84
      %p86 = scmp.ne.s32.totalorder %s77, %s78
      %p87 = scmp.eq.s32.totalorder %s25, 0
      %p88 = por %p86, %p87
      %p89 = scmp.ne.s32.totalorder %s77, %s78
      %p90 = scmp.eq.s32.totalorder %s26, 1
      %p91 = por %p89, %p90
      %p93 = scmp.ne.s32.totalorder %s78, %s92
      %p94 = scmp.eq.s32.totalorder %s26, 0
      %p95 = por %p93, %p94
      %s97 = sadd.s32 %s96, 1
      %p100 = scmp.eq.s32.totalorder %s20, 1
      %p101 = scmp.ne.s32.totalorder %s96, %s98
      %p102 = scmp.eq.s32.totalorder %s20, 0
      %p103 = por %p101, %p102
      %p104 = scmp.ne.s32.totalorder %s96, %s98
      %p105 = scmp.eq.s32.totalorder %s25, 1
      %p106 = por %p104, %p105
      %p107 = scmp.ne.s32.totalorder %s98, %s99
      %p108 = scmp.eq.s32.totalorder %s25, 0
      %p109 = por %p107, %p108
      %p110 = scmp.ne.s32.totalorder %s98, %s99
      %p111 = scmp.eq.s32.totalorder %s26, 1
      %p112 = por %p110, %p111
      %p114 = scmp.ne.s32.totalorder %s99, %s113
      %p115 = scmp.eq.s32.totalorder %s26, 0
      %p116 = por %p114, %p115
      %s118 = sadd.s32 %s117, 1
      %p121 = scmp.eq.s32.totalorder %s20, 1
      %p122 = scmp.ne.s32.totalorder %s117, %s119
      %p123 = scmp.eq.s32.totalorder %s20, 0
      %p124 = por %p122, %p123
      %p125 = scmp.ne.s32.totalorder %s117, %s119
      %p126 = scmp.eq.s32.totalorder %s25, 1
      %p127 = por %p125, %p126
      %p128 = scmp.ne.s32.totalorder %s119, %s120
      %p129 = scmp.eq.s32.totalorder %s25, 0
      %p130 = por %p128, %p129
      %p131 = scmp.ne.s32.totalorder %s119, %s120
      %p132 = scmp.eq.s32.totalorder %s26, 1
      %p133 = por %p131, %p132
      %p135 = scmp.ne.s32.totalorder %s120, %s134
      %p136 = scmp.eq.s32.totalorder %s26, 0
      %p137 = por %p135, %p136
      %s139 = sadd.s32 %s138, 1
      %p142 = scmp.eq.s32.totalorder %s20, 1
      %p143 = scmp.ne.s32.totalorder %s138, %s140
      %p144 = scmp.eq.s32.totalorder %s20, 0
      %p145 = por %p143, %p144
      %p146 = scmp.ne.s32.totalorder %s138, %s140
      %p147 = scmp.eq.s32.totalorder %s25, 1
      %p148 = por %p146, %p147
      %p149 = scmp.ne.s32.totalorder %s140, %s141
      %p150 = scmp.eq.s32.totalorder %s25, 0
      %p151 = por %p149, %p150
      %p152 = scmp.ne.s32.totalorder %s140, %s141
      %p153 = scmp.eq.s32.totalorder %s26, 1
      %p154 = por %p152, %p153
      %p156 = scmp.ne.s32.totalorder %s141, %s155
      %p157 = scmp.eq.s32.totalorder %s26, 0
      %p158 = por %p156, %p157
      %s160 = sadd.s32 %s159, 1
      %p163 = scmp.eq.s32.totalorder %s20, 1
      %p164 = scmp.ne.s32.totalorder %s159, %s161
      %p165 = scmp.eq.s32.totalorder %s20, 0
      %p166 = por %p164, %p165
      %p167 = scmp.ne.s32.totalorder %s159, %s161
      %p168 = scmp.eq.s32.totalorder %s25, 1
      %p169 = por %p167, %p168
      %p170 = scmp.ne.s32.totalorder %s161, %s162
      %p171 = scmp.eq.s32.totalorder %s25, 0
      %p172 = por %p170, %p171
      %p173 = scmp.ne.s32.totalorder %s161, %s162
      %p174 = scmp.eq.s32.totalorder %s26, 1
      %p175 = por %p173, %p174
      %p177 = scmp.ne.s32.totalorder %s162, %s176
      %p178 = scmp.eq.s32.totalorder %s26, 0
      %p179 = por %p177, %p178
      %s181 = sadd.s32 %s180, 1
      %p184 = scmp.eq.s32.totalorder %s20, 1
      %p185 = scmp.ne.s32.totalorder %s180, %s182
      %p186 = scmp.eq.s32.totalorder %s20, 0
      %p187 = por %p185, %p186
      %p188 = scmp.ne.s32.totalorder %s180, %s182
      %p189 = scmp.eq.s32.totalorder %s25, 1
      %p190 = por %p188, %p189
      %p191 = scmp.ne.s32.totalorder %s182, %s183
      %p192 = scmp.eq.s32.totalorder %s25, 0
      %p193 = por %p191, %p192
      %p194 = scmp.ne.s32.totalorder %s182, %s183
      %p195 = scmp.eq.s32.totalorder %s26, 1
      %p196 = por %p194, %p195
      %p198 = scmp.ne.s32.totalorder %s183, %s197
      %p199 = scmp.eq.s32.totalorder %s26, 0
      %p200 = por %p198, %p199
      %s202 = sadd.s32 %s201, 1
      %p205 = scmp.eq.s32.totalorder %s20, 1
      %p206 = scmp.ne.s32.totalorder %s201, %s203
      %p207 = scmp.eq.s32.totalorder %s20, 0
      %p208 = por %p206, %p207
      %p209 = scmp.ne.s32.totalorder %s201, %s203
      %p210 = scmp.eq.s32.totalorder %s25, 1
      %p211 = por %p209, %p210
      %p212 = scmp.ne.s32.totalorder %s203, %s204
      %p213 = scmp.eq.s32.totalorder %s25, 0
      %p214 = por %p212, %p213
      %p215 = scmp.ne.s32.totalorder %s203, %s204
      %p216 = scmp.eq.s32.totalorder %s26, 1
      %p217 = por %p215, %p216
      %p219 = scmp.ne.s32.totalorder %s204, %s218
      %p220 = scmp.eq.s32.totalorder %s26, 0
      %p221 = por %p219, %p220
      %s223 = sadd.s32 %s222, 1
      %p226 = scmp.eq.s32.totalorder %s20, 1
      %p227 = scmp.ne.s32.totalorder %s222, %s224
      %p228 = scmp.eq.s32.totalorder %s20, 0
      %p229 = por %p227, %p228
      %p230 = scmp.ne.s32.totalorder %s222, %s224
      %p231 = scmp.eq.s32.totalorder %s25, 1
      %p232 = por %p230, %p231
      %p233 = scmp.ne.s32.totalorder %s224, %s225
      %p234 = scmp.eq.s32.totalorder %s25, 0
      %p235 = por %p233, %p234
      %p236 = scmp.ne.s32.totalorder %s224, %s225
      %p237 = scmp.eq.s32.totalorder %s26, 1
      %p238 = por %p236, %p237
      %p240 = scmp.ne.s32.totalorder %s225, %s239
      %p241 = scmp.eq.s32.totalorder %s26, 0
      %p242 = por %p240, %p241
      %s244 = sadd.s32 %s243, 1
      %p247 = scmp.eq.s32.totalorder %s20, 1
      %p248 = scmp.ne.s32.totalorder %s243, %s245
      %p249 = scmp.eq.s32.totalorder %s20, 0
      %p250 = por %p248, %p249
      %p251 = scmp.ne.s32.totalorder %s243, %s245
      %p252 = scmp.eq.s32.totalorder %s25, 1
      %p253 = por %p251, %p252
      %p254 = scmp.ne.s32.totalorder %s245, %s246
      %p255 = scmp.eq.s32.totalorder %s25, 0
      %p256 = por %p254, %p255
      %p257 = scmp.ne.s32.totalorder %s245, %s246
      %p258 = scmp.eq.s32.totalorder %s26, 1
      %p259 = por %p257, %p258
      %p261 = scmp.ne.s32.totalorder %s246, %s260
      %p262 = scmp.eq.s32.totalorder %s26, 0
      %p263 = por %p261, %p262
      %s264 = ssub.s32 %s20, %s27
      %p265 = scmp.eq.s32.totalorder %s264, 0
      %s267 = sadd.s32 %s266, 1
      %s268 = scalar_select %p265, %s266, %s267
      %p271 = pneg %p265
      %p272 = scmp.eq.s32.totalorder %s20, 1
      %p273 = por %p271, %p272
      %p274 = scmp.ne.s32.totalorder %s266, %s269
      %p275 = scmp.eq.s32.totalorder %s20, 0
      %p276 = por %p274, %p275
      %p277 = scmp.ne.s32.totalorder %s266, %s269
      %p278 = scmp.eq.s32.totalorder %s25, 1
      %p279 = por %p277, %p278
      %p280 = scmp.ne.s32.totalorder %s269, %s270
      %p281 = scmp.eq.s32.totalorder %s25, 0
      %p282 = por %p280, %p281
      %p283 = scmp.ne.s32.totalorder %s269, %s270
      %p284 = scmp.eq.s32.totalorder %s26, 1
      %p285 = por %p283, %p284
      %p287 = scmp.ne.s32.totalorder %s270, %s286
      %p288 = scmp.eq.s32.totalorder %s26, 0
      %p289 = por %p287, %p288
      %p290 = scmp.le.s32.totalorder 1, %s20
      %p291 = scmp.lt.s32.totalorder %s20, 3
      %p292 = pnand %p290, %p291
      %p293 = pneg %p292
      // Predicated region
      $region9: #{esc50_cnn_forward.1} parent=5 // pred_check
        _
      $region10: #{esc50_cnn_forward.1} parent=5 // pred_check_branch
        %295 = sbr.rel (%p292) target = $region12
      $region11: #{esc50_cnn_forward.1} parent=5 // pred_region
        %s296 = ssub.s32 %s20, 1
        // Predicated region
        $region13: #{esc50_cnn_forward.1} parent=11 // pred_check
          %p297 = pneg %p67
        $region14: #{esc50_cnn_forward.1} parent=11 // pred_check_branch
          %299 = sbr.rel (%p297) target = $region16
        $region15: #{esc50_cnn_forward.1} parent=11 // pred_region
          _
        $region16: #{esc50_cnn_forward.1} parent=11 // pred_fallthru
          _
        // Predicated region
        $region17: #{esc50_cnn_forward.1} parent=11 // pred_check
          %p300 = pneg %p88
        $region18: #{esc50_cnn_forward.1} parent=11 // pred_check_branch
          %302 = sbr.rel (%p300) target = $region20
        $region19: #{esc50_cnn_forward.1} parent=11 // pred_region
          _
        $region20: #{esc50_cnn_forward.1} parent=11 // pred_fallthru
          _
        // Predicated region
        $region21: #{esc50_cnn_forward.1} parent=11 // pred_check
          %p303 = pneg %p109
        $region22: #{esc50_cnn_forward.1} parent=11 // pred_check_branch
          %305 = sbr.rel (%p303) target = $region24
        $region23: #{esc50_cnn_forward.1} parent=11 // pred_region
          _
        $region24: #{esc50_cnn_forward.1} parent=11 // pred_fallthru
          _
        // Predicated region
        $region25: #{esc50_cnn_forward.1} parent=11 // pred_check
          %p306 = pneg %p130
        $region26: #{esc50_cnn_forward.1} parent=11 // pred_check_branch
          %308 = sbr.rel (%p306) target = $region28
        $region27: #{esc50_cnn_forward.1} parent=11 // pred_region
          _
        $region28: #{esc50_cnn_forward.1} parent=11 // pred_fallthru
          _
        // Predicated region
        $region29: #{esc50_cnn_forward.1} parent=11 // pred_check
          %p309 = pneg %p151
        $region30: #{esc50_cnn_forward.1} parent=11 // pred_check_branch
          %311 = sbr.rel (%p309) target = $region32
        $region31: #{esc50_cnn_forward.1} parent=11 // pred_region
          _
        $region32: #{esc50_cnn_forward.1} parent=11 // pred_fallthru
          _
        // Predicated region
        $region33: #{esc50_cnn_forward.1} parent=11 // pred_check
          %p312 = pneg %p172
        $region34: #{esc50_cnn_forward.1} parent=11 // pred_check_branch
          %314 = sbr.rel (%p312) target = $region36
        $region35: #{esc50_cnn_forward.1} parent=11 // pred_region
          _
        $region36: #{esc50_cnn_forward.1} parent=11 // pred_fallthru
          _
        // Predicated region
        $region37: #{esc50_cnn_forward.1} parent=11 // pred_check
          %p315 = pneg %p193
        $region38: #{esc50_cnn_forward.1} parent=11 // pred_check_branch
          %317 = sbr.rel (%p315) target = $region40
        $region39: #{esc50_cnn_forward.1} parent=11 // pred_region
          _
        $region40: #{esc50_cnn_forward.1} parent=11 // pred_fallthru
          _
        // Predicated region
        $region41: #{esc50_cnn_forward.1} parent=11 // pred_check
          %p318 = pneg %p214
        $region42: #{esc50_cnn_forward.1} parent=11 // pred_check_branch
          %320 = sbr.rel (%p318) target = $region44
        $region43: #{esc50_cnn_forward.1} parent=11 // pred_region
          _
        $region44: #{esc50_cnn_forward.1} parent=11 // pred_fallthru
          _
        // Predicated region
        $region45: #{esc50_cnn_forward.1} parent=11 // pred_check
          %p321 = pneg %p235
        $region46: #{esc50_cnn_forward.1} parent=11 // pred_check_branch
          %323 = sbr.rel (%p321) target = $region48
        $region47: #{esc50_cnn_forward.1} parent=11 // pred_region
          _
        $region48: #{esc50_cnn_forward.1} parent=11 // pred_fallthru
          _
        // Predicated region
        $region49: #{esc50_cnn_forward.1} parent=11 // pred_check
          %p324 = pneg %p256
        $region50: #{esc50_cnn_forward.1} parent=11 // pred_check_branch
          %326 = sbr.rel (%p324) target = $region52
        $region51: #{esc50_cnn_forward.1} parent=11 // pred_region
          _
        $region52: #{esc50_cnn_forward.1} parent=11 // pred_fallthru
          _
      $region12: #{esc50_cnn_forward.1} parent=5 // pred_fallthru
        _
      %p327 = scmp.lt.s32.totalorder %s20, 2
      // Predicated region
      $region53: #{esc50_cnn_forward.1} parent=5 // pred_check
        %p328 = pneg %p327
      $region54: #{esc50_cnn_forward.1} parent=5 // pred_check_branch
        %330 = sbr.rel (%p328) target = $region56
      $region55: #{esc50_cnn_forward.1} parent=5 // pred_region
        // Predicated region
        $region57: #{esc50_cnn_forward.1} parent=55 // pred_check
          %p331 = pneg %p40
        $region58: #{esc50_cnn_forward.1} parent=55 // pred_check_branch
          %333 = sbr.rel (%p331) target = $region60
        $region59: #{esc50_cnn_forward.1} parent=55 // pred_region
          %p334 = scmp.lt.s32.totalorder %s20, 1
          %s335 = scalar_select %p334, %s20, 1
          %s336 = smul.addr %s335, 6
          %s337 = smul.addr %s336, 8
          %s338 = scalar_lea.vmem %s0, %s337
        $region60: #{esc50_cnn_forward.1} parent=55 // pred_fallthru
          _
      $region56: #{esc50_cnn_forward.1} parent=5 // pred_fallthru
        _
      %p339 = scmp.le.s32.totalorder 1, %s20
      %p340 = scmp.lt.s32.totalorder %s20, 3
      %p341 = pnand %p339, %p340
      %p342 = pneg %p341
      // Predicated region
      $region61: #{esc50_cnn_forward.1} parent=5 // pred_check
        _
      $region62: #{esc50_cnn_forward.1} parent=5 // pred_check_branch
        %344 = sbr.rel (%p341) target = $region64
      $region63: #{esc50_cnn_forward.1} parent=5 // pred_region
        %s345 = ssub.s32 %s20, 1
        %p346 = scmp.lt.s32.totalorder %s25, 1
        %s347 = scalar_select %p346, %s25, 1
        %s348 = smul.addr %s347, 6
        %s349 = smul.addr %s348, 8
        %s350 = scalar_lea.vmem %s0, %s349
        %p351 = pneg %p46
        %p352 = pneg %p43
        %p353 = pneg %p67
        %p354 = pneg %p64
        %p355 = pneg %p88
        %p356 = pneg %p85
        %p357 = pneg %p109
        %p358 = pneg %p106
        %p359 = pneg %p130
        %p360 = pneg %p127
        %p361 = pneg %p151
        %p362 = pneg %p148
        %p363 = pneg %p172
        %p364 = pneg %p169
        %p365 = pneg %p193
        %p366 = pneg %p190
        %p367 = pneg %p214
        %p368 = pneg %p211
        %p369 = pneg %p235
        %p370 = pneg %p232
        %p371 = pneg %p256
        %p372 = pneg %p253
        %p373 = pneg %p282
        %p374 = pneg %p279
        %s375 = sand.u32 %s269, 1
        %s376 = scalar_lea.sflag [#allocation4], %s375
        %s377 = sand.u32 %s269, 1
        %s378 = scalar_lea.vmem [#allocation3], %s377
        %p379 = scmp.lt.s32.totalorder %s25, 1
        %s380 = scalar_select %p379, %s25, 1
        %s381 = smul.addr %s380, 6
        %s382 = smul.addr %s381, 8
        %s383 = scalar_lea.vmem %s0, %s382
        %v385 = vld [vmem:[%s383] sm:$0xff]
        %v386 = vld [vmem:[%s383 + $0x8] sm:$0xff]
        %v387 = vld [vmem:[%s383 + $0x10] sm:$0xff]
        %v388 = vld [vmem:[%s383 + $0x18] sm:$0xff]
        %v389 = vld [vmem:[%s383 + $0x20] sm:$0xf]
        %v390 = vpack.c.bf16 %v386, %v385
        %v391 = vpack.c.bf16 %v388, %v387
        %v392 = vpack.c.bf16 %v389, %v389
        %v393 = vld [vmem:[%s1] sm:$0xf]
        %v394 = vld [vmem:[%s1 + $0x4] sm:$0xf]
        %v395 = vld [vmem:[%s1 + $0x8] sm:$0xf]
        %v396 = vld [vmem:[%s1 + $0xc] sm:$0xf]
        %v397 = vld [vmem:[%s1 + $0x10] sm:$0xf]
        %v398 = vld [vmem:[%s1 + $0x14] sm:$0xf]
        %v399 = vld [vmem:[%s1 + $0x18] sm:$0xf]
        %v400 = vld [vmem:[%s1 + $0x1c] sm:$0x1]
        %v401 = vld [vmem:[%s383 + $0x1] sm:$0xff]
        %v402 = vld [vmem:[%s383 + $0x9] sm:$0xff]
        %v403 = vld [vmem:[%s383 + $0x11] sm:$0xff]
        %v404 = vld [vmem:[%s383 + $0x19] sm:$0xff]
        %v405 = vld [vmem:[%s383 + $0x21] sm:$0xf]
        %v406 = vpack.c.bf16 %v402, %v401
        %v407 = vpack.c.bf16 %v404, %v403
        %v408 = vpack.c.bf16 %v405, %v405
        %s409 = scalar_lea.vmem %s1, 32
        %v410 = vld [vmem:[%s409] sm:$0xf]
        %v411 = vld [vmem:[%s409 + $0x4] sm:$0xf]
        %v412 = vld [vmem:[%s409 + $0x8] sm:$0xf]
        %v413 = vld [vmem:[%s409 + $0xc] sm:$0xf]
        %v414 = vld [vmem:[%s409 + $0x10] sm:$0xf]
        %v415 = vld [vmem:[%s409 + $0x14] sm:$0xf]
        %v416 = vld [vmem:[%s409 + $0x18] sm:$0xf]
        %v417 = vld [vmem:[%s409 + $0x1c] sm:$0x1]
        %v426 = vunpack.c.l.b16 %v410
        %v427 = vunpack.c.l.b16 %v411
        %v428 = vunpack.c.l.b16 %v412
        %v429 = vunpack.c.l.b16 %v413
        %v430 = vunpack.c.l.b16 %v414
        %v431 = vunpack.c.l.b16 %v415
        %v432 = vunpack.c.l.b16 %v416
        %v433 = vunpack.c.l.b16 %v417
        %v434 = vpack.c.b16 %v427, %v426
        %v435 = vpack.c.b16 %v429, %v428
        %v436 = vpack.c.b16 %v431, %v430
        %v437 = vpack.c.b16 %v433, %v432
        %vm441 = vcmask 465920
        %v443 = vsel %vm441, %v406, 0
        %v446 = vsel %vm441, %v407, 0
        %v449 = vsel %vm441, %v408, 0
        %vm451 = vcmask 1043456
        %vm452 = vcmask 1044480
        %v453 = vsel %vm451, 4294967295, 65535
        %v454 = vsel %vm452, %v453, 0
        %v456 = vand.u32 %v437, %v454
        %458 = vmatprep.subr.bf16.mxu0 0
        %459 = vmatpush1.bf16.msra.mxu0 %v434
        %460 = vmatprep.subr.bf16.mxu0 0
        %461 = vmatpush1.bf16.msra.mxu0 %v435
        %462 = vmatprep.subr.bf16.mxu0 0
        %463 = vmatpush1.bf16.msra.mxu0 %v436
        %464 = vmatprep.subr.bf16.mxu0 0
        %465 = vmatpush1.bf16.msra.mxu0 %v456
        %466 = vmatprep.subr.bf16.mxu0 0
        %467 = vmatpush1.bf16.msra.mxu0 0
        %468 = vmatprep.subr.bf16.mxu0 0
        %469 = vmatpush1.bf16.msra.mxu0 0
        %470 = vmatprep.subr.bf16.mxu0 0
        %471 = vmatpush1.bf16.msra.mxu0 0
        %472 = vmatprep.subr.bf16.mxu0 0
        %473 = vmatpush1.bf16.msra.mxu0 0
        %474 = vmatprep.subr.bf16.mxu0 0
        %475 = vmatpush1.bf16.msra.mxu0 0
        %476 = vmatprep.subr.bf16.mxu0 0
        %477 = vmatpush1.bf16.msra.mxu0 0
        %478 = vmatprep.subr.bf16.mxu0 0
        %479 = vmatpush1.bf16.msra.mxu0 0
        %480 = vmatprep.subr.bf16.mxu0 0
        %481 = vmatpush1.bf16.msra.mxu0 0
        %482 = vmatprep.subr.bf16.mxu0 0
        %483 = vmatpush1.bf16.msra.mxu0 0
        %484 = vmatprep.subr.bf16.mxu0 0
        %485 = vmatpush1.bf16.msra.mxu0 0
        %486 = vmatprep.subr.bf16.mxu0 0
        %487 = vmatpush1.bf16.msra.mxu0 0
        %488 = vmatprep.subr.bf16.mxu0 0
        %489 = vmatpush1.bf16.msra.mxu0 0
        %490 = vmatprep.mubr.bf16.mxu0 0
        %491 = vmatmul.mubr.bf16.gmra.mrb[0].mxu0 %v443
        %v492 = vpop.f32.mrb[0].mxu0
        %v493 = vadd.f32 0.0, %v492
        %v494 = vpop.f32.mrb[0].mxu0
        %v495 = vpop.f32.mrb[0].mxu0
        %v496 = vadd.f32 0.0, %v495
        %v497 = vpop.f32.mrb[0].mxu0
        %498 = vmatprep.mubr.bf16.mxu0 0
        %499 = vmatmul.mubr.bf16.gmra.mrb[0].mxu0 %v446
        %v500 = vpop.f32.mrb[0].mxu0
        %v501 = vadd.f32 0.0, %v500
        %v502 = vpop.f32.mrb[0].mxu0
        %v503 = vpop.f32.mrb[0].mxu0
        %v504 = vadd.f32 0.0, %v503
        %v505 = vpop.f32.mrb[0].mxu0
        %506 = vmatprep.mubr.bf16.mxu0 0
        %507 = vmatmul.mubr.bf16.gmra.mrb[0].mxu0 %v449
        %v508 = vpop.f32.mrb[0].mxu0
        %v509 = vadd.f32 0.0, %v508
        %v510 = vpop.f32.mrb[0].mxu0
        %v511 = vpop.f32.mrb[0].mxu0
        %v512 = vpop.f32.mrb[0].mxu0
        %513 = vdwg.mxu0
        %v522 = vunpack.c.l.b16 %v393
        %v523 = vunpack.c.l.b16 %v394
        %v524 = vunpack.c.l.b16 %v395
        %v525 = vunpack.c.l.b16 %v396
        %v526 = vunpack.c.l.b16 %v397
        %v527 = vunpack.c.l.b16 %v398
        %v528 = vunpack.c.l.b16 %v399
        %v529 = vunpack.c.l.b16 %v400
        %v530 = vpack.c.b16 %v523, %v522
        %v531 = vpack.c.b16 %v525, %v524
        %v532 = vpack.c.b16 %v527, %v526
        %v533 = vpack.c.b16 %v529, %v528
        %v538 = vsel %vm441, %v390, 0
        %v541 = vsel %vm441, %v391, 0
        %v544 = vsel %vm441, %v392, 0
        %v547 = vand.u32 %v533, %v454
        %549 = vmatprep.subr.bf16.mxu0 0
        %550 = vmatpush1.bf16.msra.mxu0 %v530
        %551 = vmatprep.subr.bf16.mxu0 0
        %552 = vmatpush1.bf16.msra.mxu0 %v531
        %553 = vmatprep.subr.bf16.mxu0 0
        %554 = vmatpush1.bf16.msra.mxu0 %v532
        %555 = vmatprep.subr.bf16.mxu0 0
        %556 = vmatpush1.bf16.msra.mxu0 %v547
        %557 = vmatprep.subr.bf16.mxu0 0
        %558 = vmatpush1.bf16.msra.mxu0 0
        %559 = vmatprep.subr.bf16.mxu0 0
        %560 = vmatpush1.bf16.msra.mxu0 0
        %561 = vmatprep.subr.bf16.mxu0 0
        %562 = vmatpush1.bf16.msra.mxu0 0
        %563 = vmatprep.subr.bf16.mxu0 0
        %564 = vmatpush1.bf16.msra.mxu0 0
        %565 = vmatprep.subr.bf16.mxu0 0
        %566 = vmatpush1.bf16.msra.mxu0 0
        %567 = vmatprep.subr.bf16.mxu0 0
        %568 = vmatpush1.bf16.msra.mxu0 0
        %569 = vmatprep.subr.bf16.mxu0 0
        %570 = vmatpush1.bf16.msra.mxu0 0
        %571 = vmatprep.subr.bf16.mxu0 0
        %572 = vmatpush1.bf16.msra.mxu0 0
        %573 = vmatprep.subr.bf16.mxu0 0
        %574 = vmatpush1.bf16.msra.mxu0 0
        %575 = vmatprep.subr.bf16.mxu0 0
        %576 = vmatpush1.bf16.msra.mxu0 0
        %577 = vmatprep.subr.bf16.mxu0 0
        %578 = vmatpush1.bf16.msra.mxu0 0
        %579 = vmatprep.subr.bf16.mxu0 0
        %580 = vmatpush1.bf16.msra.mxu0 0
        %581 = vmatprep.mubr.bf16.mxu0 0
        %582 = vmatmul.mubr.bf16.gmra.mrb[0].mxu0 %v538
        %v583 = vpop.f32.mrb[0].mxu0
        %v584 = vadd.f32 %v493, %v583
        %v585 = vpop.f32.mrb[0].mxu0
        %v586 = vpop.f32.mrb[0].mxu0
        %v587 = vadd.f32 %v496, %v586
        %v588 = vpop.f32.mrb[0].mxu0
        %589 = vmatprep.mubr.bf16.mxu0 0
        %590 = vmatmul.mubr.bf16.gmra.mrb[0].mxu0 %v541
        %v591 = vpop.f32.mrb[0].mxu0
        %v592 = vadd.f32 %v501, %v591
        %v593 = vpop.f32.mrb[0].mxu0
        %v594 = vpop.f32.mrb[0].mxu0
        %v595 = vadd.f32 %v504, %v594
        %v596 = vpop.f32.mrb[0].mxu0
        %597 = vmatprep.mubr.bf16.mxu0 0
        %598 = vmatmul.mubr.bf16.gmra.mrb[0].mxu0 %v544
        %v599 = vpop.f32.mrb[0].mxu0
        %v600 = vadd.f32 %v509, %v599
        %v601 = vpop.f32.mrb[0].mxu0
        %v602 = vpop.f32.mrb[0].mxu0
        %v603 = vpop.f32.mrb[0].mxu0
        %604 = vdwg.mxu0
        %v605 = vld [vmem:[%s383 + $0x2] sm:$0xff]
        %v606 = vld [vmem:[%s383 + $0xa] sm:$0xff]
        %v607 = vld [vmem:[%s383 + $0x12] sm:$0xff]
        %v608 = vld [vmem:[%s383 + $0x1a] sm:$0xff]
        %v609 = vld [vmem:[%s383 + $0x22] sm:$0xf]
        %v610 = vpack.c.bf16 %v606, %v605
        %v611 = vpack.c.bf16 %v608, %v607
        %v612 = vpack.c.bf16 %v609, %v609
        %s613 = scalar_lea.vmem %s1, 64
        %v614 = vld [vmem:[%s613] sm:$0xf]
        %v615 = vld [vmem:[%s613 + $0x4] sm:$0xf]
        %v616 = vld [vmem:[%s613 + $0x8] sm:$0xf]
        %v617 = vld [vmem:[%s613 + $0xc] sm:$0xf]
        %v618 = vld [vmem:[%s613 + $0x10] sm:$0xf]
        %v619 = vld [vmem:[%s613 + $0x14] sm:$0xf]
        %v620 = vld [vmem:[%s613 + $0x18] sm:$0xf]
        %v621 = vld [vmem:[%s613 + $0x1c] sm:$0x1]
        %v630 = vunpack.c.l.b16 %v614
        %v631 = vunpack.c.l.b16 %v615
        %v632 = vunpack.c.l.b16 %v616
        %v633 = vunpack.c.l.b16 %v617
        %v634 = vunpack.c.l.b16 %v618
        %v635 = vunpack.c.l.b16 %v619
        %v636 = vunpack.c.l.b16 %v620
        %v637 = vunpack.c.l.b16 %v621
        %v638 = vpack.c.b16 %v631, %v630
        %v639 = vpack.c.b16 %v633, %v632
        %v640 = vpack.c.b16 %v635, %v634
        %v641 = vpack.c.b16 %v637, %v636
        %v646 = vsel %vm441, %v610, 0
        %v649 = vsel %vm441, %v611, 0
        %v652 = vsel %vm441, %v612, 0
        %v655 = vand.u32 %v641, %v454
        %657 = vmatprep.subr.bf16.mxu0 0
        %658 = vmatpush1.bf16.msra.mxu0 %v638
        %659 = vmatprep.subr.bf16.mxu0 0
        %660 = vmatpush1.bf16.msra.mxu0 %v639
        %661 = vmatprep.subr.bf16.mxu0 0
        %662 = vmatpush1.bf16.msra.mxu0 %v640
        %663 = vmatprep.subr.bf16.mxu0 0
        %664 = vmatpush1.bf16.msra.mxu0 %v655
        %665 = vmatprep.subr.bf16.mxu0 0
        %666 = vmatpush1.bf16.msra.mxu0 0
        %667 = vmatprep.subr.bf16.mxu0 0
        %668 = vmatpush1.bf16.msra.mxu0 0
        %669 = vmatprep.subr.bf16.mxu0 0
        %670 = vmatpush1.bf16.msra.mxu0 0
        %671 = vmatprep.subr.bf16.mxu0 0
        %672 = vmatpush1.bf16.msra.mxu0 0
        %673 = vmatprep.subr.bf16.mxu0 0
        %674 = vmatpush1.bf16.msra.mxu0 0
        %675 = vmatprep.subr.bf16.mxu0 0
        %676 = vmatpush1.bf16.msra.mxu0 0
        %677 = vmatprep.subr.bf16.mxu0 0
        %678 = vmatpush1.bf16.msra.mxu0 0
        %679 = vmatprep.subr.bf16.mxu0 0
        %680 = vmatpush1.bf16.msra.mxu0 0
        %681 = vmatprep.subr.bf16.mxu0 0
        %682 = vmatpush1.bf16.msra.mxu0 0
        %683 = vmatprep.subr.bf16.mxu0 0
        %684 = vmatpush1.bf16.msra.mxu0 0
        %685 = vmatprep.subr.bf16.mxu0 0
        %686 = vmatpush1.bf16.msra.mxu0 0
        %687 = vmatprep.subr.bf16.mxu0 0
        %688 = vmatpush1.bf16.msra.mxu0 0
        %689 = vmatprep.mubr.bf16.mxu0 0
        %690 = vmatmul.mubr.bf16.gmra.mrb[0].mxu0 %v646
        %v691 = vpop.f32.mrb[0].mxu0
        %v692 = vadd.f32 0.0, %v691
        %v693 = vpop.f32.mrb[0].mxu0
        %v694 = vpop.f32.mrb[0].mxu0
        %v695 = vadd.f32 0.0, %v694
        %v696 = vpop.f32.mrb[0].mxu0
        %697 = vmatprep.mubr.bf16.mxu0 0
        %698 = vmatmul.mubr.bf16.gmra.mrb[0].mxu0 %v649
        %v699 = vpop.f32.mrb[0].mxu0
        %v700 = vadd.f32 0.0, %v699
        %v701 = vpop.f32.mrb[0].mxu0
        %v702 = vpop.f32.mrb[0].mxu0
        %v703 = vadd.f32 0.0, %v702
        %v704 = vpop.f32.mrb[0].mxu0
        %705 = vmatprep.mubr.bf16.mxu0 0
        %706 = vmatmul.mubr.bf16.gmra.mrb[0].mxu0 %v652
        %v707 = vpop.f32.mrb[0].mxu0
        %v708 = vadd.f32 0.0, %v707
        %v709 = vpop.f32.mrb[0].mxu0
        %v710 = vpop.f32.mrb[0].mxu0
        %v711 = vpop.f32.mrb[0].mxu0
        %712 = vdwg.mxu0
        %v713 = vadd.f32 %v584, %v692
        %v714 = vadd.f32 %v587, %v695
        %v715 = vadd.f32 %v592, %v700
        %v716 = vadd.f32 %v595, %v703
        %v717 = vadd.f32 %v600, %v708
        %v718 = vld [vmem:[%s383 + $0x3] sm:$0xff]
        %v719 = vld [vmem:[%s383 + $0xb] sm:$0xff]
        %v720 = vld [vmem:[%s383 + $0x13] sm:$0xff]
        %v721 = vld [vmem:[%s383 + $0x1b] sm:$0xff]
        %v722 = vld [vmem:[%s383 + $0x23] sm:$0xf]
        %v723 = vpack.c.bf16 %v719, %v718
        %v724 = vpack.c.bf16 %v721, %v720
        %v725 = vpack.c.bf16 %v722, %v722
        %s726 = scalar_lea.vmem %s1, 96
        %v727 = vld [vmem:[%s726] sm:$0xf]
        %v728 = vld [vmem:[%s726 + $0x4] sm:$0xf]
        %v729 = vld [vmem:[%s726 + $0x8] sm:$0xf]
        %v730 = vld [vmem:[%s726 + $0xc] sm:$0xf]
        %v731 = vld [vmem:[%s726 + $0x10] sm:$0xf]
        %v732 = vld [vmem:[%s726 + $0x14] sm:$0xf]
        %v733 = vld [vmem:[%s726 + $0x18] sm:$0xf]
        %v734 = vld [vmem:[%s726 + $0x1c] sm:$0x1]
        %v743 = vunpack.c.l.b16 %v727
        %v744 = vunpack.c.l.b16 %v728
        %v745 = vunpack.c.l.b16 %v729
        %v746 = vunpack.c.l.b16 %v730
        %v747 = vunpack.c.l.b16 %v731
        %v748 = vunpack.c.l.b16 %v732
        %v749 = vunpack.c.l.b16 %v733
        %v750 = vunpack.c.l.b16 %v734
        %v751 = vpack.c.b16 %v744, %v743
        %v752 = vpack.c.b16 %v746, %v745
        %v753 = vpack.c.b16 %v748, %v747
        %v754 = vpack.c.b16 %v750, %v749
        %v759 = vsel %vm441, %v723, 0
        %v762 = vsel %vm441, %v724, 0
        %v765 = vsel %vm441, %v725, 0
        %v768 = vand.u32 %v754, %v454
        %770 = vmatprep.subr.bf16.mxu0 0
        %771 = vmatpush1.bf16.msra.mxu0 %v751
        %772 = vmatprep.subr.bf16.mxu0 0
        %773 = vmatpush1.bf16.msra.mxu0 %v752
        %774 = vmatprep.subr.bf16.mxu0 0
        %775 = vmatpush1.bf16.msra.mxu0 %v753
        %776 = vmatprep.subr.bf16.mxu0 0
        %777 = vmatpush1.bf16.msra.mxu0 %v768
        %778 = vmatprep.subr.bf16.mxu0 0
        %779 = vmatpush1.bf16.msra.mxu0 0
        %780 = vmatprep.subr.bf16.mxu0 0
        %781 = vmatpush1.bf16.msra.mxu0 0
        %782 = vmatprep.subr.bf16.mxu0 0
        %783 = vmatpush1.bf16.msra.mxu0 0
        %784 = vmatprep.subr.bf16.mxu0 0
        %785 = vmatpush1.bf16.msra.mxu0 0
        %786 = vmatprep.subr.bf16.mxu0 0
        %787 = vmatpush1.bf16.msra.mxu0 0
        %788 = vmatprep.subr.bf16.mxu0 0
        %789 = vmatpush1.bf16.msra.mxu0 0
        %790 = vmatprep.subr.bf16.mxu0 0
        %791 = vmatpush1.bf16.msra.mxu0 0
        %792 = vmatprep.subr.bf16.mxu0 0
        %793 = vmatpush1.bf16.msra.mxu0 0
        %794 = vmatprep.subr.bf16.mxu0 0
        %795 = vmatpush1.bf16.msra.mxu0 0
        %796 = vmatprep.subr.bf16.mxu0 0
        %797 = vmatpush1.bf16.msra.mxu0 0
        %798 = vmatprep.subr.bf16.mxu0 0
        %799 = vmatpush1.bf16.msra.mxu0 0
        %800 = vmatprep.subr.bf16.mxu0 0
        %801 = vmatpush1.bf16.msra.mxu0 0
        %802 = vmatprep.mubr.bf16.mxu0 0
        %803 = vmatmul.mubr.bf16.gmra.mrb[0].mxu0 %v759
        %v804 = vpop.f32.mrb[0].mxu0
        %v805 = vadd.f32 0.0, %v804
        %v806 = vpop.f32.mrb[0].mxu0
        %v807 = vpop.f32.mrb[0].mxu0
        %v808 = vadd.f32 0.0, %v807
        %v809 = vpop.f32.mrb[0].mxu0
        %810 = vmatprep.mubr.bf16.mxu0 0
        %811 = vmatmul.mubr.bf16.gmra.mrb[0].mxu0 %v762
        %v812 = vpop.f32.mrb[0].mxu0
        %v813 = vadd.f32 0.0, %v812
        %v814 = vpop.f32.mrb[0].mxu0
        %v815 = vpop.f32.mrb[0].mxu0
        %v816 = vadd.f32 0.0, %v815
        %v817 = vpop.f32.mrb[0].mxu0
        %818 = vmatprep.mubr.bf16.mxu0 0
        %819 = vmatmul.mubr.bf16.gmra.mrb[0].mxu0 %v765
        %v820 = vpop.f32.mrb[0].mxu0
        %v821 = vadd.f32 0.0, %v820
        %v822 = vpop.f32.mrb[0].mxu0
        %v823 = vpop.f32.mrb[0].mxu0
        %v824 = vpop.f32.mrb[0].mxu0
        %825 = vdwg.mxu0
        %v826 = vadd.f32 %v713, %v805
        %v827 = vadd.f32 %v714, %v808
        %v828 = vadd.f32 %v715, %v813
        %v829 = vadd.f32 %v716, %v816
        %v830 = vadd.f32 %v717, %v821
        %v831 = vld [vmem:[%s383 + $0x4] sm:$0xff]
        %v832 = vld [vmem:[%s383 + $0xc] sm:$0xff]
        %v833 = vld [vmem:[%s383 + $0x14] sm:$0xff]
        %v834 = vld [vmem:[%s383 + $0x1c] sm:$0xff]
        %v835 = vld [vmem:[%s383 + $0x24] sm:$0xf]
        %v836 = vpack.c.bf16 %v832, %v831
        %v837 = vpack.c.bf16 %v834, %v833
        %v838 = vpack.c.bf16 %v835, %v835
        %s839 = scalar_lea.vmem %s1, 128
        %v840 = vld [vmem:[%s839] sm:$0xf]
        %v841 = vld [vmem:[%s839 + $0x4] sm:$0xf]
        %v842 = vld [vmem:[%s839 + $0x8] sm:$0xf]
        %v843 = vld [vmem:[%s839 + $0xc] sm:$0xf]
        %v844 = vld [vmem:[%s839 + $0x10] sm:$0xf]
        %v845 = vld [vmem:[%s839 + $0x14] sm:$0xf]
        %v846 = vld [vmem:[%s839 + $0x18] sm:$0xf]
        %v847 = vld [vmem:[%s839 + $0x1c] sm:$0x1]
        %v856 = vunpack.c.l.b16 %v840
        %v857 = vunpack.c.l.b16 %v841
        %v858 = vunpack.c.l.b16 %v842
        %v859 = vunpack.c.l.b16 %v843
        %v860 = vunpack.c.l.b16 %v844
        %v861 = vunpack.c.l.b16 %v845
        %v862 = vunpack.c.l.b16 %v846
        %v863 = vunpack.c.l.b16 %v847
        %v864 = vpack.c.b16 %v857, %v856
        %v865 = vpack.c.b16 %v859, %v858
        %v866 = vpack.c.b16 %v861, %v860
        %v867 = vpack.c.b16 %v863, %v862
        %v872 = vsel %vm441, %v836, 0
        %v875 = vsel %vm441, %v837, 0
        %v878 = vsel %vm441, %v838, 0
        %v881 = vand.u32 %v867, %v454
        %883 = vmatprep.subr.bf16.mxu0 0
        %884 = vmatpush1.bf16.msra.mxu0 %v864
        %885 = vmatprep.subr.bf16.mxu0 0
        %886 = vmatpush1.bf16.msra.mxu0 %v865
        %887 = vmatprep.subr.bf16.mxu0 0
        %888 = vmatpush1.bf16.msra.mxu0 %v866
        %889 = vmatprep.subr.bf16.mxu0 0
        %890 = vmatpush1.bf16.msra.mxu0 %v881
        %891 = vmatprep.subr.bf16.mxu0 0
        %892 = vmatpush1.bf16.msra.mxu0 0
        %893 = vmatprep.subr.bf16.mxu0 0
        %894 = vmatpush1.bf16.msra.mxu0 0
        %895 = vmatprep.subr.bf16.mxu0 0
        %896 = vmatpush1.bf16.msra.mxu0 0
        %897 = vmatprep.subr.bf16.mxu0 0
        %898 = vmatpush1.bf16.msra.mxu0 0
        %899 = vmatprep.subr.bf16.mxu0 0
        %900 = vmatpush1.bf16.msra.mxu0 0
        %901 = vmatprep.subr.bf16.mxu0 0
        %902 = vmatpush1.bf16.msra.mxu0 0
        %903 = vmatprep.subr.bf16.mxu0 0
        %904 = vmatpush1.bf16.msra.mxu0 0
        %905 = vmatprep.subr.bf16.mxu0 0
        %906 = vmatpush1.bf16.msra.mxu0 0
        %907 = vmatprep.subr.bf16.mxu0 0
        %908 = vmatpush1.bf16.msra.mxu0 0
        %909 = vmatprep.subr.bf16.mxu0 0
        %910 = vmatpush1.bf16.msra.mxu0 0
        %911 = vmatprep.subr.bf16.mxu0 0
        %912 = vmatpush1.bf16.msra.mxu0 0
        %913 = vmatprep.subr.bf16.mxu0 0
        %914 = vmatpush1.bf16.msra.mxu0 0
        %915 = vmatprep.mubr.bf16.mxu0 0
        %916 = vmatmul.mubr.bf16.gmra.mrb[0].mxu0 %v872
        %v917 = vpop.f32.mrb[0].mxu0
        %v918 = vadd.f32 0.0, %v917
        %v919 = vpop.f32.mrb[0].mxu0
        %v920 = vpop.f32.mrb[0].mxu0
        %v921 = vadd.f32 0.0, %v920
        %v922 = vpop.f32.mrb[0].mxu0
        %923 = vmatprep.mubr.bf16.mxu0 0
        %924 = vmatmul.mubr.bf16.gmra.mrb[0].mxu0 %v875
        %v925 = vpop.f32.mrb[0].mxu0
        %v926 = vadd.f32 0.0, %v925
        %v927 = vpop.f32.mrb[0].mxu0
        %v928 = vpop.f32.mrb[0].mxu0
        %v929 = vadd.f32 0.0, %v928
        %v930 = vpop.f32.mrb[0].mxu0
        %931 = vmatprep.mubr.bf16.mxu0 0
        %932 = vmatmul.mubr.bf16.gmra.mrb[0].mxu0 %v878
        %v933 = vpop.f32.mrb[0].mxu0
        %v934 = vadd.f32 0.0, %v933
        %v935 = vpop.f32.mrb[0].mxu0
        %v936 = vpop.f32.mrb[0].mxu0
        %v937 = vpop.f32.mrb[0].mxu0
        %938 = vdwg.mxu0
        %v939 = vadd.f32 %v826, %v918
        %v940 = vadd.f32 %v827, %v921
        %v941 = vadd.f32 %v828, %v926
        %v942 = vadd.f32 %v829, %v929
        %v943 = vadd.f32 %v830, %v934
        %v944 = vld [vmem:[%s383 + $0x5] sm:$0xff]
        %v945 = vld [vmem:[%s383 + $0xd] sm:$0xff]
        %v946 = vld [vmem:[%s383 + $0x15] sm:$0xff]
        %v947 = vld [vmem:[%s383 + $0x1d] sm:$0xff]
        %v948 = vld [vmem:[%s383 + $0x25] sm:$0xf]
        %v949 = vpack.c.bf16 %v945, %v944
        %v950 = vpack.c.bf16 %v947, %v946
        %v951 = vpack.c.bf16 %v948, %v948
        %s952 = scalar_lea.vmem %s1, 160
        %v953 = vld [vmem:[%s952] sm:$0xf]
        %v954 = vld [vmem:[%s952 + $0x4] sm:$0xf]
        %v955 = vld [vmem:[%s952 + $0x8] sm:$0xf]
        %v956 = vld [vmem:[%s952 + $0xc] sm:$0xf]
        %v957 = vld [vmem:[%s952 + $0x10] sm:$0xf]
        %v958 = vld [vmem:[%s952 + $0x14] sm:$0xf]
        %v959 = vld [vmem:[%s952 + $0x18] sm:$0xf]
        %v960 = vld [vmem:[%s952 + $0x1c] sm:$0x1]
        %v969 = vunpack.c.l.b16 %v953
        %v970 = vunpack.c.l.b16 %v954
        %v971 = vunpack.c.l.b16 %v955
        %v972 = vunpack.c.l.b16 %v956
        %v973 = vunpack.c.l.b16 %v957
        %v974 = vunpack.c.l.b16 %v958
        %v975 = vunpack.c.l.b16 %v959
        %v976 = vunpack.c.l.b16 %v960
        %v977 = vpack.c.b16 %v970, %v969
        %v978 = vpack.c.b16 %v972, %v971
        %v979 = vpack.c.b16 %v974, %v973
        %v980 = vpack.c.b16 %v976, %v975
        %v985 = vsel %vm441, %v949, 0
        %v988 = vsel %vm441, %v950, 0
        %v991 = vsel %vm441, %v951, 0
        %v994 = vand.u32 %v980, %v454
        %996 = vmatprep.subr.bf16.mxu0 0
        %997 = vmatpush1.bf16.msra.mxu0 %v977
        %998 = vmatprep.subr.bf16.mxu0 0
        %999 = vmatpush1.bf16.msra.mxu0 %v978
        %1000 = vmatprep.subr.bf16.mxu0 0
        %1001 = vmatpush1.bf16.msra.mxu0 %v979
        %1002 = vmatprep.subr.bf16.mxu0 0
        %1003 = vmatpush1.bf16.msra.mxu0 %v994
        %1004 = vmatprep.subr.bf16.mxu0 0
        %1005 = vmatpush1.bf16.msra.mxu0 0
        %1006 = vmatprep.subr.bf16.mxu0 0
        %1007 = vmatpush1.bf16.msra.mxu0 0
        %1008 = vmatprep.subr.bf16.mxu0 0
        %1009 = vmatpush1.bf16.msra.mxu0 0
        %1010 = vmatprep.subr.bf16.mxu0 0
        %1011 = vmatpush1.bf16.msra.mxu0 0
        %1012 = vmatprep.subr.bf16.mxu0 0
        %1013 = vmatpush1.bf16.msra.mxu0 0
        %1014 = vmatprep.subr.bf16.mxu0 0
        %1015 = vmatpush1.bf16.msra.mxu0 0
        %1016 = vmatprep.subr.bf16.mxu0 0
        %1017 = vmatpush1.bf16.msra.mxu0 0
        %1018 = vmatprep.subr.bf16.mxu0 0
        %1019 = vmatpush1.bf16.msra.mxu0 0
        %1020 = vmatprep.subr.bf16.mxu0 0
        %1021 = vmatpush1.bf16.msra.mxu0 0
        %1022 = vmatprep.subr.bf16.mxu0 0
        %1023 = vmatpush1.bf16.msra.mxu0 0
        %1024 = vmatprep.subr.bf16.mxu0 0
        %1025 = vmatpush1.bf16.msra.mxu0 0
        %1026 = vmatprep.subr.bf16.mxu0 0
        %1027 = vmatpush1.bf16.msra.mxu0 0
        %1028 = vmatprep.mubr.bf16.mxu0 0
        %1029 = vmatmul.mubr.bf16.gmra.mrb[0].mxu0 %v985
        %v1030 = vpop.f32.mrb[0].mxu0
        %v1031 = vadd.f32 0.0, %v1030
        %v1032 = vpop.f32.mrb[0].mxu0
        %v1033 = vpop.f32.mrb[0].mxu0
        %v1034 = vadd.f32 0.0, %v1033
        %v1035 = vpop.f32.mrb[0].mxu0
        %1036 = vmatprep.mubr.bf16.mxu0 0
        %1037 = vmatmul.mubr.bf16.gmra.mrb[0].mxu0 %v988
        %v1038 = vpop.f32.mrb[0].mxu0
        %v1039 = vadd.f32 0.0, %v1038
        %v1040 = vpop.f32.mrb[0].mxu0
        %v1041 = vpop.f32.mrb[0].mxu0
        %v1042 = vadd.f32 0.0, %v1041
        %v1043 = vpop.f32.mrb[0].mxu0
        %1044 = vmatprep.mubr.bf16.mxu0 0
        %1045 = vmatmul.mubr.bf16.gmra.mrb[0].mxu0 %v991
        %v1046 = vpop.f32.mrb[0].mxu0
        %v1047 = vadd.f32 0.0, %v1046
        %v1048 = vpop.f32.mrb[0].mxu0
        %v1049 = vpop.f32.mrb[0].mxu0
        %v1050 = vpop.f32.mrb[0].mxu0
        %1051 = vdwg.mxu0
        %v1052 = vadd.f32 %v939, %v1031
        %v1053 = vadd.f32 %v940, %v1034
        %v1054 = vadd.f32 %v941, %v1039
        %v1055 = vadd.f32 %v942, %v1042
        %v1056 = vadd.f32 %v943, %v1047
        %v1057 = vld [vmem:[%s2] sm:$0x1]
        %v1059 = vlaneseq
        %v1060 = vshrl.u32 %v1059, 7
        %v1061 = vsub.s32 0, %v1060
        %v1062 = vrot.slane %v1057, %v1061
        %v1064 = vadd.f32 %v1052, %v1062
        %v1065 = vadd.f32 %v1053, %v1062
        %v1066 = vadd.f32 %v1054, %v1062
        %v1067 = vadd.f32 %v1055, %v1062
        %v1068 = vadd.f32 %v1056, %v1062
        %v1069 = vmax.f32 %v1064, 0.0
        %v1070 = vmax.f32 %v1065, 0.0
        %v1071 = vmax.f32 %v1066, 0.0
        %v1072 = vmax.f32 %v1067, 0.0
        %v1073 = vmax.f32 %v1068, 0.0
        %1077 = vrot.lane.b32.xlu0 %v406, 127
        %v1078 = vpop.permute.xlu0 %1077
        %1079 = vrot.lane.b32.xlu0 %v407, 127
        %v1080 = vpop.permute.xlu0 %1079
        %1081 = vrot.lane.b32.xlu0 %v408, 127
        %v1082 = vpop.permute.xlu0 %1081
        %v1084 = vsel %vm441, %v1078, 0
        %v1087 = vsel %vm441, %v1080, 0
        %v1090 = vsel %vm441, %v1082, 0
        %1092 = vmatprep.subr.bf16.mxu0 0
        %1093 = vmatpush1.bf16.msra.mxu0 %v434
        %1094 = vmatprep.subr.bf16.mxu0 0
        %1095 = vmatpush1.bf16.msra.mxu0 %v435
        %1096 = vmatprep.subr.bf16.mxu0 0
        %1097 = vmatpush1.bf16.msra.mxu0 %v436
        %1098 = vmatprep.subr.bf16.mxu0 0
        %1099 = vmatpush1.bf16.msra.mxu0 %v456
        %1100 = vmatprep.subr.bf16.mxu0 0
        %1101 = vmatpush1.bf16.msra.mxu0 0
        %1102 = vmatprep.subr.bf16.mxu0 0
        %1103 = vmatpush1.bf16.msra.mxu0 0
        %1104 = vmatprep.subr.bf16.mxu0 0
        %1105 = vmatpush1.bf16.msra.mxu0 0
        %1106 = vmatprep.subr.bf16.mxu0 0
        %1107 = vmatpush1.bf16.msra.mxu0 0
        %1108 = vmatprep.subr.bf16.mxu0 0
        %1109 = vmatpush1.bf16.msra.mxu0 0
        %1110 = vmatprep.subr.bf16.mxu0 0
        %1111 = vmatpush1.bf16.msra.mxu0 0
        %1112 = vmatprep.subr.bf16.mxu0 0
        %1113 = vmatpush1.bf16.msra.mxu0 0
        %1114 = vmatprep.subr.bf16.mxu0 0
        %1115 = vmatpush1.bf16.msra.mxu0 0
        %1116 = vmatprep.subr.bf16.mxu0 0
        %1117 = vmatpush1.bf16.msra.mxu0 0
        %1118 = vmatprep.subr.bf16.mxu0 0
        %1119 = vmatpush1.bf16.msra.mxu0 0
        %1120 = vmatprep.subr.bf16.mxu0 0
        %1121 = vmatpush1.bf16.msra.mxu0 0
        %1122 = vmatprep.subr.bf16.mxu0 0
        %1123 = vmatpush1.bf16.msra.mxu0 0
        %1124 = vmatprep.mubr.bf16.mxu0 0
        %1125 = vmatmul.mubr.bf16.gmra.mrb[0].mxu0 %v1084
        %v1126 = vpop.f32.mrb[0].mxu0
        %v1127 = vadd.f32 0.0, %v1126
        %v1128 = vpop.f32.mrb[0].mxu0
        %v1129 = vpop.f32.mrb[0].mxu0
        %v1130 = vadd.f32 0.0, %v1129
        %v1131 = vpop.f32.mrb[0].mxu0
        %1132 = vmatprep.mubr.bf16.mxu0 0
        %1133 = vmatmul.mubr.bf16.gmra.mrb[0].mxu0 %v1087
        %v1134 = vpop.f32.mrb[0].mxu0
        %v1135 = vadd.f32 0.0, %v1134
        %v1136 = vpop.f32.mrb[0].mxu0
        %v1137 = vpop.f32.mrb[0].mxu0
        %v1138 = vadd.f32 0.0, %v1137
        %v1139 = vpop.f32.mrb[0].mxu0
        %1140 = vmatprep.mubr.bf16.mxu0 0
        %1141 = vmatmul.mubr.bf16.gmra.mrb[0].mxu0 %v1090
        %v1142 = vpop.f32.mrb[0].mxu0
        %v1143 = vadd.f32 0.0, %v1142
        %v1144 = vpop.f32.mrb[0].mxu0
        %v1145 = vpop.f32.mrb[0].mxu0
        %v1146 = vpop.f32.mrb[0].mxu0
        %1147 = vdwg.mxu0
        %1151 = vrot.lane.b32.xlu0 %v390, 127
        %v1152 = vpop.permute.xlu0 %1151
        %1153 = vrot.lane.b32.xlu0 %v391, 127
        %v1154 = vpop.permute.xlu0 %1153
        %1155 = vrot.lane.b32.xlu0 %v392, 127
        %v1156 = vpop.permute.xlu0 %1155
        %v1158 = vsel %vm441, %v1152, 0
        %v1161 = vsel %vm441, %v1154, 0
        %v1164 = vsel %vm441, %v1156, 0
        %1166 = vmatprep.subr.bf16.mxu0 0
        %1167 = vmatpush1.bf16.msra.mxu0 %v530
        %1168 = vmatprep.subr.bf16.mxu0 0
        %1169 = vmatpush1.bf16.msra.mxu0 %v531
        %1170 = vmatprep.subr.bf16.mxu0 0
        %1171 = vmatpush1.bf16.msra.mxu0 %v532
        %1172 = vmatprep.subr.bf16.mxu0 0
        %1173 = vmatpush1.bf16.msra.mxu0 %v547
        %1174 = vmatprep.subr.bf16.mxu0 0
        %1175 = vmatpush1.bf16.msra.mxu0 0
        %1176 = vmatprep.subr.bf16.mxu0 0
        %1177 = vmatpush1.bf16.msra.mxu0 0
        %1178 = vmatprep.subr.bf16.mxu0 0
        %1179 = vmatpush1.bf16.msra.mxu0 0
        %1180 = vmatprep.subr.bf16.mxu0 0
        %1181 = vmatpush1.bf16.msra.mxu0 0
        %1182 = vmatprep.subr.bf16.mxu0 0
        %1183 = vmatpush1.bf16.msra.mxu0 0
        %1184 = vmatprep.subr.bf16.mxu0 0
        %1185 = vmatpush1.bf16.msra.mxu0 0
        %1186 = vmatprep.subr.bf16.mxu0 0
        %1187 = vmatpush1.bf16.msra.mxu0 0
        %1188 = vmatprep.subr.bf16.mxu0 0
        %1189 = vmatpush1.bf16.msra.mxu0 0
        %1190 = vmatprep.subr.bf16.mxu0 0
        %1191 = vmatpush1.bf16.msra.mxu0 0
        %1192 = vmatprep.subr.bf16.mxu0 0
        %1193 = vmatpush1.bf16.msra.mxu0 0
        %1194 = vmatprep.subr.bf16.mxu0 0
        %1195 = vmatpush1.bf16.msra.mxu0 0
        %1196 = vmatprep.subr.bf16.mxu0 0
        %1197 = vmatpush1.bf16.msra.mxu0 0
        %1198 = vmatprep.mubr.bf16.mxu0 0
        %1199 = vmatmul.mubr.bf16.gmra.mrb[0].mxu0 %v1158
        %v1200 = vpop.f32.mrb[0].mxu0
        %v1201 = vadd.f32 %v1127, %v1200
        %v1202 = vpop.f32.mrb[0].mxu0
        %v1203 = vpop.f32.mrb[0].mxu0
        %v1204 = vadd.f32 %v1130, %v1203
        %v1205 = vpop.f32.mrb[0].mxu0
        %1206 = vmatprep.mubr.bf16.mxu0 0
        %1207 = vmatmul.mubr.bf16.gmra.mrb[0].mxu0 %v1161
        %v1208 = vpop.f32.mrb[0].mxu0
        %v1209 = vadd.f32 %v1135, %v1208
        %v1210 = vpop.f32.mrb[0].mxu0
        %v1211 = vpop.f32.mrb[0].mxu0
        %v1212 = vadd.f32 %v1138, %v1211
        %v1213 = vpop.f32.mrb[0].mxu0
        %1214 = vmatprep.mubr.bf16.mxu0 0
        %1215 = vmatmul.mubr.bf16.gmra.mrb[0].mxu0 %v1164
        %v1216 = vpop.f32.mrb[0].mxu0
        %v1217 = vadd.f32 %v1143, %v1216
        %v1218 = vpop.f32.mrb[0].mxu0
        %v1219 = vpop.f32.mrb[0].mxu0
        %v1220 = vpop.f32.mrb[0].mxu0
        %1221 = vdwg.mxu0
        %1225 = vrot.lane.b32.xlu0 %v610, 127
        %v1226 = vpop.permute.xlu0 %1225
        %1227 = vrot.lane.b32.xlu0 %v611, 127
        %v1228 = vpop.permute.xlu0 %1227
        %1229 = vrot.lane.b32.xlu0 %v612, 127
        %v1230 = vpop.permute.xlu0 %1229
        %v1232 = vsel %vm441, %v1226, 0
        %v1235 = vsel %vm441, %v1228, 0
        %v1238 = vsel %vm441, %v1230, 0
        %1240 = vmatprep.subr.bf16.mxu0 0
        %1241 = vmatpush1.bf16.msra.mxu0 %v638
        %1242 = vmatprep.subr.bf16.mxu0 0
        %1243 = vmatpush1.bf16.msra.mxu0 %v639
        %1244 = vmatprep.subr.bf16.mxu0 0
        %1245 = vmatpush1.bf16.msra.mxu0 %v640
        %1246 = vmatprep.subr.bf16.mxu0 0
        %1247 = vmatpush1.bf16.msra.mxu0 %v655
        %1248 = vmatprep.subr.bf16.mxu0 0
        %1249 = vmatpush1.bf16.msra.mxu0 0
        %1250 = vmatprep.subr.bf16.mxu0 0
        %1251 = vmatpush1.bf16.msra.mxu0 0
        %1252 = vmatprep.subr.bf16.mxu0 0
        %1253 = vmatpush1.bf16.msra.mxu0 0
        %1254 = vmatprep.subr.bf16.mxu0 0
        %1255 = vmatpush1.bf16.msra.mxu0 0
        %1256 = vmatprep.subr.bf16.mxu0 0
        %1257 = vmatpush1.bf16.msra.mxu0 0
        %1258 = vmatprep.subr.bf16.mxu0 0
        %1259 = vmatpush1.bf16.msra.mxu0 0
        %1260 = vmatprep.subr.bf16.mxu0 0
        %1261 = vmatpush1.bf16.msra.mxu0 0
        %1262 = vmatprep.subr.bf16.mxu0 0
        %1263 = vmatpush1.bf16.msra.mxu0 0
        %1264 = vmatprep.subr.bf16.mxu0 0
        %1265 = vmatpush1.bf16.msra.mxu0 0
        %1266 = vmatprep.subr.bf16.mxu0 0
        %1267 = vmatpush1.bf16.msra.mxu0 0
        %1268 = vmatprep.subr.bf16.mxu0 0
        %1269 = vmatpush1.bf16.msra.mxu0 0
        %1270 = vmatprep.subr.bf16.mxu0 0
        %1271 = vmatpush1.bf16.msra.mxu0 0
        %1272 = vmatprep.mubr.bf16.mxu0 0
        %1273 = vmatmul.mubr.bf16.gmra.mrb[0].mxu0 %v1232
        %v1274 = vpop.f32.mrb[0].mxu0
        %v1275 = vadd.f32 0.0, %v1274
        %v1276 = vpop.f32.mrb[0].mxu0
        %v1277 = vpop.f32.mrb[0].mxu0
        %v1278 = vadd.f32 0.0, %v1277
        %v1279 = vpop.f32.mrb[0].mxu0
        %1280 = vmatprep.mubr.bf16.mxu0 0
        %1281 = vmatmul.mubr.bf16.gmra.mrb[0].mxu0 %v1235
        %v1282 = vpop.f32.mrb[0].mxu0
        %v1283 = vadd.f32 0.0, %v1282
        %v1284 = vpop.f32.mrb[0].mxu0
        %v1285 = vpop.f32.mrb[0].mxu0
        %v1286 = vadd.f32 0.0, %v1285
        %v1287 = vpop.f32.mrb[0].mxu0
        %1288 = vmatprep.mubr.bf16.mxu0 0
        %1289 = vmatmul.mubr.bf16.gmra.mrb[0].mxu0 %v1238
        %v1290 = vpop.f32.mrb[0].mxu0
        %v1291 = vadd.f32 0.0, %v1290
        %v1292 = vpop.f32.mrb[0].mxu0
        %v1293 = vpop.f32.mrb[0].mxu0
        %v1294 = vpop.f32.mrb[0].mxu0
        %1295 = vdwg.mxu0
        %v1296 = vadd.f32 %v1201, %v1275
        %v1297 = vadd.f32 %v1204, %v1278
        %v1298 = vadd.f32 %v1209, %v1283
        %v1299 = vadd.f32 %v1212, %v1286
        %v1300 = vadd.f32 %v1217, %v1291
        %1304 = vrot.lane.b32.xlu0 %v723, 127
        %v1305 = vpop.permute.xlu0 %1304
        %1306 = vrot.lane.b32.xlu0 %v724, 127
        %v1307 = vpop.permute.xlu0 %1306
        %1308 = vrot.lane.b32.xlu0 %v725, 127
        %v1309 = vpop.permute.xlu0 %1308
        %v1311 = vsel %vm441, %v1305, 0
        %v1314 = vsel %vm441, %v1307, 0
        %v1317 = vsel %vm441, %v1309, 0
        %1319 = vmatprep.subr.bf16.mxu0 0
        %1320 = vmatpush1.bf16.msra.mxu0 %v751
        %1321 = vmatprep.subr.bf16.mxu0 0
        %1322 = vmatpush1.bf16.msra.mxu0 %v752
        %1323 = vmatprep.subr.bf16.mxu0 0
        %1324 = vmatpush1.bf16.msra.mxu0 %v753
        %1325 = vmatprep.subr.bf16.mxu0 0
        %1326 = vmatpush1.bf16.msra.mxu0 %v768
        %1327 = vmatprep.subr.bf16.mxu0 0
        %1328 = vmatpush1.bf16.msra.mxu0 0
        %1329 = vmatprep.subr.bf16.mxu0 0
        %1330 = vmatpush1.bf16.msra.mxu0 0
        %1331 = vmatprep.subr.bf16.mxu0 0
        %1332 = vmatpush1.bf16.msra.mxu0 0
        %1333 = vmatprep.subr.bf16.mxu0 0
        %1334 = vmatpush1.bf16.msra.mxu0 0
        %1335 = vmatprep.subr.bf16.mxu0 0
        %1336 = vmatpush1.bf16.msra.mxu0 0
        %1337 = vmatprep.subr.bf16.mxu0 0
        %1338 = vmatpush1.bf16.msra.mxu0 0
        %1339 = vmatprep.subr.bf16.mxu0 0
        %1340 = vmatpush1.bf16.msra.mxu0 0
        %1341 = vmatprep.subr.bf16.mxu0 0
        %1342 = vmatpush1.bf16.msra.mxu0 0
        %1343 = vmatprep.subr.bf16.mxu0 0
        %1344 = vmatpush1.bf16.msra.mxu0 0
        %1345 = vmatprep.subr.bf16.mxu0 0
        %1346 = vmatpush1.bf16.msra.mxu0 0
        %1347 = vmatprep.subr.bf16.mxu0 0
        %1348 = vmatpush1.bf16.msra.mxu0 0
        %1349 = vmatprep.subr.bf16.mxu0 0
        %1350 = vmatpush1.bf16.msra.mxu0 0
        %1351 = vmatprep.mubr.bf16.mxu0 0
        %1352 = vmatmul.mubr.bf16.gmra.mrb[0].mxu0 %v1311
        %v1353 = vpop.f32.mrb[0].mxu0
        %v1354 = vadd.f32 0.0, %v1353
        %v1355 = vpop.f32.mrb[0].mxu0
        %v1356 = vpop.f32.mrb[0].mxu0
        %v1357 = vadd.f32 0.0, %v1356
        %v1358 = vpop.f32.mrb[0].mxu0
        %1359 = vmatprep.mubr.bf16.mxu0 0
        %1360 = vmatmul.mubr.bf16.gmra.mrb[0].mxu0 %v1314
        %v1361 = vpop.f32.mrb[0].mxu0
        %v1362 = vadd.f32 0.0, %v1361
        %v1363 = vpop.f32.mrb[0].mxu0
        %v1364 = vpop.f32.mrb[0].mxu0
        %v1365 = vadd.f32 0.0, %v1364
        %v1366 = vpop.f32.mrb[0].mxu0
        %1367 = vmatprep.mubr.bf16.mxu0 0
        %1368 = vmatmul.mubr.bf16.gmra.mrb[0].mxu0 %v1317
        %v1369 = vpop.f32.mrb[0].mxu0
        %v1370 = vadd.f32 0.0, %v1369
        %v1371 = vpop.f32.mrb[0].mxu0
        %v1372 = vpop.f32.mrb[0].mxu0
        %v1373 = vpop.f32.mrb[0].mxu0
        %1374 = vdwg.mxu0
        %v1375 = vadd.f32 %v1296, %v1354
        %v1376 = vadd.f32 %v1297, %v1357
        %v1377 = vadd.f32 %v1298, %v1362
        %v1378 = vadd.f32 %v1299, %v1365
        %v1379 = vadd.f32 %v1300, %v1370
        %1383 = vrot.lane.b32.xlu0 %v836, 127
        %v1384 = vpop.permute.xlu0 %1383
        %1385 = vrot.lane.b32.xlu0 %v837, 127
        %v1386 = vpop.permute.xlu0 %1385
        %1387 = vrot.lane.b32.xlu0 %v838, 127
        %v1388 = vpop.permute.xlu0 %1387
        %v1390 = vsel %vm441, %v1384, 0
        %v1393 = vsel %vm441, %v1386, 0
        %v1396 = vsel %vm441, %v1388, 0
        %1398 = vmatprep.subr.bf16.mxu0 0
        %1399 = vmatpush1.bf16.msra.mxu0 %v864
        %1400 = vmatprep.subr.bf16.mxu0 0
        %1401 = vmatpush1.bf16.msra.mxu0 %v865
        %1402 = vmatprep.subr.bf16.mxu0 0
        %1403 = vmatpush1.bf16.msra.mxu0 %v866
        %1404 = vmatprep.subr.bf16.mxu0 0
        %1405 = vmatpush1.bf16.msra.mxu0 %v881
        %1406 = vmatprep.subr.bf16.mxu0 0
        %1407 = vmatpush1.bf16.msra.mxu0 0
        %1408 = vmatprep.subr.bf16.mxu0 0
        %1409 = vmatpush1.bf16.msra.mxu0 0
        %1410 = vmatprep.subr.bf16.mxu0 0
        %1411 = vmatpush1.bf16.msra.mxu0 0
        %1412 = vmatprep.subr.bf16.mxu0 0
        %1413 = vmatpush1.bf16.msra.mxu0 0
        %1414 = vmatprep.subr.bf16.mxu0 0
        %1415 = vmatpush1.bf16.msra.mxu0 0
        %1416 = vmatprep.subr.bf16.mxu0 0
        %1417 = vmatpush1.bf16.msra.mxu0 0
        %1418 = vmatprep.subr.bf16.mxu0 0
        %1419 = vmatpush1.bf16.msra.mxu0 0
        %1420 = vmatprep.subr.bf16.mxu0 0
        %1421 = vmatpush1.bf16.msra.mxu0 0
        %1422 = vmatprep.subr.bf16.mxu0 0
        %1423 = vmatpush1.bf16.msra.mxu0 0
        %1424 = vmatprep.subr.bf16.mxu0 0
        %1425 = vmatpush1.bf16.msra.mxu0 0
        %1426 = vmatprep.subr.bf16.mxu0 0
        %1427 = vmatpush1.bf16.msra.mxu0 0
        %1428 = vmatprep.subr.bf16.mxu0 0
        %1429 = vmatpush1.bf16.msra.mxu0 0
        %1430 = vmatprep.mubr.bf16.mxu0 0
        %1431 = vmatmul.mubr.bf16.gmra.mrb[0].mxu0 %v1390
        %v1432 = vpop.f32.mrb[0].mxu0
        %v1433 = vadd.f32 0.0, %v1432
        %v1434 = vpop.f32.mrb[0].mxu0
        %v1435 = vpop.f32.mrb[0].mxu0
        %v1436 = vadd.f32 0.0, %v1435
        %v1437 = vpop.f32.mrb[0].mxu0
        %1438 = vmatprep.mubr.bf16.mxu0 0
        %1439 = vmatmul.mubr.bf16.gmra.mrb[0].mxu0 %v1393
        %v1440 = vpop.f32.mrb[0].mxu0
        %v1441 = vadd.f32 0.0, %v1440
        %v1442 = vpop.f32.mrb[0].mxu0
        %v1443 = vpop.f32.mrb[0].mxu0
        %v1444 = vadd.f32 0.0, %v1443
        %v1445 = vpop.f32.mrb[0].mxu0
        %1446 = vmatprep.mubr.bf16.mxu0 0
        %1447 = vmatmul.mubr.bf16.gmra.mrb[0].mxu0 %v1396
        %v1448 = vpop.f32.mrb[0].mxu0
        %v1449 = vadd.f32 0.0, %v1448
        %v1450 = vpop.f32.mrb[0].mxu0
        %v1451 = vpop.f32.mrb[0].mxu0
        %v1452 = vpop.f32.mrb[0].mxu0
        %1453 = vdwg.mxu0
        %v1454 = vadd.f32 %v1375, %v1433
        %v1455 = vadd.f32 %v1376, %v1436
        %v1456 = vadd.f32 %v1377, %v1441
        %v1457 = vadd.f32 %v1378, %v1444
        %v1458 = vadd.f32 %v1379, %v1449
        %1462 = vrot.lane.b32.xlu0 %v949, 127
        %v1463 = vpop.permute.xlu0 %1462
        %1464 = vrot.lane.b32.xlu0 %v950, 127
        %v1465 = vpop.permute.xlu0 %1464
        %1466 = vrot.lane.b32.xlu0 %v951, 127
        %v1467 = vpop.permute.xlu0 %1466
        %v1469 = vsel %vm441, %v1463, 0
        %v1472 = vsel %vm441, %v1465, 0
        %v1475 = vsel %vm441, %v1467, 0
        %1477 = vmatprep.subr.bf16.mxu0 0
        %1478 = vmatpush1.bf16.msra.mxu0 %v977
        %1479 = vmatprep.subr.bf16.mxu0 0
        %1480 = vmatpush1.bf16.msra.mxu0 %v978
        %1481 = vmatprep.subr.bf16.mxu0 0
        %1482 = vmatpush1.bf16.msra.mxu0 %v979
        %1483 = vmatprep.subr.bf16.mxu0 0
        %1484 = vmatpush1.bf16.msra.mxu0 %v994
        %1485 = vmatprep.subr.bf16.mxu0 0
        %1486 = vmatpush1.bf16.msra.mxu0 0
        %1487 = vmatprep.subr.bf16.mxu0 0
        %1488 = vmatpush1.bf16.msra.mxu0 0
        %1489 = vmatprep.subr.bf16.mxu0 0
        %1490 = vmatpush1.bf16.msra.mxu0 0
        %1491 = vmatprep.subr.bf16.mxu0 0
        %1492 = vmatpush1.bf16.msra.mxu0 0
        %1493 = vmatprep.subr.bf16.mxu0 0
        %1494 = vmatpush1.bf16.msra.mxu0 0
        %1495 = vmatprep.subr.bf16.mxu0 0
        %1496 = vmatpush1.bf16.msra.mxu0 0
        %1497 = vmatprep.subr.bf16.mxu0 0
        %1498 = vmatpush1.bf16.msra.mxu0 0
        %1499 = vmatprep.subr.bf16.mxu0 0
        %1500 = vmatpush1.bf16.msra.mxu0 0
        %1501 = vmatprep.subr.bf16.mxu0 0
        %1502 = vmatpush1.bf16.msra.mxu0 0
        %1503 = vmatprep.subr.bf16.mxu0 0
        %1504 = vmatpush1.bf16.msra.mxu0 0
        %1505 = vmatprep.subr.bf16.mxu0 0
        %1506 = vmatpush1.bf16.msra.mxu0 0
        %1507 = vmatprep.subr.bf16.mxu0 0
        %1508 = vmatpush1.bf16.msra.mxu0 0
        %1509 = vmatprep.mubr.bf16.mxu0 0
        %1510 = vmatmul.mubr.bf16.gmra.mrb[0].mxu0 %v1469
        %v1511 = vpop.f32.mrb[0].mxu0
        %v1512 = vadd.f32 0.0, %v1511
        %v1513 = vpop.f32.mrb[0].mxu0
        %v1514 = vpop.f32.mrb[0].mxu0
        %v1515 = vadd.f32 0.0, %v1514
        %v1516 = vpop.f32.mrb[0].mxu0
        %1517 = vmatprep.mubr.bf16.mxu0 0
        %1518 = vmatmul.mubr.bf16.gmra.mrb[0].mxu0 %v1472
        %v1519 = vpop.f32.mrb[0].mxu0
        %v1520 = vadd.f32 0.0, %v1519
        %v1521 = vpop.f32.mrb[0].mxu0
        %v1522 = vpop.f32.mrb[0].mxu0
        %v1523 = vadd.f32 0.0, %v1522
        %v1524 = vpop.f32.mrb[0].mxu0
        %1525 = vmatprep.mubr.bf16.mxu0 0
        %1526 = vmatmul.mubr.bf16.gmra.mrb[0].mxu0 %v1475
        %v1527 = vpop.f32.mrb[0].mxu0
        %v1528 = vadd.f32 0.0, %v1527
        %v1529 = vpop.f32.mrb[0].mxu0
        %v1530 = vpop.f32.mrb[0].mxu0
        %v1531 = vpop.f32.mrb[0].mxu0
        %1532 = vdwg.mxu0
        %v1533 = vadd.f32 %v1454, %v1512
        %v1534 = vadd.f32 %v1455, %v1515
        %v1535 = vadd.f32 %v1456, %v1520
        %v1536 = vadd.f32 %v1457, %v1523
        %v1537 = vadd.f32 %v1458, %v1528
        %v1538 = vadd.f32 %v1533, %v1062
        %v1539 = vadd.f32 %v1534, %v1062
        %v1540 = vadd.f32 %v1535, %v1062
        %v1541 = vadd.f32 %v1536, %v1062
        %v1542 = vadd.f32 %v1537, %v1062
        %v1543 = vmax.f32 %v1538, 0.0
        %v1544 = vmax.f32 %v1539, 0.0
        %v1545 = vmax.f32 %v1540, 0.0
        %v1546 = vmax.f32 %v1541, 0.0
        %v1547 = vmax.f32 %v1542, 0.0
        %1548 = vrot.lane.b32.xlu0 %v406, 126
        %v1549 = vpop.permute.xlu0 %1548
        %1550 = vrot.lane.b32.xlu0 %v407, 126
        %v1551 = vpop.permute.xlu0 %1550
        %1552 = vrot.lane.b32.xlu0 %v408, 126
        %v1553 = vpop.permute.xlu0 %1552
        %v1555 = vsel %vm441, %v1549, 0
        %v1558 = vsel %vm441, %v1551, 0
        %v1561 = vsel %vm441, %v1553, 0
        %1563 = vmatprep.subr.bf16.mxu0 0
        %1564 = vmatpush1.bf16.msra.mxu0 %v434
        %1565 = vmatprep.subr.bf16.mxu0 0
        %1566 = vmatpush1.bf16.msra.mxu0 %v435
        %1567 = vmatprep.subr.bf16.mxu0 0
        %1568 = vmatpush1.bf16.msra.mxu0 %v436
        %1569 = vmatprep.subr.bf16.mxu0 0
        %1570 = vmatpush1.bf16.msra.mxu0 %v456
        %1571 = vmatprep.subr.bf16.mxu0 0
        %1572 = vmatpush1.bf16.msra.mxu0 0
        %1573 = vmatprep.subr.bf16.mxu0 0
        %1574 = vmatpush1.bf16.msra.mxu0 0
        %1575 = vmatprep.subr.bf16.mxu0 0
        %1576 = vmatpush1.bf16.msra.mxu0 0
        %1577 = vmatprep.subr.bf16.mxu0 0
        %1578 = vmatpush1.bf16.msra.mxu0 0
        %1579 = vmatprep.subr.bf16.mxu0 0
        %1580 = vmatpush1.bf16.msra.mxu0 0
        %1581 = vmatprep.subr.bf16.mxu0 0
        %1582 = vmatpush1.bf16.msra.mxu0 0
        %1583 = vmatprep.subr.bf16.mxu0 0
        %1584 = vmatpush1.bf16.msra.mxu0 0
        %1585 = vmatprep.subr.bf16.mxu0 0
        %1586 = vmatpush1.bf16.msra.mxu0 0
        %1587 = vmatprep.subr.bf16.mxu0 0
        %1588 = vmatpush1.bf16.msra.mxu0 0
        %1589 = vmatprep.subr.bf16.mxu0 0
        %1590 = vmatpush1.bf16.msra.mxu0 0
        %1591 = vmatprep.subr.bf16.mxu0 0
        %1592 = vmatpush1.bf16.msra.mxu0 0
        %1593 = vmatprep.subr.bf16.mxu0 0
        %1594 = vmatpush1.bf16.msra.mxu0 0
        %1595 = vmatprep.mubr.bf16.mxu0 0
        %1596 = vmatmul.mubr.bf16.gmra.mrb[0].mxu0 %v1555
        %v1597 = vpop.f32.mrb[0].mxu0
        %v1598 = vadd.f32 0.0, %v1597
        %v1599 = vpop.f32.mrb[0].mxu0
        %v1600 = vpop.f32.mrb[0].mxu0
        %v1601 = vadd.f32 0.0, %v1600
        %v1602 = vpop.f32.mrb[0].mxu0
        %1603 = vmatprep.mubr.bf16.mxu0 0
        %1604 = vmatmul.mubr.bf16.gmra.mrb[0].mxu0 %v1558
        %v1605 = vpop.f32.mrb[0].mxu0
        %v1606 = vadd.f32 0.0, %v1605
        %v1607 = vpop.f32.mrb[0].mxu0
        %v1608 = vpop.f32.mrb[0].mxu0
        %v1609 = vadd.f32 0.0, %v1608
        %v1610 = vpop.f32.mrb[0].mxu0
        %1611 = vmatprep.mubr.bf16.mxu0 0
        %1612 = vmatmul.mubr.bf16.gmra.mrb[0].mxu0 %v1561
        %v1613 = vpop.f32.mrb[0].mxu0
        %v1614 = vadd.f32 0.0, %v1613
        %v1615 = vpop.f32.mrb[0].mxu0
        %v1616 = vpop.f32.mrb[0].mxu0
        %v1617 = vpop.f32.mrb[0].mxu0
        %1618 = vdwg.mxu0
        %1619 = vrot.lane.b32.xlu0 %v390, 126
        %v1620 = vpop.permute.xlu0 %1619
        %1621 = vrot.lane.b32.xlu0 %v391, 126
        %v1622 = vpop.permute.xlu0 %1621
        %1623 = vrot.lane.b32.xlu0 %v392, 126
        %v1624 = vpop.permute.xlu0 %1623
        %v1626 = vsel %vm441, %v1620, 0
        %v1629 = vsel %vm441, %v1622, 0
        %v1632 = vsel %vm441, %v1624, 0
        %1634 = vmatprep.subr.bf16.mxu0 0
        %1635 = vmatpush1.bf16.msra.mxu0 %v530
        %1636 = vmatprep.subr.bf16.mxu0 0
        %1637 = vmatpush1.bf16.msra.mxu0 %v531
        %1638 = vmatprep.subr.bf16.mxu0 0
        %1639 = vmatpush1.bf16.msra.mxu0 %v532
        %1640 = vmatprep.subr.bf16.mxu0 0
        %1641 = vmatpush1.bf16.msra.mxu0 %v547
        %1642 = vmatprep.subr.bf16.mxu0 0
        %1643 = vmatpush1.bf16.msra.mxu0 0
        %1644 = vmatprep.subr.bf16.mxu0 0
        %1645 = vmatpush1.bf16.msra.mxu0 0
        %1646 = vmatprep.subr.bf16.mxu0 0
        %1647 = vmatpush1.bf16.msra.mxu0 0
        %1648 = vmatprep.subr.bf16.mxu0 0
        %1649 = vmatpush1.bf16.msra.mxu0 0
        %1650 = vmatprep.subr.bf16.mxu0 0
        %1651 = vmatpush1.bf16.msra.mxu0 0
        %1652 = vmatprep.subr.bf16.mxu0 0
        %1653 = vmatpush1.bf16.msra.mxu0 0
        %1654 = vmatprep.subr.bf16.mxu0 0
        %1655 = vmatpush1.bf16.msra.mxu0 0
        %1656 = vmatprep.subr.bf16.mxu0 0
        %1657 = vmatpush1.bf16.msra.mxu0 0
        %1658 = vmatprep.subr.bf16.mxu0 0
        %1659 = vmatpush1.bf16.msra.mxu0 0
        %1660 = vmatprep.subr.bf16.mxu0 0
        %1661 = vmatpush1.bf16.msra.mxu0 0
        %1662 = vmatprep.subr.bf16.mxu0 0
        %1663 = vmatpush1.bf16.msra.mxu0 0
        %1664 = vmatprep.subr.bf16.mxu0 0
        %1665 = vmatpush1.bf16.msra.mxu0 0
        %1666 = vmatprep.mubr.bf16.mxu0 0
        %1667 = vmatmul.mubr.bf16.gmra.mrb[0].mxu0 %v1626
        %v1668 = vpop.f32.mrb[0].mxu0
        %v1669 = vadd.f32 %v1598, %v1668
        %v1670 = vpop.f32.mrb[0].mxu0
        %v1671 = vpop.f32.mrb[0].mxu0
        %v1672 = vadd.f32 %v1601, %v1671
        %v1673 = vpop.f32.mrb[0].mxu0
        %1674 = vmatprep.mubr.bf16.mxu0 0
        %1675 = vmatmul.mubr.bf16.gmra.mrb[0].mxu0 %v1629
        %v1676 = vpop.f32.mrb[0].mxu0
        %v1677 = vadd.f32 %v1606, %v1676
        %v1678 = vpop.f32.mrb[0].mxu0
        %v1679 = vpop.f32.mrb[0].mxu0
        %v1680 = vadd.f32 %v1609, %v1679
        %v1681 = vpop.f32.mrb[0].mxu0
        %1682 = vmatprep.mubr.bf16.mxu0 0
        %1683 = vmatmul.mubr.bf16.gmra.mrb[0].mxu0 %v1632
        %v1684 = vpop.f32.mrb[0].mxu0
        %v1685 = vadd.f32 %v1614, %v1684
        %v1686 = vpop.f32.mrb[0].mxu0
        %v1687 = vpop.f32.mrb[0].mxu0
        %v1688 = vpop.f32.mrb[0].mxu0
        %1689 = vdwg.mxu0
        %1690 = vrot.lane.b32.xlu0 %v610, 126
        %v1691 = vpop.permute.xlu0 %1690
        %1692 = vrot.lane.b32.xlu0 %v611, 126
        %v1693 = vpop.permute.xlu0 %1692
        %1694 = vrot.lane.b32.xlu0 %v612, 126
        %v1695 = vpop.permute.xlu0 %1694
        %v1697 = vsel %vm441, %v1691, 0
        %v1700 = vsel %vm441, %v1693, 0
        %v1703 = vsel %vm441, %v1695, 0
        %1705 = vmatprep.subr.bf16.mxu0 0
        %1706 = vmatpush1.bf16.msra.mxu0 %v638
        %1707 = vmatprep.subr.bf16.mxu0 0
        %1708 = vmatpush1.bf16.msra.mxu0 %v639
        %1709 = vmatprep.subr.bf16.mxu0 0
        %1710 = vmatpush1.bf16.msra.mxu0 %v640
        %1711 = vmatprep.subr.bf16.mxu0 0
        %1712 = vmatpush1.bf16.msra.mxu0 %v655
        %1713 = vmatprep.subr.bf16.mxu0 0
        %1714 = vmatpush1.bf16.msra.mxu0 0
        %1715 = vmatprep.subr.bf16.mxu0 0
        %1716 = vmatpush1.bf16.msra.mxu0 0
        %1717 = vmatprep.subr.bf16.mxu0 0
        %1718 = vmatpush1.bf16.msra.mxu0 0
        %1719 = vmatprep.subr.bf16.mxu0 0
        %1720 = vmatpush1.bf16.msra.mxu0 0
        %1721 = vmatprep.subr.bf16.mxu0 0
        %1722 = vmatpush1.bf16.msra.mxu0 0
        %1723 = vmatprep.subr.bf16.mxu0 0
        %1724 = vmatpush1.bf16.msra.mxu0 0
        %1725 = vmatprep.subr.bf16.mxu0 0
        %1726 = vmatpush1.bf16.msra.mxu0 0
        %1727 = vmatprep.subr.bf16.mxu0 0
        %1728 = vmatpush1.bf16.msra.mxu0 0
        %1729 = vmatprep.subr.bf16.mxu0 0
        %1730 = vmatpush1.bf16.msra.mxu0 0
        %1731 = vmatprep.subr.bf16.mxu0 0
        %1732 = vmatpush1.bf16.msra.mxu0 0
        %1733 = vmatprep.subr.bf16.mxu0 0
        %1734 = vmatpush1.bf16.msra.mxu0 0
        %1735 = vmatprep.subr.bf16.mxu0 0
        %1736 = vmatpush1.bf16.msra.mxu0 0
        %1737 = vmatprep.mubr.bf16.mxu0 0
        %1738 = vmatmul.mubr.bf16.gmra.mrb[0].mxu0 %v1697
        %v1739 = vpop.f32.mrb[0].mxu0
        %v1740 = vadd.f32 0.0, %v1739
        %v1741 = vpop.f32.mrb[0].mxu0
        %v1742 = vpop.f32.mrb[0].mxu0
        %v1743 = vadd.f32 0.0, %v1742
        %v1744 = vpop.f32.mrb[0].mxu0
        %1745 = vmatprep.mubr.bf16.mxu0 0
        %1746 = vmatmul.mubr.bf16.gmra.mrb[0].mxu0 %v1700
        %v1747 = vpop.f32.mrb[0].mxu0
        %v1748 = vadd.f32 0.0, %v1747
        %v1749 = vpop.f32.mrb[0].mxu0
        %v1750 = vpop.f32.mrb[0].mxu0
        %v1751 = vadd.f32 0.0, %v1750
        %v1752 = vpop.f32.mrb[0].mxu0
        %1753 = vmatprep.mubr.bf16.mxu0 0
        %1754 = vmatmul.mubr.bf16.gmra.mrb[0].mxu0 %v1703
        %v1755 = vpop.f32.mrb[0].mxu0
        %v1756 = vadd.f32 0.0, %v1755
        %v1757 = vpop.f32.mrb[0].mxu0
        %v1758 = vpop.f32.mrb[0].mxu0
        %v1759 = vpop.f32.mrb[0].mxu0
        %1760 = vdwg.mxu0
        %v1761 = vadd.f32 %v1669, %v1740
        %v1762 = vadd.f32 %v1672, %v1743
        %v1763 = vadd.f32 %v1677, %v1748
        %v1764 = vadd.f32 %v1680, %v1751
        %v1765 = vadd.f32 %v1685, %v1756
        %1766 = vrot.lane.b32.xlu0 %v723, 126
        %v1767 = vpop.permute.xlu0 %1766
        %1768 = vrot.lane.b32.xlu0 %v724, 126
        %v1769 = vpop.permute.xlu0 %1768
        %1770 = vrot.lane.b32.xlu0 %v725, 126
        %v1771 = vpop.permute.xlu0 %1770
        %v1773 = vsel %vm441, %v1767, 0
        %v1776 = vsel %vm441, %v1769, 0
        %v1779 = vsel %vm441, %v1771, 0
        %1781 = vmatprep.subr.bf16.mxu0 0
        %1782 = vmatpush1.bf16.msra.mxu0 %v751
        %1783 = vmatprep.subr.bf16.mxu0 0
        %1784 = vmatpush1.bf16.msra.mxu0 %v752
        %1785 = vmatprep.subr.bf16.mxu0 0
        %1786 = vmatpush1.bf16.msra.mxu0 %v753
        %1787 = vmatprep.subr.bf16.mxu0 0
        %1788 = vmatpush1.bf16.msra.mxu0 %v768
        %1789 = vmatprep.subr.bf16.mxu0 0
        %1790 = vmatpush1.bf16.msra.mxu0 0
        %1791 = vmatprep.subr.bf16.mxu0 0
        %1792 = vmatpush1.bf16.msra.mxu0 0
        %1793 = vmatprep.subr.bf16.mxu0 0
        %1794 = vmatpush1.bf16.msra.mxu0 0
        %1795 = vmatprep.subr.bf16.mxu0 0
        %1796 = vmatpush1.bf16.msra.mxu0 0
        %1797 = vmatprep.subr.bf16.mxu0 0
        %1798 = vmatpush1.bf16.msra.mxu0 0
        %1799 = vmatprep.subr.bf16.mxu0 0
        %1800 = vmatpush1.bf16.msra.mxu0 0
        %1801 = vmatprep.subr.bf16.mxu0 0
        %1802 = vmatpush1.bf16.msra.mxu0 0
        %1803 = vmatprep.subr.bf16.mxu0 0
        %1804 = vmatpush1.bf16.msra.mxu0 0
        %1805 = vmatprep.subr.bf16.mxu0 0
        %1806 = vmatpush1.bf16.msra.mxu0 0
        %1807 = vmatprep.subr.bf16.mxu0 0
        %1808 = vmatpush1.bf16.msra.mxu0 0
        %1809 = vmatprep.subr.bf16.mxu0 0
        %1810 = vmatpush1.bf16.msra.mxu0 0
        %1811 = vmatprep.subr.bf16.mxu0 0
        %1812 = vmatpush1.bf16.msra.mxu0 0
        %1813 = vmatprep.mubr.bf16.mxu0 0
        %1814 = vmatmul.mubr.bf16.gmra.mrb[0].mxu0 %v1773
        %v1815 = vpop.f32.mrb[0].mxu0
        %v1816 = vadd.f32 0.0, %v1815
        %v1817 = vpop.f32.mrb[0].mxu0
        %v1818 = vpop.f32.mrb[0].mxu0
        %v1819 = vadd.f32 0.0, %v1818
        %v1820 = vpop.f32.mrb[0].mxu0
        %1821 = vmatprep.mubr.bf16.mxu0 0
        %1822 = vmatmul.mubr.bf16.gmra.mrb[0].mxu0 %v1776
        %v1823 = vpop.f32.mrb[0].mxu0
        %v1824 = vadd.f32 0.0, %v1823
        %v1825 = vpop.f32.mrb[0].mxu0
        %v1826 = vpop.f32.mrb[0].mxu0
        %v1827 = vadd.f32 0.0, %v1826
        %v1828 = vpop.f32.mrb[0].mxu0
        %1829 = vmatprep.mubr.bf16.mxu0 0
        %1830 = vmatmul.mubr.bf16.gmra.mrb[0].mxu0 %v1779
        %v1831 = vpop.f32.mrb[0].mxu0
        %v1832 = vadd.f32 0.0, %v1831
        %v1833 = vpop.f32.mrb[0].mxu0
        %v1834 = vpop.f32.mrb[0].mxu0
        %v1835 = vpop.f32.mrb[0].mxu0
        %1836 = vdwg.mxu0
        %v1837 = vadd.f32 %v1761, %v1816
        %v1838 = vadd.f32 %v1762, %v1819
        %v1839 = vadd.f32 %v1763, %v1824
        %v1840 = vadd.f32 %v1764, %v1827
        %v1841 = vadd.f32 %v1765, %v1832
        %1842 = vrot.lane.b32.xlu0 %v836, 126
        %v1843 = vpop.permute.xlu0 %1842
        %1844 = vrot.lane.b32.xlu0 %v837, 126
        %v1845 = vpop.permute.xlu0 %1844
        %1846 = vrot.lane.b32.xlu0 %v838, 126
        %v1847 = vpop.permute.xlu0 %1846
        %v1849 = vsel %vm441, %v1843, 0
        %v1852 = vsel %vm441, %v1845, 0
        %v1855 = vsel %vm441, %v1847, 0
        %1857 = vmatprep.subr.bf16.mxu0 0
        %1858 = vmatpush1.bf16.msra.mxu0 %v864
        %1859 = vmatprep.subr.bf16.mxu0 0
        %1860 = vmatpush1.bf16.msra.mxu0 %v865
        %1861 = vmatprep.subr.bf16.mxu0 0
        %1862 = vmatpush1.bf16.msra.mxu0 %v866
        %1863 = vmatprep.subr.bf16.mxu0 0
        %1864 = vmatpush1.bf16.msra.mxu0 %v881
        %1865 = vmatprep.subr.bf16.mxu0 0
        %1866 = vmatpush1.bf16.msra.mxu0 0
        %1867 = vmatprep.subr.bf16.mxu0 0
        %1868 = vmatpush1.bf16.msra.mxu0 0
        %1869 = vmatprep.subr.bf16.mxu0 0
        %1870 = vmatpush1.bf16.msra.mxu0 0
        %1871 = vmatprep.subr.bf16.mxu0 0
        %1872 = vmatpush1.bf16.msra.mxu0 0
        %1873 = vmatprep.subr.bf16.mxu0 0
        %1874 = vmatpush1.bf16.msra.mxu0 0
        %1875 = vmatprep.subr.bf16.mxu0 0
        %1876 = vmatpush1.bf16.msra.mxu0 0
        %1877 = vmatprep.subr.bf16.mxu0 0
        %1878 = vmatpush1.bf16.msra.mxu0 0
        %1879 = vmatprep.subr.bf16.mxu0 0
        %1880 = vmatpush1.bf16.msra.mxu0 0
        %1881 = vmatprep.subr.bf16.mxu0 0
        %1882 = vmatpush1.bf16.msra.mxu0 0
        %1883 = vmatprep.subr.bf16.mxu0 0
        %1884 = vmatpush1.bf16.msra.mxu0 0
        %1885 = vmatprep.subr.bf16.mxu0 0
        %1886 = vmatpush1.bf16.msra.mxu0 0
        %1887 = vmatprep.subr.bf16.mxu0 0
        %1888 = vmatpush1.bf16.msra.mxu0 0
        %1889 = vmatprep.mubr.bf16.mxu0 0
        %1890 = vmatmul.mubr.bf16.gmra.mrb[0].mxu0 %v1849
        %v1891 = vpop.f32.mrb[0].mxu0
        %v1892 = vadd.f32 0.0, %v1891
        %v1893 = vpop.f32.mrb[0].mxu0
        %v1894 = vpop.f32.mrb[0].mxu0
        %v1895 = vadd.f32 0.0, %v1894
        %v1896 = vpop.f32.mrb[0].mxu0
        %1897 = vmatprep.mubr.bf16.mxu0 0
        %1898 = vmatmul.mubr.bf16.gmra.mrb[0].mxu0 %v1852
        %v1899 = vpop.f32.mrb[0].mxu0
        %v1900 = vadd.f32 0.0, %v1899
        %v1901 = vpop.f32.mrb[0].mxu0
        %v1902 = vpop.f32.mrb[0].mxu0
        %v1903 = vadd.f32 0.0, %v1902
        %v1904 = vpop.f32.mrb[0].mxu0
        %1905 = vmatprep.mubr.bf16.mxu0 0
        %1906 = vmatmul.mubr.bf16.gmra.mrb[0].mxu0 %v1855
        %v1907 = vpop.f32.mrb[0].mxu0
        %v1908 = vadd.f32 0.0, %v1907
        %v1909 = vpop.f32.mrb[0].mxu0
        %v1910 = vpop.f32.mrb[0].mxu0
        %v1911 = vpop.f32.mrb[0].mxu0
        %1912 = vdwg.mxu0
        %v1913 = vadd.f32 %v1837, %v1892
        %v1914 = vadd.f32 %v1838, %v1895
        %v1915 = vadd.f32 %v1839, %v1900
        %v1916 = vadd.f32 %v1840, %v1903
        %v1917 = vadd.f32 %v1841, %v1908
        %1918 = vrot.lane.b32.xlu0 %v949, 126
        %v1919 = vpop.permute.xlu0 %1918
        %1920 = vrot.lane.b32.xlu0 %v950, 126
        %v1921 = vpop.permute.xlu0 %1920
        %1922 = vrot.lane.b32.xlu0 %v951, 126
        %v1923 = vpop.permute.xlu0 %1922
        %v1925 = vsel %vm441, %v1919, 0
        %v1928 = vsel %vm441, %v1921, 0
        %v1931 = vsel %vm441, %v1923, 0
        %1933 = vmatprep.subr.bf16.mxu0 0
        %1934 = vmatpush1.bf16.msra.mxu0 %v977
        %1935 = vmatprep.subr.bf16.mxu0 0
        %1936 = vmatpush1.bf16.msra.mxu0 %v978
        %1937 = vmatprep.subr.bf16.mxu0 0
        %1938 = vmatpush1.bf16.msra.mxu0 %v979
        %1939 = vmatprep.subr.bf16.mxu0 0
        %1940 = vmatpush1.bf16.msra.mxu0 %v994
        %1941 = vmatprep.subr.bf16.mxu0 0
        %1942 = vmatpush1.bf16.msra.mxu0 0
        %1943 = vmatprep.subr.bf16.mxu0 0
        %1944 = vmatpush1.bf16.msra.mxu0 0
        %1945 = vmatprep.subr.bf16.mxu0 0
        %1946 = vmatpush1.bf16.msra.mxu0 0
        %1947 = vmatprep.subr.bf16.mxu0 0
        %1948 = vmatpush1.bf16.msra.mxu0 0
        %1949 = vmatprep.subr.bf16.mxu0 0
        %1950 = vmatpush1.bf16.msra.mxu0 0
        %1951 = vmatprep.subr.bf16.mxu0 0
        %1952 = vmatpush1.bf16.msra.mxu0 0
        %1953 = vmatprep.subr.bf16.mxu0 0
        %1954 = vmatpush1.bf16.msra.mxu0 0
        %1955 = vmatprep.subr.bf16.mxu0 0
        %1956 = vmatpush1.bf16.msra.mxu0 0
        %1957 = vmatprep.subr.bf16.mxu0 0
        %1958 = vmatpush1.bf16.msra.mxu0 0
        %1959 = vmatprep.subr.bf16.mxu0 0
        %1960 = vmatpush1.bf16.msra.mxu0 0
        %1961 = vmatprep.subr.bf16.mxu0 0
        %1962 = vmatpush1.bf16.msra.mxu0 0
        %1963 = vmatprep.subr.bf16.mxu0 0
        %1964 = vmatpush1.bf16.msra.mxu0 0
        %1965 = vmatprep.mubr.bf16.mxu0 0
        %1966 = vmatmul.mubr.bf16.gmra.mrb[0].mxu0 %v1925
        %v1967 = vpop.f32.mrb[0].mxu0
        %v1968 = vadd.f32 0.0, %v1967
        %v1969 = vpop.f32.mrb[0].mxu0
        %v1970 = vpop.f32.mrb[0].mxu0
        %v1971 = vadd.f32 0.0, %v1970
        %v1972 = vpop.f32.mrb[0].mxu0
        %1973 = vmatprep.mubr.bf16.mxu0 0
        %1974 = vmatmul.mubr.bf16.gmra.mrb[0].mxu0 %v1928
        %v1975 = vpop.f32.mrb[0].mxu0
        %v1976 = vadd.f32 0.0, %v1975
        %v1977 = vpop.f32.mrb[0].mxu0
        %v1978 = vpop.f32.mrb[0].mxu0
        %v1979 = vadd.f32 0.0, %v1978
        %v1980 = vpop.f32.mrb[0].mxu0
        %1981 = vmatprep.mubr.bf16.mxu0 0
        %1982 = vmatmul.mubr.bf16.gmra.mrb[0].mxu0 %v1931
        %v1983 = vpop.f32.mrb[0].mxu0
        %v1984 = vadd.f32 0.0, %v1983
        %v1985 = vpop.f32.mrb[0].mxu0
        %v1986 = vpop.f32.mrb[0].mxu0
        %v1987 = vpop.f32.mrb[0].mxu0
        %1988 = vdwg.mxu0
        %v1989 = vadd.f32 %v1913, %v1968
        %v1990 = vadd.f32 %v1914, %v1971
        %v1991 = vadd.f32 %v1915, %v1976
        %v1992 = vadd.f32 %v1916, %v1979
        %v1993 = vadd.f32 %v1917, %v1984
        %v1994 = vadd.f32 %v1989, %v1062
        %v1995 = vadd.f32 %v1990, %v1062
        %v1996 = vadd.f32 %v1991, %v1062
        %v1997 = vadd.f32 %v1992, %v1062
        %v1998 = vadd.f32 %v1993, %v1062
        %v1999 = vmax.f32 %v1994, 0.0
        %v2000 = vmax.f32 %v1995, 0.0
        %v2001 = vmax.f32 %v1996, 0.0
        %v2002 = vmax.f32 %v1997, 0.0
        %v2003 = vmax.f32 %v1998, 0.0
        %2004 = vrot.lane.b32.xlu0 %v406, 125
        %v2005 = vpop.permute.xlu0 %2004
        %2006 = vrot.lane.b32.xlu0 %v407, 125
        %v2007 = vpop.permute.xlu0 %2006
        %2008 = vrot.lane.b32.xlu0 %v408, 125
        %v2009 = vpop.permute.xlu0 %2008
        %v2011 = vsel %vm441, %v2005, 0
        %v2014 = vsel %vm441, %v2007, 0
        %v2017 = vsel %vm441, %v2009, 0
        %2019 = vmatprep.subr.bf16.mxu0 0
        %2020 = vmatpush1.bf16.msra.mxu0 %v434
        %2021 = vmatprep.subr.bf16.mxu0 0
        %2022 = vmatpush1.bf16.msra.mxu0 %v435
        %2023 = vmatprep.subr.bf16.mxu0 0
        %2024 = vmatpush1.bf16.msra.mxu0 %v436
        %2025 = vmatprep.subr.bf16.mxu0 0
        %2026 = vmatpush1.bf16.msra.mxu0 %v456
        %2027 = vmatprep.subr.bf16.mxu0 0
        %2028 = vmatpush1.bf16.msra.mxu0 0
        %2029 = vmatprep.subr.bf16.mxu0 0
        %2030 = vmatpush1.bf16.msra.mxu0 0
        %2031 = vmatprep.subr.bf16.mxu0 0
        %2032 = vmatpush1.bf16.msra.mxu0 0
        %2033 = vmatprep.subr.bf16.mxu0 0
        %2034 = vmatpush1.bf16.msra.mxu0 0
        %2035 = vmatprep.subr.bf16.mxu0 0
        %2036 = vmatpush1.bf16.msra.mxu0 0
        %2037 = vmatprep.subr.bf16.mxu0 0
        %2038 = vmatpush1.bf16.msra.mxu0 0
        %2039 = vmatprep.subr.bf16.mxu0 0
        %2040 = vmatpush1.bf16.msra.mxu0 0
        %2041 = vmatprep.subr.bf16.mxu0 0
        %2042 = vmatpush1.bf16.msra.mxu0 0
        %2043 = vmatprep.subr.bf16.mxu0 0
        %2044 = vmatpush1.bf16.msra.mxu0 0
        %2045 = vmatprep.subr.bf16.mxu0 0
        %2046 = vmatpush1.bf16.msra.mxu0 0
        %2047 = vmatprep.subr.bf16.mxu0 0
        %2048 = vmatpush1.bf16.msra.mxu0 0
        %2049 = vmatprep.subr.bf16.mxu0 0
        %2050 = vmatpush1.bf16.msra.mxu0 0
        %2051 = vmatprep.mubr.bf16.mxu0 0
        %2052 = vmatmul.mubr.bf16.gmra.mrb[0].mxu0 %v2011
        %v2053 = vpop.f32.mrb[0].mxu0
        %v2054 = vadd.f32 0.0, %v2053
        %v2055 = vpop.f32.mrb[0].mxu0
        %v2056 = vpop.f32.mrb[0].mxu0
        %v2057 = vadd.f32 0.0, %v2056
        %v2058 = vpop.f32.mrb[0].mxu0
        %2059 = vmatprep.mubr.bf16.mxu0 0
        %2060 = vmatmul.mubr.bf16.gmra.mrb[0].mxu0 %v2014
        %v2061 = vpop.f32.mrb[0].mxu0
        %v2062 = vadd.f32 0.0, %v2061
        %v2063 = vpop.f32.mrb[0].mxu0
        %v2064 = vpop.f32.mrb[0].mxu0
        %v2065 = vadd.f32 0.0, %v2064
        %v2066 = vpop.f32.mrb[0].mxu0
        %2067 = vmatprep.mubr.bf16.mxu0 0
        %2068 = vmatmul.mubr.bf16.gmra.mrb[0].mxu0 %v2017
        %v2069 = vpop.f32.mrb[0].mxu0
        %v2070 = vadd.f32 0.0, %v2069
        %v2071 = vpop.f32.mrb[0].mxu0
        %v2072 = vpop.f32.mrb[0].mxu0
        %v2073 = vpop.f32.mrb[0].mxu0
        %2074 = vdwg.mxu0
        %2075 = vrot.lane.b32.xlu0 %v390, 125
        %v2076 = vpop.permute.xlu0 %2075
        %2077 = vrot.lane.b32.xlu0 %v391, 125
        %v2078 = vpop.permute.xlu0 %2077
        %2079 = vrot.lane.b32.xlu0 %v392, 125
        %v2080 = vpop.permute.xlu0 %2079
        %v2082 = vsel %vm441, %v2076, 0
        %v2085 = vsel %vm441, %v2078, 0
        %v2088 = vsel %vm441, %v2080, 0
        %2090 = vmatprep.subr.bf16.mxu0 0
        %2091 = vmatpush1.bf16.msra.mxu0 %v530
        %2092 = vmatprep.subr.bf16.mxu0 0
        %2093 = vmatpush1.bf16.msra.mxu0 %v531
        %2094 = vmatprep.subr.bf16.mxu0 0
        %2095 = vmatpush1.bf16.msra.mxu0 %v532
        %2096 = vmatprep.subr.bf16.mxu0 0
        %2097 = vmatpush1.bf16.msra.mxu0 %v547
        %2098 = vmatprep.subr.bf16.mxu0 0
        %2099 = vmatpush1.bf16.msra.mxu0 0
        %2100 = vmatprep.subr.bf16.mxu0 0
        %2101 = vmatpush1.bf16.msra.mxu0 0
        %2102 = vmatprep.subr.bf16.mxu0 0
        %2103 = vmatpush1.bf16.msra.mxu0 0
        %2104 = vmatprep.subr.bf16.mxu0 0
        %2105 = vmatpush1.bf16.msra.mxu0 0
        %2106 = vmatprep.subr.bf16.mxu0 0
        %2107 = vmatpush1.bf16.msra.mxu0 0
        %2108 = vmatprep.subr.bf16.mxu0 0
        %2109 = vmatpush1.bf16.msra.mxu0 0
        %2110 = vmatprep.subr.bf16.mxu0 0
        %2111 = vmatpush1.bf16.msra.mxu0 0
        %2112 = vmatprep.subr.bf16.mxu0 0
        %2113 = vmatpush1.bf16.msra.mxu0 0
        %2114 = vmatprep.subr.bf16.mxu0 0
        %2115 = vmatpush1.bf16.msra.mxu0 0
        %2116 = vmatprep.subr.bf16.mxu0 0
        %2117 = vmatpush1.bf16.msra.mxu0 0
        %2118 = vmatprep.subr.bf16.mxu0 0
        %2119 = vmatpush1.bf16.msra.mxu0 0
        %2120 = vmatprep.subr.bf16.mxu0 0
        %2121 = vmatpush1.bf16.msra.mxu0 0
        %2122 = vmatprep.mubr.bf16.mxu0 0
        %2123 = vmatmul.mubr.bf16.gmra.mrb[0].mxu0 %v2082
        %v2124 = vpop.f32.mrb[0].mxu0
        %v2125 = vadd.f32 %v2054, %v2124
        %v2126 = vpop.f32.mrb[0].mxu0
        %v2127 = vpop.f32.mrb[0].mxu0
        %v2128 = vadd.f32 %v2057, %v2127
        %v2129 = vpop.f32.mrb[0].mxu0
        %2130 = vmatprep.mubr.bf16.mxu0 0
        %2131 = vmatmul.mubr.bf16.gmra.mrb[0].mxu0 %v2085
        %v2132 = vpop.f32.mrb[0].mxu0
        %v2133 = vadd.f32 %v2062, %v2132
        %v2134 = vpop.f32.mrb[0].mxu0
        %v2135 = vpop.f32.mrb[0].mxu0
        %v2136 = vadd.f32 %v2065, %v2135
        %v2137 = vpop.f32.mrb[0].mxu0
        %2138 = vmatprep.mubr.bf16.mxu0 0
        %2139 = vmatmul.mubr.bf16.gmra.mrb[0].mxu0 %v2088
        %v2140 = vpop.f32.mrb[0].mxu0
        %v2141 = vadd.f32 %v2070, %v2140
        %v2142 = vpop.f32.mrb[0].mxu0
        %v2143 = vpop.f32.mrb[0].mxu0
        %v2144 = vpop.f32.mrb[0].mxu0
        %2145 = vdwg.mxu0
        %2146 = vrot.lane.b32.xlu0 %v610, 125
        %v2147 = vpop.permute.xlu0 %2146
        %2148 = vrot.lane.b32.xlu0 %v611, 125
        %v2149 = vpop.permute.xlu0 %2148
        %2150 = vrot.lane.b32.xlu0 %v612, 125
        %v2151 = vpop.permute.xlu0 %2150
        %v2153 = vsel %vm441, %v2147, 0
        %v2156 = vsel %vm441, %v2149, 0
        %v2159 = vsel %vm441, %v2151, 0
        %2161 = vmatprep.subr.bf16.mxu0 0
        %2162 = vmatpush1.bf16.msra.mxu0 %v638
        %2163 = vmatprep.subr.bf16.mxu0 0
        %2164 = vmatpush1.bf16.msra.mxu0 %v639
        %2165 = vmatprep.subr.bf16.mxu0 0
        %2166 = vmatpush1.bf16.msra.mxu0 %v640
        %2167 = vmatprep.subr.bf16.mxu0 0
        %2168 = vmatpush1.bf16.msra.mxu0 %v655
        %2169 = vmatprep.subr.bf16.mxu0 0
        %2170 = vmatpush1.bf16.msra.mxu0 0
        %2171 = vmatprep.subr.bf16.mxu0 0
        %2172 = vmatpush1.bf16.msra.mxu0 0
        %2173 = vmatprep.subr.bf16.mxu0 0
        %2174 = vmatpush1.bf16.msra.mxu0 0
        %2175 = vmatprep.subr.bf16.mxu0 0
        %2176 = vmatpush1.bf16.msra.mxu0 0
        %2177 = vmatprep.subr.bf16.mxu0 0
        %2178 = vmatpush1.bf16.msra.mxu0 0
        %2179 = vmatprep.subr.bf16.mxu0 0
        %2180 = vmatpush1.bf16.msra.mxu0 0
        %2181 = vmatprep.subr.bf16.mxu0 0
        %2182 = vmatpush1.bf16.msra.mxu0 0
        %2183 = vmatprep.subr.bf16.mxu0 0
        %2184 = vmatpush1.bf16.msra.mxu0 0
        %2185 = vmatprep.subr.bf16.mxu0 0
        %2186 = vmatpush1.bf16.msra.mxu0 0
        %2187 = vmatprep.subr.bf16.mxu0 0
        %2188 = vmatpush1.bf16.msra.mxu0 0
        %2189 = vmatprep.subr.bf16.mxu0 0
        %2190 = vmatpush1.bf16.msra.mxu0 0
        %2191 = vmatprep.subr.bf16.mxu0 0
        %2192 = vmatpush1.bf16.msra.mxu0 0
        %2193 = vmatprep.mubr.bf16.mxu0 0
        %2194 = vmatmul.mubr.bf16.gmra.mrb[0].mxu0 %v2153
        %v2195 = vpop.f32.mrb[0].mxu0
        %v2196 = vadd.f32 0.0, %v2195
        %v2197 = vpop.f32.mrb[0].mxu0
        %v2198 = vpop.f32.mrb[0].mxu0
        %v2199 = vadd.f32 0.0, %v2198
        %v2200 = vpop.f32.mrb[0].mxu0
        %2201 = vmatprep.mubr.bf16.mxu0 0
        %2202 = vmatmul.mubr.bf16.gmra.mrb[0].mxu0 %v2156
        %v2203 = vpop.f32.mrb[0].mxu0
        %v2204 = vadd.f32 0.0, %v2203
        %v2205 = vpop.f32.mrb[0].mxu0
        %v2206 = vpop.f32.mrb[0].mxu0
        %v2207 = vadd.f32 0.0, %v2206
        %v2208 = vpop.f32.mrb[0].mxu0
        %2209 = vmatprep.mubr.bf16.mxu0 0
        %2210 = vmatmul.mubr.bf16.gmra.mrb[0].mxu0 %v2159
        %v2211 = vpop.f32.mrb[0].mxu0
        %v2212 = vadd.f32 0.0, %v2211
        %v2213 = vpop.f32.mrb[0].mxu0
        %v2214 = vpop.f32.mrb[0].mxu0
        %v2215 = vpop.f32.mrb[0].mxu0
        %2216 = vdwg.mxu0
        %v2217 = vadd.f32 %v2125, %v2196
        %v2218 = vadd.f32 %v2128, %v2199
        %v2219 = vadd.f32 %v2133, %v2204
        %v2220 = vadd.f32 %v2136, %v2207
        %v2221 = vadd.f32 %v2141, %v2212
        %2222 = vrot.lane.b32.xlu0 %v723, 125
        %v2223 = vpop.permute.xlu0 %2222
        %2224 = vrot.lane.b32.xlu0 %v724, 125
        %v2225 = vpop.permute.xlu0 %2224
        %2226 = vrot.lane.b32.xlu0 %v725, 125
        %v2227 = vpop.permute.xlu0 %2226
        %v2229 = vsel %vm441, %v2223, 0
        %v2232 = vsel %vm441, %v2225, 0
        %v2235 = vsel %vm441, %v2227, 0
        %2237 = vmatprep.subr.bf16.mxu0 0
        %2238 = vmatpush1.bf16.msra.mxu0 %v751
        %2239 = vmatprep.subr.bf16.mxu0 0
        %2240 = vmatpush1.bf16.msra.mxu0 %v752
        %2241 = vmatprep.subr.bf16.mxu0 0
        %2242 = vmatpush1.bf16.msra.mxu0 %v753
        %2243 = vmatprep.subr.bf16.mxu0 0
        %2244 = vmatpush1.bf16.msra.mxu0 %v768
        %2245 = vmatprep.subr.bf16.mxu0 0
        %2246 = vmatpush1.bf16.msra.mxu0 0
        %2247 = vmatprep.subr.bf16.mxu0 0
        %2248 = vmatpush1.bf16.msra.mxu0 0
        %2249 = vmatprep.subr.bf16.mxu0 0
        %2250 = vmatpush1.bf16.msra.mxu0 0
        %2251 = vmatprep.subr.bf16.mxu0 0
        %2252 = vmatpush1.bf16.msra.mxu0 0
        %2253 = vmatprep.subr.bf16.mxu0 0
        %2254 = vmatpush1.bf16.msra.mxu0 0
        %2255 = vmatprep.subr.bf16.mxu0 0
        %2256 = vmatpush1.bf16.msra.mxu0 0
        %2257 = vmatprep.subr.bf16.mxu0 0
        %2258 = vmatpush1.bf16.msra.mxu0 0
        %2259 = vmatprep.subr.bf16.mxu0 0
        %2260 = vmatpush1.bf16.msra.mxu0 0
        %2261 = vmatprep.subr.bf16.mxu0 0
        %2262 = vmatpush1.bf16.msra.mxu0 0
        %2263 = vmatprep.subr.bf16.mxu0 0
        %2264 = vmatpush1.bf16.msra.mxu0 0
        %2265 = vmatprep.subr.bf16.mxu0 0
        %2266 = vmatpush1.bf16.msra.mxu0 0
        %2267 = vmatprep.subr.bf16.mxu0 0
        %2268 = vmatpush1.bf16.msra.mxu0 0
        %2269 = vmatprep.mubr.bf16.mxu0 0
        %2270 = vmatmul.mubr.bf16.gmra.mrb[0].mxu0 %v2229
        %v2271 = vpop.f32.mrb[0].mxu0
        %v2272 = vadd.f32 0.0, %v2271
        %v2273 = vpop.f32.mrb[0].mxu0
        %v2274 = vpop.f32.mrb[0].mxu0
        %v2275 = vadd.f32 0.0, %v2274
        %v2276 = vpop.f32.mrb[0].mxu0
        %2277 = vmatprep.mubr.bf16.mxu0 0
        %2278 = vmatmul.mubr.bf16.gmra.mrb[0].mxu0 %v2232
        %v2279 = vpop.f32.mrb[0].mxu0
        %v2280 = vadd.f32 0.0, %v2279
        %v2281 = vpop.f32.mrb[0].mxu0
        %v2282 = vpop.f32.mrb[0].mxu0
        %v2283 = vadd.f32 0.0, %v2282
        %v2284 = vpop.f32.mrb[0].mxu0
        %2285 = vmatprep.mubr.bf16.mxu0 0
        %2286 = vmatmul.mubr.bf16.gmra.mrb[0].mxu0 %v2235
        %v2287 = vpop.f32.mrb[0].mxu0
        %v2288 = vadd.f32 0.0, %v2287
        %v2289 = vpop.f32.mrb[0].mxu0
        %v2290 = vpop.f32.mrb[0].mxu0
        %v2291 = vpop.f32.mrb[0].mxu0
        %2292 = vdwg.mxu0
        %v2293 = vadd.f32 %v2217, %v2272
        %v2294 = vadd.f32 %v2218, %v2275
        %v2295 = vadd.f32 %v2219, %v2280
        %v2296 = vadd.f32 %v2220, %v2283
        %v2297 = vadd.f32 %v2221, %v2288
        %2298 = vrot.lane.b32.xlu0 %v836, 125
        %v2299 = vpop.permute.xlu0 %2298
        %2300 = vrot.lane.b32.xlu0 %v837, 125
        %v2301 = vpop.permute.xlu0 %2300
        %2302 = vrot.lane.b32.xlu0 %v838, 125
        %v2303 = vpop.permute.xlu0 %2302
        %v2305 = vsel %vm441, %v2299, 0
        %v2308 = vsel %vm441, %v2301, 0
        %v2311 = vsel %vm441, %v2303, 0
        %2313 = vmatprep.subr.bf16.mxu0 0
        %2314 = vmatpush1.bf16.msra.mxu0 %v864
        %2315 = vmatprep.subr.bf16.mxu0 0
        %2316 = vmatpush1.bf16.msra.mxu0 %v865
        %2317 = vmatprep.subr.bf16.mxu0 0
        %2318 = vmatpush1.bf16.msra.mxu0 %v866
        %2319 = vmatprep.subr.bf16.mxu0 0
        %2320 = vmatpush1.bf16.msra.mxu0 %v881
        %2321 = vmatprep.subr.bf16.mxu0 0
        %2322 = vmatpush1.bf16.msra.mxu0 0
        %2323 = vmatprep.subr.bf16.mxu0 0
        %2324 = vmatpush1.bf16.msra.mxu0 0
        %2325 = vmatprep.subr.bf16.mxu0 0
        %2326 = vmatpush1.bf16.msra.mxu0 0
        %2327 = vmatprep.subr.bf16.mxu0 0
        %2328 = vmatpush1.bf16.msra.mxu0 0
        %2329 = vmatprep.subr.bf16.mxu0 0
        %2330 = vmatpush1.bf16.msra.mxu0 0
        %2331 = vmatprep.subr.bf16.mxu0 0
        %2332 = vmatpush1.bf16.msra.mxu0 0
        %2333 = vmatprep.subr.bf16.mxu0 0
        %2334 = vmatpush1.bf16.msra.mxu0 0
        %2335 = vmatprep.subr.bf16.mxu0 0
        %2336 = vmatpush1.bf16.msra.mxu0 0
        %2337 = vmatprep.subr.bf16.mxu0 0
        %2338 = vmatpush1.bf16.msra.mxu0 0
        %2339 = vmatprep.subr.bf16.mxu0 0
        %2340 = vmatpush1.bf16.msra.mxu0 0
        %2341 = vmatprep.subr.bf16.mxu0 0
        %2342 = vmatpush1.bf16.msra.mxu0 0
        %2343 = vmatprep.subr.bf16.mxu0 0
        %2344 = vmatpush1.bf16.msra.mxu0 0
        %2345 = vmatprep.mubr.bf16.mxu0 0
        %2346 = vmatmul.mubr.bf16.gmra.mrb[0].mxu0 %v2305
        %v2347 = vpop.f32.mrb[0].mxu0
        %v2348 = vadd.f32 0.0, %v2347
        %v2349 = vpop.f32.mrb[0].mxu0
        %v2350 = vpop.f32.mrb[0].mxu0
        %v2351 = vadd.f32 0.0, %v2350
        %v2352 = vpop.f32.mrb[0].mxu0
        %2353 = vmatprep.mubr.bf16.mxu0 0
        %2354 = vmatmul.mubr.bf16.gmra.mrb[0].mxu0 %v2308
        %v2355 = vpop.f32.mrb[0].mxu0
        %v2356 = vadd.f32 0.0, %v2355
        %v2357 = vpop.f32.mrb[0].mxu0
        %v2358 = vpop.f32.mrb[0].mxu0
        %v2359 = vadd.f32 0.0, %v2358
        %v2360 = vpop.f32.mrb[0].mxu0
        %2361 = vmatprep.mubr.bf16.mxu0 0
        %2362 = vmatmul.mubr.bf16.gmra.mrb[0].mxu0 %v2311
        %v2363 = vpop.f32.mrb[0].mxu0
        %v2364 = vadd.f32 0.0, %v2363
        %v2365 = vpop.f32.mrb[0].mxu0
        %v2366 = vpop.f32.mrb[0].mxu0
        %v2367 = vpop.f32.mrb[0].mxu0
        %2368 = vdwg.mxu0
        %v2369 = vadd.f32 %v2293, %v2348
        %v2370 = vadd.f32 %v2294, %v2351
        %v2371 = vadd.f32 %v2295, %v2356
        %v2372 = vadd.f32 %v2296, %v2359
        %v2373 = vadd.f32 %v2297, %v2364
        %2374 = vrot.lane.b32.xlu0 %v949, 125
        %v2375 = vpop.permute.xlu0 %2374
        %2376 = vrot.lane.b32.xlu0 %v950, 125
        %v2377 = vpop.permute.xlu0 %2376
        %2378 = vrot.lane.b32.xlu0 %v951, 125
        %v2379 = vpop.permute.xlu0 %2378
        %v2381 = vsel %vm441, %v2375, 0
        %v2384 = vsel %vm441, %v2377, 0
        %v2387 = vsel %vm441, %v2379, 0
        %2389 = vmatprep.subr.bf16.mxu0 0
        %2390 = vmatpush1.bf16.msra.mxu0 %v977
        %2391 = vmatprep.subr.bf16.mxu0 0
        %2392 = vmatpush1.bf16.msra.mxu0 %v978
        %2393 = vmatprep.subr.bf16.mxu0 0
        %2394 = vmatpush1.bf16.msra.mxu0 %v979
        %2395 = vmatprep.subr.bf16.mxu0 0
        %2396 = vmatpush1.bf16.msra.mxu0 %v994
        %2397 = vmatprep.subr.bf16.mxu0 0
        %2398 = vmatpush1.bf16.msra.mxu0 0
        %2399 = vmatprep.subr.bf16.mxu0 0
        %2400 = vmatpush1.bf16.msra.mxu0 0
        %2401 = vmatprep.subr.bf16.mxu0 0
        %2402 = vmatpush1.bf16.msra.mxu0 0
        %2403 = vmatprep.subr.bf16.mxu0 0
        %2404 = vmatpush1.bf16.msra.mxu0 0
        %2405 = vmatprep.subr.bf16.mxu0 0
        %2406 = vmatpush1.bf16.msra.mxu0 0
        %2407 = vmatprep.subr.bf16.mxu0 0
        %2408 = vmatpush1.bf16.msra.mxu0 0
        %2409 = vmatprep.subr.bf16.mxu0 0
        %2410 = vmatpush1.bf16.msra.mxu0 0
        %2411 = vmatprep.subr.bf16.mxu0 0
        %2412 = vmatpush1.bf16.msra.mxu0 0
        %2413 = vmatprep.subr.bf16.mxu0 0
        %2414 = vmatpush1.bf16.msra.mxu0 0
        %2415 = vmatprep.subr.bf16.mxu0 0
        %2416 = vmatpush1.bf16.msra.mxu0 0
        %2417 = vmatprep.subr.bf16.mxu0 0
        %2418 = vmatpush1.bf16.msra.mxu0 0
        %2419 = vmatprep.subr.bf16.mxu0 0
        %2420 = vmatpush1.bf16.msra.mxu0 0
        %2421 = vmatprep.mubr.bf16.mxu0 0
        %2422 = vmatmul.mubr.bf16.gmra.mrb[0].mxu0 %v2381
        %v2423 = vpop.f32.mrb[0].mxu0
        %v2424 = vadd.f32 0.0, %v2423
        %v2425 = vpop.f32.mrb[0].mxu0
        %v2426 = vpop.f32.mrb[0].mxu0
        %v2427 = vadd.f32 0.0, %v2426
        %v2428 = vpop.f32.mrb[0].mxu0
        %2429 = vmatprep.mubr.bf16.mxu0 0
        %2430 = vmatmul.mubr.bf16.gmra.mrb[0].mxu0 %v2384
        %v2431 = vpop.f32.mrb[0].mxu0
        %v2432 = vadd.f32 0.0, %v2431
        %v2433 = vpop.f32.mrb[0].mxu0
        %v2434 = vpop.f32.mrb[0].mxu0
        %v2435 = vadd.f32 0.0, %v2434
        %v2436 = vpop.f32.mrb[0].mxu0
        %2437 = vmatprep.mubr.bf16.mxu0 0
        %2438 = vmatmul.mubr.bf16.gmra.mrb[0].mxu0 %v2387
        %v2439 = vpop.f32.mrb[0].mxu0
        %v2440 = vadd.f32 0.0, %v2439
        %v2441 = vpop.f32.mrb[0].mxu0
        %v2442 = vpop.f32.mrb[0].mxu0
        %v2443 = vpop.f32.mrb[0].mxu0
        %2444 = vdwg.mxu0
        %v2445 = vadd.f32 %v2369, %v2424
        %v2446 = vadd.f32 %v2370, %v2427
        %v2447 = vadd.f32 %v2371, %v2432
        %v2448 = vadd.f32 %v2372, %v2435
        %v2449 = vadd.f32 %v2373, %v2440
        %v2450 = vadd.f32 %v2445, %v1062
        %v2451 = vadd.f32 %v2446, %v1062
        %v2452 = vadd.f32 %v2447, %v1062
        %v2453 = vadd.f32 %v2448, %v1062
        %v2454 = vadd.f32 %v2449, %v1062
        %v2455 = vmax.f32 %v2450, 0.0
        %v2456 = vmax.f32 %v2451, 0.0
        %v2457 = vmax.f32 %v2452, 0.0
        %v2458 = vmax.f32 %v2453, 0.0
        %v2459 = vmax.f32 %v2454, 0.0
        %v2460 = vmax.f32 %v1069, %v1543
        %v2461 = vmax.f32 %v1070, %v1544
        %v2462 = vmax.f32 %v1071, %v1545
        %v2463 = vmax.f32 %v1072, %v1546
        %v2464 = vmax.f32 %v1073, %v1547
        %v2465 = vmax.f32 %v2460, %v1999
        %v2466 = vmax.f32 %v2461, %v2000
        %v2467 = vmax.f32 %v2462, %v2001
        %v2468 = vmax.f32 %v2463, %v2002
        %v2469 = vmax.f32 %v2464, %v2003
        %v2470 = vmax.f32 %v2465, %v2455
        %v2471 = vmax.f32 %v2466, %v2456
        %v2472 = vmax.f32 %v2467, %v2457
        %v2473 = vmax.f32 %v2468, %v2458
        %v2474 = vmax.f32 %v2469, %v2459
        %v2476 = vrot.slane %v2470, 1
        %v2478 = vmax.f32 %v2470, %v2476
        %v2479 = vrot.slane %v2470, 2
        %v2481 = vmax.f32 %v2478, %v2479
        %vm2482 = vcmask 57344
        %2483 = vst.msk [vmem:[#allocation2] sm:$0x1] %vm2482, %v2481
        %vm2484 = vcmask 60419
        %2485 = vst.msk [vmem:[#allocation2 - $0x2] sm:$0x8] %vm2484, %v2481
        %v2487 = vrot.slane %v2471, 2
        %v2489 = vmax.f32 %v2478, %v2487
        %vm2490 = vcmask 63494
        %2491 = vst.msk [vmem:[#allocation2 - $0x4] sm:$0x40] %vm2490, %v2489
        %v2492 = vrot.slane %v2471, 1
        %v2494 = vmax.f32 %v2471, %v2492
        %v2495 = vmax.f32 %v2494, %v2487
        %vm2496 = vcmask 58369
        %2497 = vst.msk [vmem:[#allocation2 + $0x2] sm:$0x2] %vm2496, %v2495
        %vm2498 = vcmask 61444
        %2499 = vst.msk [vmem:[#allocation2] sm:$0x10] %vm2498, %v2495
        %v2501 = vrot.slane %v2472, 1
        %v2503 = vmax.f32 %v2471, %v2501
        %v2504 = vrot.slane %v2472, 2
        %v2506 = vmax.f32 %v2503, %v2504
        %vm2507 = vcmask 64519
        %2508 = vst.msk [vmem:[#allocation2 - $0x2] sm:$0x80] %vm2507, %v2506
        %v2509 = vmax.f32 %v2472, %v2501
        %v2510 = vmax.f32 %v2509, %v2504
        %vm2511 = vcmask 59394
        %2512 = vst.msk [vmem:[#allocation2 + $0x4] sm:$0x4] %vm2511, %v2510
        %vm2513 = vcmask 62469
        %2514 = vst.msk [vmem:[#allocation2 + $0x2] sm:$0x20] %vm2513, %v2510
        %v2516 = vrot.slane %v2473, 1
        %v2518 = vmax.f32 %v2473, %v2516
        %v2519 = vrot.slane %v2473, 2
        %v2521 = vmax.f32 %v2518, %v2519
        %2522 = vst.msk [vmem:[#allocation2 + $0x8] sm:$0x1] %vm2482, %v2521
        %2523 = vst.msk [vmem:[#allocation2 + $0x6] sm:$0x8] %vm2484, %v2521
        %v2525 = vrot.slane %v2474, 2
        %v2527 = vmax.f32 %v2518, %v2525
        %2528 = vst.msk [vmem:[#allocation2 + $0x4] sm:$0x40] %vm2490, %v2527
        %v2529 = vrot.slane %v2474, 1
        %v2531 = vmax.f32 %v2474, %v2529
        %v2532 = vmax.f32 %v2531, %v2525
        %2533 = vst.msk [vmem:[#allocation2 + $0xa] sm:$0x2] %vm2496, %v2532
        %v2534 = vld [vmem:[#allocation2] sm:$0xff]
        %v2535 = vld [vmem:[#allocation2 + $0x8] sm:$0x3]
        %v2536 = vpack.c.bf16 %v2535, %v2534
        %v2537 = vld [vmem:[%s3] sm:$0xf]
        %v2538 = vld [vmem:[#allocation2 + $0x1] sm:$0xff]
        %v2539 = vld [vmem:[#allocation2 + $0x9] sm:$0x3]
        %v2540 = vpack.c.bf16 %v2539, %v2538
        %s2541 = scalar_lea.vmem %s3, 4
        %v2542 = vld [vmem:[%s2541] sm:$0xf]
        %vm2543 = vcmask 64512
        %v2545 = vsel %vm2543, %v2540, 0
        %v2548 = vsel %vm451, %v2542, 0
        %2550 = vmatprep.subr.bf16.mxu0 0
        %2551 = vmatpush1.bf16.msra.mxu0 %v2548
        %2552 = vmatprep.subr.bf16.mxu0 0
        %2553 = vmatpush1.bf16.msra.mxu0 0
        %2554 = vmatprep.subr.bf16.mxu0 0
        %2555 = vmatpush1.bf16.msra.mxu0 0
        %2556 = vmatprep.subr.bf16.mxu0 0
        %2557 = vmatpush1.bf16.msra.mxu0 0
        %2558 = vmatprep.subr.bf16.mxu0 0
        %2559 = vmatpush1.bf16.msra.mxu0 0
        %2560 = vmatprep.subr.bf16.mxu0 0
        %2561 = vmatpush1.bf16.msra.mxu0 0
        %2562 = vmatprep.subr.bf16.mxu0 0
        %2563 = vmatpush1.bf16.msra.mxu0 0
        %2564 = vmatprep.subr.bf16.mxu0 0
        %2565 = vmatpush1.bf16.msra.mxu0 0
        %2566 = vmatprep.subr.bf16.mxu0 0
        %2567 = vmatpush1.bf16.msra.mxu0 0
        %2568 = vmatprep.subr.bf16.mxu0 0
        %2569 = vmatpush1.bf16.msra.mxu0 0
        %2570 = vmatprep.subr.bf16.mxu0 0
        %2571 = vmatpush1.bf16.msra.mxu0 0
        %2572 = vmatprep.subr.bf16.mxu0 0
        %2573 = vmatpush1.bf16.msra.mxu0 0
        %2574 = vmatprep.subr.bf16.mxu0 0
        %2575 = vmatpush1.bf16.msra.mxu0 0
        %2576 = vmatprep.subr.bf16.mxu0 0
        %2577 = vmatpush1.bf16.msra.mxu0 0
        %2578 = vmatprep.subr.bf16.mxu0 0
        %2579 = vmatpush1.bf16.msra.mxu0 0
        %2580 = vmatprep.subr.bf16.mxu0 0
        %2581 = vmatpush1.bf16.msra.mxu0 0
        %2582 = vmatprep.mubr.bf16.mxu0 0
        %2583 = vmatmul.mubr.bf16.gmra.mrb[0].mxu0 %v2545
        %v2584 = vpop.f32.mrb[0].mxu0
        %v2585 = vadd.f32 0.0, %v2584
        %v2586 = vpop.f32.mrb[0].mxu0
        %v2587 = vpop.f32.mrb[0].mxu0
        %v2588 = vadd.f32 0.0, %v2587
        %v2589 = vpop.f32.mrb[0].mxu0
        %2590 = vdwg.mxu0
        %v2592 = vsel %vm2543, %v2536, 0
        %v2595 = vsel %vm451, %v2537, 0
        %2597 = vmatprep.subr.bf16.mxu0 0
        %2598 = vmatpush1.bf16.msra.mxu0 %v2595
        %2599 = vmatprep.subr.bf16.mxu0 0
        %2600 = vmatpush1.bf16.msra.mxu0 0
        %2601 = vmatprep.subr.bf16.mxu0 0
        %2602 = vmatpush1.bf16.msra.mxu0 0
        %2603 = vmatprep.subr.bf16.mxu0 0
        %2604 = vmatpush1.bf16.msra.mxu0 0
        %2605 = vmatprep.subr.bf16.mxu0 0
        %2606 = vmatpush1.bf16.msra.mxu0 0
        %2607 = vmatprep.subr.bf16.mxu0 0
        %2608 = vmatpush1.bf16.msra.mxu0 0
        %2609 = vmatprep.subr.bf16.mxu0 0
        %2610 = vmatpush1.bf16.msra.mxu0 0
        %2611 = vmatprep.subr.bf16.mxu0 0
        %2612 = vmatpush1.bf16.msra.mxu0 0
        %2613 = vmatprep.subr.bf16.mxu0 0
        %2614 = vmatpush1.bf16.msra.mxu0 0
        %2615 = vmatprep.subr.bf16.mxu0 0
        %2616 = vmatpush1.bf16.msra.mxu0 0
        %2617 = vmatprep.subr.bf16.mxu0 0
        %2618 = vmatpush1.bf16.msra.mxu0 0
        %2619 = vmatprep.subr.bf16.mxu0 0
        %2620 = vmatpush1.bf16.msra.mxu0 0
        %2621 = vmatprep.subr.bf16.mxu0 0
        %2622 = vmatpush1.bf16.msra.mxu0 0
        %2623 = vmatprep.subr.bf16.mxu0 0
        %2624 = vmatpush1.bf16.msra.mxu0 0
        %2625 = vmatprep.subr.bf16.mxu0 0
        %2626 = vmatpush1.bf16.msra.mxu0 0
        %2627 = vmatprep.subr.bf16.mxu0 0
        %2628 = vmatpush1.bf16.msra.mxu0 0
        %2629 = vmatprep.mubr.bf16.mxu0 0
        %2630 = vmatmul.mubr.bf16.gmra.mrb[0].mxu0 %v2592
        %v2631 = vpop.f32.mrb[0].mxu0
        %v2632 = vadd.f32 %v2585, %v2631
        %v2633 = vpop.f32.mrb[0].mxu0
        %v2634 = vpop.f32.mrb[0].mxu0
        %v2635 = vadd.f32 %v2588, %v2634
        %v2636 = vpop.f32.mrb[0].mxu0
        %2637 = vdwg.mxu0
        %v2638 = vld [vmem:[#allocation2 + $0x2] sm:$0xff]
        %v2639 = vld [vmem:[#allocation2 + $0xa] sm:$0x3]
        %v2640 = vpack.c.bf16 %v2639, %v2638
        %s2641 = scalar_lea.vmem %s3, 8
        %v2642 = vld [vmem:[%s2641] sm:$0xf]
        %v2644 = vsel %vm2543, %v2640, 0
        %v2647 = vsel %vm451, %v2642, 0
        %2649 = vmatprep.subr.bf16.mxu0 0
        %2650 = vmatpush1.bf16.msra.mxu0 %v2647
        %2651 = vmatprep.subr.bf16.mxu0 0
        %2652 = vmatpush1.bf16.msra.mxu0 0
        %2653 = vmatprep.subr.bf16.mxu0 0
        %2654 = vmatpush1.bf16.msra.mxu0 0
        %2655 = vmatprep.subr.bf16.mxu0 0
        %2656 = vmatpush1.bf16.msra.mxu0 0
        %2657 = vmatprep.subr.bf16.mxu0 0
        %2658 = vmatpush1.bf16.msra.mxu0 0
        %2659 = vmatprep.subr.bf16.mxu0 0
        %2660 = vmatpush1.bf16.msra.mxu0 0
        %2661 = vmatprep.subr.bf16.mxu0 0
        %2662 = vmatpush1.bf16.msra.mxu0 0
        %2663 = vmatprep.subr.bf16.mxu0 0
        %2664 = vmatpush1.bf16.msra.mxu0 0
        %2665 = vmatprep.subr.bf16.mxu0 0
        %2666 = vmatpush1.bf16.msra.mxu0 0
        %2667 = vmatprep.subr.bf16.mxu0 0
        %2668 = vmatpush1.bf16.msra.mxu0 0
        %2669 = vmatprep.subr.bf16.mxu0 0
        %2670 = vmatpush1.bf16.msra.mxu0 0
        %2671 = vmatprep.subr.bf16.mxu0 0
        %2672 = vmatpush1.bf16.msra.mxu0 0
        %2673 = vmatprep.subr.bf16.mxu0 0
        %2674 = vmatpush1.bf16.msra.mxu0 0
        %2675 = vmatprep.subr.bf16.mxu0 0
        %2676 = vmatpush1.bf16.msra.mxu0 0
        %2677 = vmatprep.subr.bf16.mxu0 0
        %2678 = vmatpush1.bf16.msra.mxu0 0
        %2679 = vmatprep.subr.bf16.mxu0 0
        %2680 = vmatpush1.bf16.msra.mxu0 0
        %2681 = vmatprep.mubr.bf16.mxu0 0
        %2682 = vmatmul.mubr.bf16.gmra.mrb[0].mxu0 %v2644
        %v2683 = vpop.f32.mrb[0].mxu0
        %v2684 = vadd.f32 0.0, %v2683
        %v2685 = vpop.f32.mrb[0].mxu0
        %v2686 = vpop.f32.mrb[0].mxu0
        %v2687 = vadd.f32 0.0, %v2686
        %v2688 = vpop.f32.mrb[0].mxu0
        %2689 = vdwg.mxu0
        %v2690 = vadd.f32 %v2632, %v2684
        %v2691 = vadd.f32 %v2635, %v2687
        %v2692 = vld [vmem:[%s4] sm:$0x1]
        %v2694 = vlaneseq
        %v2695 = vshrl.u32 %v2694, 7
        %v2696 = vsub.s32 0, %v2695
        %v2697 = vrot.slane %v2692, %v2696
        %v2699 = vadd.f32 %v2690, %v2697
        %v2700 = vadd.f32 %v2691, %v2697
        %v2701 = vmax.f32 %v2699, 0.0
        %v2702 = vmax.f32 %v2700, 0.0
        %v2704 = vrot.slane %v2701, 1
        %v2706 = vmax.f32 %v2701, %v2704
        %v2707 = vrot.slane %v2701, 2
        %v2709 = vmax.f32 %v2706, %v2707
        %v2711 = vrot.slane %v2702, 2
        %v2713 = vmax.f32 %v2706, %v2711
        %v2714 = vpack.c.bf16 %v2709, %v2709
        %v2715 = vld [vmem:[%s5] sm:$0xf]
        %s2716 = scalar_lea.vmem %s5, 4
        %v2717 = vld [vmem:[%s2716] sm:$0xf]
        %v2719 = vshrl.u32 %v2714, 16
        %v2721 = vrot.slane %v2719, 1
        %v2723 = vsel %vm2543, %v2721, 0
        %v2726 = vsel %vm451, %v2717, 0
        %2728 = vmatprep.subr.bf16.mxu0 0
        %2729 = vmatpush1.bf16.msra.mxu0 %v2726
        %2730 = vmatprep.subr.bf16.mxu0 0
        %2731 = vmatpush1.bf16.msra.mxu0 0
        %2732 = vmatprep.subr.bf16.mxu0 0
        %2733 = vmatpush1.bf16.msra.mxu0 0
        %2734 = vmatprep.subr.bf16.mxu0 0
        %2735 = vmatpush1.bf16.msra.mxu0 0
        %2736 = vmatprep.subr.bf16.mxu0 0
        %2737 = vmatpush1.bf16.msra.mxu0 0
        %2738 = vmatprep.subr.bf16.mxu0 0
        %2739 = vmatpush1.bf16.msra.mxu0 0
        %2740 = vmatprep.subr.bf16.mxu0 0
        %2741 = vmatpush1.bf16.msra.mxu0 0
        %2742 = vmatprep.subr.bf16.mxu0 0
        %2743 = vmatpush1.bf16.msra.mxu0 0
        %2744 = vmatprep.subr.bf16.mxu0 0
        %2745 = vmatpush1.bf16.msra.mxu0 0
        %2746 = vmatprep.subr.bf16.mxu0 0
        %2747 = vmatpush1.bf16.msra.mxu0 0
        %2748 = vmatprep.subr.bf16.mxu0 0
        %2749 = vmatpush1.bf16.msra.mxu0 0
        %2750 = vmatprep.subr.bf16.mxu0 0
        %2751 = vmatpush1.bf16.msra.mxu0 0
        %2752 = vmatprep.subr.bf16.mxu0 0
        %2753 = vmatpush1.bf16.msra.mxu0 0
        %2754 = vmatprep.subr.bf16.mxu0 0
        %2755 = vmatpush1.bf16.msra.mxu0 0
        %2756 = vmatprep.subr.bf16.mxu0 0
        %2757 = vmatpush1.bf16.msra.mxu0 0
        %2758 = vmatprep.subr.bf16.mxu0 0
        %2759 = vmatpush1.bf16.msra.mxu0 0
        %2760 = vmatprep.mubr.bf16.mxu0 0
        %2761 = vmatmul.mubr.bf16.gmra.mrb[0].mxu0 %v2723
        %v2762 = vpop.f32.mrb[0].mxu0
        %v2763 = vadd.f32 0.0, %v2762
        %v2764 = vpop.f32.mrb[0].mxu0
        %v2765 = vpop.f32.mrb[0].mxu0
        %v2766 = vpop.f32.mrb[0].mxu0
        %2767 = vdwg.mxu0
        %v2768 = vsel %vm2543, %v2714, 0
        %v2771 = vsel %vm451, %v2715, 0
        %2773 = vmatprep.subr.bf16.mxu0 0
        %2774 = vmatpush1.bf16.msra.mxu0 %v2771
        %2775 = vmatprep.subr.bf16.mxu0 0
        %2776 = vmatpush1.bf16.msra.mxu0 0
        %2777 = vmatprep.subr.bf16.mxu0 0
        %2778 = vmatpush1.bf16.msra.mxu0 0
        %2779 = vmatprep.subr.bf16.mxu0 0
        %2780 = vmatpush1.bf16.msra.mxu0 0
        %2781 = vmatprep.subr.bf16.mxu0 0
        %2782 = vmatpush1.bf16.msra.mxu0 0
        %2783 = vmatprep.subr.bf16.mxu0 0
        %2784 = vmatpush1.bf16.msra.mxu0 0
        %2785 = vmatprep.subr.bf16.mxu0 0
        %2786 = vmatpush1.bf16.msra.mxu0 0
        %2787 = vmatprep.subr.bf16.mxu0 0
        %2788 = vmatpush1.bf16.msra.mxu0 0
        %2789 = vmatprep.subr.bf16.mxu0 0
        %2790 = vmatpush1.bf16.msra.mxu0 0
        %2791 = vmatprep.subr.bf16.mxu0 0
        %2792 = vmatpush1.bf16.msra.mxu0 0
        %2793 = vmatprep.subr.bf16.mxu0 0
        %2794 = vmatpush1.bf16.msra.mxu0 0
        %2795 = vmatprep.subr.bf16.mxu0 0
        %2796 = vmatpush1.bf16.msra.mxu0 0
        %2797 = vmatprep.subr.bf16.mxu0 0
        %2798 = vmatpush1.bf16.msra.mxu0 0
        %2799 = vmatprep.subr.bf16.mxu0 0
        %2800 = vmatpush1.bf16.msra.mxu0 0
        %2801 = vmatprep.subr.bf16.mxu0 0
        %2802 = vmatpush1.bf16.msra.mxu0 0
        %2803 = vmatprep.subr.bf16.mxu0 0
        %2804 = vmatpush1.bf16.msra.mxu0 0
        %2805 = vmatprep.mubr.bf16.mxu0 0
        %2806 = vmatmul.mubr.bf16.gmra.mrb[0].mxu0 %v2768
        %v2807 = vpop.f32.mrb[0].mxu0
        %v2808 = vadd.f32 %v2763, %v2807
        %v2809 = vpop.f32.mrb[0].mxu0
        %v2810 = vpop.f32.mrb[0].mxu0
        %v2811 = vpop.f32.mrb[0].mxu0
        %2812 = vdwg.mxu0
        %v2813 = vpack.c.bf16 %v2713, %v2713
        %s2814 = scalar_lea.vmem %s5, 8
        %v2815 = vld [vmem:[%s2814] sm:$0xf]
        %v2817 = vrot.slane %v2813, 3
        %v2819 = vsel %vm2543, %v2817, 0
        %v2822 = vsel %vm451, %v2815, 0
        %2824 = vmatprep.subr.bf16.mxu0 0
        %2825 = vmatpush1.bf16.msra.mxu0 %v2822
        %2826 = vmatprep.subr.bf16.mxu0 0
        %2827 = vmatpush1.bf16.msra.mxu0 0
        %2828 = vmatprep.subr.bf16.mxu0 0
        %2829 = vmatpush1.bf16.msra.mxu0 0
        %2830 = vmatprep.subr.bf16.mxu0 0
        %2831 = vmatpush1.bf16.msra.mxu0 0
        %2832 = vmatprep.subr.bf16.mxu0 0
        %2833 = vmatpush1.bf16.msra.mxu0 0
        %2834 = vmatprep.subr.bf16.mxu0 0
        %2835 = vmatpush1.bf16.msra.mxu0 0
        %2836 = vmatprep.subr.bf16.mxu0 0
        %2837 = vmatpush1.bf16.msra.mxu0 0
        %2838 = vmatprep.subr.bf16.mxu0 0
        %2839 = vmatpush1.bf16.msra.mxu0 0
        %2840 = vmatprep.subr.bf16.mxu0 0
        %2841 = vmatpush1.bf16.msra.mxu0 0
        %2842 = vmatprep.subr.bf16.mxu0 0
        %2843 = vmatpush1.bf16.msra.mxu0 0
        %2844 = vmatprep.subr.bf16.mxu0 0
        %2845 = vmatpush1.bf16.msra.mxu0 0
        %2846 = vmatprep.subr.bf16.mxu0 0
        %2847 = vmatpush1.bf16.msra.mxu0 0
        %2848 = vmatprep.subr.bf16.mxu0 0
        %2849 = vmatpush1.bf16.msra.mxu0 0
        %2850 = vmatprep.subr.bf16.mxu0 0
        %2851 = vmatpush1.bf16.msra.mxu0 0
        %2852 = vmatprep.subr.bf16.mxu0 0
        %2853 = vmatpush1.bf16.msra.mxu0 0
        %2854 = vmatprep.subr.bf16.mxu0 0
        %2855 = vmatpush1.bf16.msra.mxu0 0
        %2856 = vmatprep.mubr.bf16.mxu0 0
        %2857 = vmatmul.mubr.bf16.gmra.mrb[0].mxu0 %v2819
        %v2858 = vpop.f32.mrb[0].mxu0
        %v2859 = vadd.f32 0.0, %v2858
        %v2860 = vpop.f32.mrb[0].mxu0
        %v2861 = vpop.f32.mrb[0].mxu0
        %v2862 = vpop.f32.mrb[0].mxu0
        %2863 = vdwg.mxu0
        %v2864 = vadd.f32 %v2808, %v2859
        %v2865 = vld [vmem:[%s6] sm:$0x1]
        %v2866 = vadd.f32 %v2864, %v2865
        %v2867 = vmax.f32 %v2866, 0.0
        %v2868 = vpack.c.bf16 %v2867, %v2867
        %v2869 = vld [vmem:[%s7] sm:$0xf]
        %v2870 = vld [vmem:[%s7 + $0x4] sm:$0xf]
        %v2871 = vld [vmem:[%s7 + $0x8] sm:$0xf]
        %v2872 = vld [vmem:[%s7 + $0xc] sm:$0xf]
        %v2873 = vld [vmem:[%s8] sm:$0x1]
        %v2878 = vunpack.c.l.b16 %v2869
        %v2879 = vunpack.c.l.b16 %v2870
        %v2880 = vunpack.c.l.b16 %v2871
        %v2881 = vunpack.c.l.b16 %v2872
        %v2882 = vpack.c.b16 %v2879, %v2878
        %v2883 = vpack.c.b16 %v2881, %v2880
        %vm2886 = vcmask 261120
        %v2888 = vsel %vm2886, %v2868, 0
        %2890 = vmatprep.subr.bf16.mxu0 0
        %2891 = vmatpush1.bf16.msra.mxu0 %v2882
        %2892 = vmatprep.subr.bf16.mxu0 0
        %2893 = vmatpush1.bf16.msra.mxu0 %v2883
        %2894 = vmatprep.subr.bf16.mxu0 0
        %2895 = vmatpush1.bf16.msra.mxu0 0
        %2896 = vmatprep.subr.bf16.mxu0 0
        %2897 = vmatpush1.bf16.msra.mxu0 0
        %2898 = vmatprep.subr.bf16.mxu0 0
        %2899 = vmatpush1.bf16.msra.mxu0 0
        %2900 = vmatprep.subr.bf16.mxu0 0
        %2901 = vmatpush1.bf16.msra.mxu0 0
        %2902 = vmatprep.subr.bf16.mxu0 0
        %2903 = vmatpush1.bf16.msra.mxu0 0
        %2904 = vmatprep.subr.bf16.mxu0 0
        %2905 = vmatpush1.bf16.msra.mxu0 0
        %2906 = vmatprep.subr.bf16.mxu0 0
        %2907 = vmatpush1.bf16.msra.mxu0 0
        %2908 = vmatprep.subr.bf16.mxu0 0
        %2909 = vmatpush1.bf16.msra.mxu0 0
        %2910 = vmatprep.subr.bf16.mxu0 0
        %2911 = vmatpush1.bf16.msra.mxu0 0
        %2912 = vmatprep.subr.bf16.mxu0 0
        %2913 = vmatpush1.bf16.msra.mxu0 0
        %2914 = vmatprep.subr.bf16.mxu0 0
        %2915 = vmatpush1.bf16.msra.mxu0 0
        %2916 = vmatprep.subr.bf16.mxu0 0
        %2917 = vmatpush1.bf16.msra.mxu0 0
        %2918 = vmatprep.subr.bf16.mxu0 0
        %2919 = vmatpush1.bf16.msra.mxu0 0
        %2920 = vmatprep.subr.bf16.mxu0 0
        %2921 = vmatpush1.bf16.msra.mxu0 0
        %2922 = vmatprep.mubr.bf16.mxu0 0
        %2923 = vmatmul.mubr.bf16.gmra.mrb[0].mxu0 %v2888
        %v2924 = vpop.f32.mrb[0].mxu0
        %v2925 = vadd.f32 %v2873, %v2924
        %v2926 = vpop.f32.mrb[0].mxu0
        %v2927 = vpop.f32.mrb[0].mxu0
        %v2928 = vpop.f32.mrb[0].mxu0
        %2929 = vdwg.mxu0
        %v2930 = vmax.f32 %v2925, 0.0
        %v2931 = vpack.c.bf16 %v2930, %v2930
        %v2932 = vld [vmem:[%s9] sm:$0xf]
        %v2933 = vld [vmem:[%s9 + $0x4] sm:$0xf]
        %v2934 = vld [vmem:[%s10] sm:$0x1]
        %v2937 = vunpack.c.l.b16 %v2932
        %v2938 = vunpack.c.l.b16 %v2933
        %v2939 = vpack.c.b16 %v2938, %v2937
        %vm2941 = vcmask 130048
        %v2943 = vsel %vm2941, %v2931, 0
        %2945 = vmatprep.subr.bf16.mxu0 0
        %2946 = vmatpush1.bf16.msra.mxu0 %v2939
        %2947 = vmatprep.subr.bf16.mxu0 0
        %2948 = vmatpush1.bf16.msra.mxu0 0
        %2949 = vmatprep.subr.bf16.mxu0 0
        %2950 = vmatpush1.bf16.msra.mxu0 0
        %2951 = vmatprep.subr.bf16.mxu0 0
        %2952 = vmatpush1.bf16.msra.mxu0 0
        %2953 = vmatprep.subr.bf16.mxu0 0
        %2954 = vmatpush1.bf16.msra.mxu0 0
        %2955 = vmatprep.subr.bf16.mxu0 0
        %2956 = vmatpush1.bf16.msra.mxu0 0
        %2957 = vmatprep.subr.bf16.mxu0 0
        %2958 = vmatpush1.bf16.msra.mxu0 0
        %2959 = vmatprep.subr.bf16.mxu0 0
        %2960 = vmatpush1.bf16.msra.mxu0 0
        %2961 = vmatprep.subr.bf16.mxu0 0
        %2962 = vmatpush1.bf16.msra.mxu0 0
        %2963 = vmatprep.subr.bf16.mxu0 0
        %2964 = vmatpush1.bf16.msra.mxu0 0
        %2965 = vmatprep.subr.bf16.mxu0 0
        %2966 = vmatpush1.bf16.msra.mxu0 0
        %2967 = vmatprep.subr.bf16.mxu0 0
        %2968 = vmatpush1.bf16.msra.mxu0 0
        %2969 = vmatprep.subr.bf16.mxu0 0
        %2970 = vmatpush1.bf16.msra.mxu0 0
        %2971 = vmatprep.subr.bf16.mxu0 0
        %2972 = vmatpush1.bf16.msra.mxu0 0
        %2973 = vmatprep.subr.bf16.mxu0 0
        %2974 = vmatpush1.bf16.msra.mxu0 0
        %2975 = vmatprep.subr.bf16.mxu0 0
        %2976 = vmatpush1.bf16.msra.mxu0 0
        %2977 = vmatprep.mubr.bf16.mxu0 0
        %2978 = vmatmul.mubr.bf16.gmra.mrb[0].mxu0 %v2943
        %v2979 = vpop.f32.mrb[0].mxu0
        %v2980 = vadd.f32 %v2934, %v2979
        %v2981 = vpop.f32.mrb[0].mxu0
        %v2982 = vpop.f32.mrb[0].mxu0
        %v2983 = vpop.f32.mrb[0].mxu0
        %2984 = vdwg.mxu0
        %vm2985 = vcmask 73728
        %2986 = vst.msk [vmem:[%s378] sm:$0x1] %vm2985, %v2980
        %s2987 = sand.u32 %s269, 1
        %s2988 = scalar_lea.sflag [#allocation4], %s2987
        %s2989 = sand.u32 %s269, 1
        %s2990 = scalar_lea.vmem [#allocation3], %s2989
        // Predicated region
        $region65: #{esc50_cnn_forward.1} parent=63 // pred_check
          %p2991 = pneg %p279
        $region66: #{esc50_cnn_forward.1} parent=63 // pred_check_branch
          %2993 = sbr.rel (%p2991) target = $region68
        $region67: #{esc50_cnn_forward.1} parent=63 // pred_region
          %s2995 = ssub.s32 16, 16
          %2996 = vsyncadd %s2988, %s2995
          %s2997 = smul.addr %s25, 16
          %s2998 = scalar_lea.hbm %s11, %s2997
          %s3000 = sshll.u32 %s2990, 4
          %s3001 = int_to_ptr.vmem [resolvable:$true] %s3000
          %3003 = dma.vmem_to_hbm [thread:$0]  %s3001, 16, %s2998, %s2988
        $region68: #{esc50_cnn_forward.1} parent=63 // pred_fallthru
          _
      $region64: #{esc50_cnn_forward.1} parent=5 // pred_fallthru
        _
      %p3004 = scmp.le.s32.totalorder 2, %s20
      // Predicated region
      $region69: #{esc50_cnn_forward.1} parent=5 // pred_check
        %p3005 = pneg %p3004
      $region70: #{esc50_cnn_forward.1} parent=5 // pred_check_branch
        %3007 = sbr.rel (%p3005) target = $region72
      $region71: #{esc50_cnn_forward.1} parent=5 // pred_region
        %s3008 = ssub.s32 %s20, 2
        // Predicated region
        $region73: #{esc50_cnn_forward.1} parent=71 // pred_check
          %p3009 = pneg %p285
        $region74: #{esc50_cnn_forward.1} parent=71 // pred_check_branch
          %3011 = sbr.rel (%p3009) target = $region76
        $region75: #{esc50_cnn_forward.1} parent=71 // pred_region
          %s3012 = sand.u32 %s270, 1
          %s3013 = scalar_lea.sflag [#allocation4], %s3012
          %s3014 = sand.u32 %s270, 1
          %s3015 = scalar_lea.vmem [#allocation3], %s3014
          %3016 = dma.done %s3013, 16
        $region76: #{esc50_cnn_forward.1} parent=71 // pred_fallthru
          _
      $region72: #{esc50_cnn_forward.1} parent=5 // pred_fallthru
        _
    $region6: #{esc50_cnn_forward.1} parent=1 // loop_footer
      %s24 = sadd.s32 1, %s20
    $region7: #{esc50_cnn_forward.1} parent=1 // loop_footer_branch
      %19 = sbr.rel target = $region3
    $region8: #{esc50_cnn_forward.1} parent=1 // loop_exit
      _
    %3017 = vsyncpa [#allocation4], 1
    %s3018 = scalar_lea.sflag [#allocation4], 1
    %3019 = vsyncpa %s3018, 1

</llo_original>
